<compile_context>
chip_gen: v7x
topology: tpu7x:2x2x1
jax: 0.10.0
libtpu: 0.0.40
codegen_flags: <defaults>
</compile_context>

<pallas_src>
import numpy as np
import jax
import jax.numpy as jnp
from jax.experimental import pallas as pl
from jax.experimental.pallas import tpu as pltpu

# ------------------------- model hyper parameters ---------------------------
F_IN = 16             # raw input feature dim
F_MODEL = 64          # conformer (internal/output) feature dim F'
FF_DIM = 4 * F_MODEL  # positionwise feed-forward hidden dim
N_HEADS = 4
HEAD_DIM = F_MODEL // N_HEADS
CONV_K = 7            # depthwise conv kernel size (odd, 'same' padding)
NUM_LAYERS = 2
EPS = 1e-5            # torch LayerNorm default eps

# rows of the packed per-layer [*, F_MODEL] gain/bias slab
(FF1_G, FF1_B, FF1_B2, ATT_G, ATT_B, BQ, BK, BO,
 CV_G, CV_B, CV_BV, CV_BG, CV_DB, CV_NG, CV_NB, CV_B2,
 FF2_G, FF2_B, FF2_B2, FIN_G, FIN_B) = range(21)
N_VEC64 = 21
VEC64_ROWS = 24       # sublane-pad the slab to a multiple of 8
VEC256_ROWS = 8       # rows 0/1 = ff1_b1 / ff2_b1
DW_ROWS = 8           # rows 0..CONV_K-1 = depthwise taps

# order of the stacked per-layer tensors fed to the kernel
STACK_ORDER = ("ff1_w1", "ff1_w2", "wq", "wk", "wvo",
               "cv_wv", "cv_wg", "cv_w2", "cv_dw",
               "ff2_w1", "ff2_w2", "vec64", "vec256")


# -------------------------- fused conformer kernel --------------------------
def make_blocks_kernel(T, Fm, Fin, heads, hd, CE, C, R, N, K, n_layers):
    """All conformer layers (plus the frontend matmul) for one [T, *] sequence."""
    S = heads * T
    pad = (K - 1) // 2

    def idiv(x, d):
        if d & (d - 1) == 0:
            return x >> int(np.log2(d))
        return x // d

    def imod(x, d):
        if d & (d - 1) == 0:
            return x & (d - 1)
        return x - (x // d) * d

    def ln(x, g, b):
        mu = jnp.mean(x, axis=-1, keepdims=True)
        ex2 = jnp.mean(x * x, axis=-1, keepdims=True)
        var = jnp.maximum(ex2 - mu * mu, 0.0)
        return (x - mu) * jax.lax.rsqrt(var + EPS) * g + b

    def silu(x):
        return x * jax.nn.sigmoid(x)

    def valid_from_pos(pos, length):
        # pos: flattened position in [0, T) of the lookahead-extended layout.
        n = idiv(pos, CE)
        c = pos - n * CE
        is_main = c < C
        orig = jnp.where(is_main, n * C + c, (n + 1) * C + (c - C))
        return (orig < length) & (is_main | (n < N - 1))

    def kernel(lens_ref, x_ref, few_ref, feb_ref,
               ff1w1_ref, ff1w2_ref, wq_ref, wk_ref, wvo_ref,
               cvwv_ref, cvwg_ref, cvw2_ref, cvdw_ref,
               ff2w1_ref, ff2w2_ref, v64_ref, v256_ref, o_ref):
        length = lens_ref[pl.program_id(0)]
        NEG = jnp.float32(-1e9)

        # ----- fused frontend projection: [T, Fin] -> [T, F] -----
        # TODO(synk): cfg.frontend() is config-dependent (typically VGG conv
        # subsampling); a linear projection frontend is used here.
        x = (jnp.dot(x_ref[...].astype(jnp.bfloat16), few_ref[...],
                     preferred_element_type=jnp.float32) + feb_ref[...])

        # ----- per-sequence masks, built once from iota + prefetched length -----
        tpos = jax.lax.broadcasted_iota(jnp.int32, (T, 1), 0)
        valid_col = valid_from_pos(tpos, length).astype(jnp.float32)       # [T,1]

        rq = jax.lax.broadcasted_iota(jnp.int32, (S, S), 0)
        rk = jax.lax.broadcasted_iota(jnp.int32, (S, S), 1)
        hq = idiv(rq, T)
        iq = rq - hq * T
        hk = idiv(rk, T)
        jk = rk - hk * T
        qc = idiv(iq, CE)
        kc = idiv(jk, CE)
        kin = jk - kc * CE
        chunk_ok = (kc == qc) | ((kc == qc - 1) & (kin < CE - R))
        allow = (hq == hk) & chunk_ok & valid_from_pos(jk, length)
        allow_f = allow.astype(jnp.float32)                                 # [S,S]

        # depthwise-conv tap validity (chunk-local), lane-broadcast once
        tin = imod(tpos, CE)
        tap_base = []
        for kk in range(K):
            off = kk - pad
            ok = (tin + off >= 0) & (tin + off < CE)
            tap_base.append(jnp.broadcast_to(ok.astype(jnp.float32), (T, Fm)))

        def ff(xin, g, b0, w1, b1, w2, b2):
            h = ln(xin, g, b0)
            h = jnp.dot(h.astype(jnp.bfloat16), w1,
                        preferred_element_type=jnp.float32) + b1
            h = silu(h)
            return jnp.dot(h.astype(jnp.bfloat16), w2,
                           preferred_element_type=jnp.float32) + b2

        def layer_body(layer, x):
            v64 = v64_ref[layer]          # [VEC64_ROWS, F] packed gains/biases
            v256 = v256_ref[layer]        # [VEC256_ROWS, 4F]
            row = lambda i: v64[i:i + 1, :]

            # ---------------- FF1 (half-step residual) ----------------
            x = 0.5 * ff(x, row(FF1_G), row(FF1_B), ff1w1_ref[layer],
                         v256[0:1, :], ff1w2_ref[layer], row(FF1_B2)) + x

            # ---------------- MHSA: heads stacked along sublanes ----------------
            h = ln(x, row(ATT_G), row(ATT_B))
            hb = h.astype(jnp.bfloat16)
            q = jnp.dot(hb, wq_ref[layer],
                        preferred_element_type=jnp.float32) + row(BQ)   # scale folded
            k = jnp.dot(hb, wk_ref[layer],
                        preferred_element_type=jnp.float32) + row(BK)
            q_s = jnp.concatenate(
                [q[:, i * hd:(i + 1) * hd] for i in range(heads)], axis=0)  # [S,hd]
            k_s = jnp.concatenate(
                [k[:, i * hd:(i + 1) * hd] for i in range(heads)], axis=0)
            s = jax.lax.dot_general(q_s.astype(jnp.bfloat16), k_s.astype(jnp.bfloat16),
                                    (((1,), (1,)), ((), ())),
                                    preferred_element_type=jnp.float32)     # [S,S]
            s = jnp.where(allow_f != 0.0, s, NEG)
            s = s - jnp.max(s, axis=-1, keepdims=True)
            e = jnp.exp(s)
            p = e * pl.reciprocal(jnp.sum(e, axis=-1, keepdims=True), approx=True)
            wvo = wvo_ref[layer]          # [heads*F, F] bf16, Wv@Wo folded per head
            vo = jnp.concatenate(
                [jnp.dot(hb, wvo[i * Fm:(i + 1) * Fm, :],
                         preferred_element_type=jnp.float32)
                 for i in range(heads)], axis=0)                            # [S,F]
            att_s = jnp.dot(p.astype(jnp.bfloat16), vo.astype(jnp.bfloat16),
                            preferred_element_type=jnp.float32)             # [S,F]
            att = att_s[0:T]
            for i in range(1, heads):
                att = att + att_s[i * T:(i + 1) * T]
            x = att + row(BO) + x         # BO has bv@Wo + bo folded in

            # ---------------- masked_fill: zero padded frames ----------------
            x = x * valid_col

            # ---------------- convolution module ----------------
            h = ln(x, row(CV_G), row(CV_B))
            hb = h.astype(jnp.bfloat16)
            val = jnp.dot(hb, cvwv_ref[layer],
                          preferred_element_type=jnp.float32) + row(CV_BV)
            gate = jnp.dot(hb, cvwg_ref[layer],
                           preferred_element_type=jnp.float32) + row(CV_BG)
            g = val * jax.nn.sigmoid(gate)                                   # GLU
            dw = cvdw_ref[layer]          # [DW_ROWS, F] depthwise taps
            acc = jnp.zeros((T, Fm), jnp.float32)
            for kk in range(K):
                tapw = tap_base[kk] * dw[kk:kk + 1, :]                       # hoisted bcast
                shift = (pad - kk) % T
                xs = pltpu.roll(g, shift, 0) if shift != 0 else g            # XLU
                acc = acc + xs * tapw                                        # VPU FMA
            y = acc + row(CV_DB)
            # TODO(synk): ConformerConvolutionV1's inner norm is configurable (often
            # BatchNorm1d); LayerNorm is used here since no config is given.
            y = ln(y, row(CV_NG), row(CV_NB))
            y = silu(y)
            y = jnp.dot(y.astype(jnp.bfloat16), cvw2_ref[layer],
                        preferred_element_type=jnp.float32) + row(CV_B2)
            x = y + x

            # ---------------- FF2 (half-step residual) + final LN ----------------
            x = 0.5 * ff(x, row(FF2_G), row(FF2_B), ff2w1_ref[layer],
                         v256[1:2, :], ff2w2_ref[layer], row(FF2_B2)) + x
            return ln(x, row(FIN_G), row(FIN_B))

        x = jax.lax.fori_loop(0, n_layers, layer_body, x)
        o_ref[...] = x

    return kernel


def _bcast_spec(shape):
    nd = len(shape)
    return pl.BlockSpec(shape, lambda b, lens, nd=nd: (0,) * nd)


def conformer_blocks_apply(x_raw, lengths, fe_w, fe_b, stacked, *, n_layers, N, C, R):
    """x_raw: [B, T, Fin] raw (lookahead-extended) features; lengths: [B] int32."""
    B, T, Fin = x_raw.shape
    Fm = fe_w.shape[1]
    CE = C + R
    assert T == N * CE
    kernel = make_blocks_kernel(T, Fm, Fin, N_HEADS, HEAD_DIM, CE, C, R, N,
                                CONV_K, n_layers)
    params = [fe_w, fe_b] + [stacked[name] for name in STACK_ORDER]
    in_specs = ([pl.BlockSpec((None, T, Fin), lambda b, lens: (b, 0, 0))]
                + [_bcast_spec(p.shape) for p in params])
    grid_spec = pltpu.PrefetchScalarGridSpec(
        num_scalar_prefetch=1,
        grid=(B,),
        in_specs=in_specs,
        out_specs=pl.BlockSpec((None, T, Fm), lambda b, lens: (b, 0, 0)),
    )
    return pl.pallas_call(
        kernel,
        out_shape=jax.ShapeDtypeStruct((B, T, Fm), jnp.float32),
        grid_spec=grid_spec,
        compiler_params=pltpu.CompilerParams(dimension_semantics=("parallel",)),
    )(lengths, x_raw, *params)
    # TODO(synk): for production batch sizes, block several batch elements per grid
    # step (flatten [Bt*T, F] for the per-token matmuls) to better fill the MXU.


# ------------------------- encoder-level glue (JAX) --------------------------
def conformer_encoder_v3_forward(data, lengths, fe_params, stacked, *,
                                 lookahead_size, num_layers):
    """data: [B, N, C, Fin]; lengths: [B] int32 (valid frames of N*C).
    Returns ([B, N, C, F'], [B, N, C] bool mask)."""
    B, N, C, Fin = data.shape
    R = lookahead_size
    fe_w, fe_b = fe_params
    # add_lookahead on the raw features (the linear frontend commutes with the
    # per-frame copies done by the lookahead extension).
    if R > 0:
        right = jnp.roll(data[:, :, :R, :], shift=-1, axis=1)
        right = right.at[:, -1].set(0.0)
        x = jnp.concatenate([data, right], axis=2)            # [B, N, C+R, Fin]
    else:
        x = data
    CE = C + R
    T = N * CE
    x = x.reshape(B, T, Fin)
    y = conformer_blocks_apply(x, lengths, fe_w, fe_b, stacked,
                               n_layers=num_layers, N=N, C=C, R=R)
    Fm = y.shape[-1]
    y = y.reshape(B, N, CE, Fm)[:, :, :C]                      # strip lookahead frames
    idx = jnp.arange(N * C).reshape(N, C)
    out_mask = idx[None] < lengths[:, None, None]
    return y, out_mask


# ------------------------- deterministic parameter init ----------------------
def init_params(key):
    keys = iter(jax.random.split(key, 256))

    def w(shape, scale=0.05):
        return scale * jax.random.normal(next(keys), shape, jnp.float32)

    def g1():
        return jnp.ones((1, F_MODEL), jnp.float32)

    def z(n=F_MODEL):
        return jnp.zeros((1, n), jnp.float32)

    blocks = []
    for _ in range(NUM_LAYERS):
        blk = dict(
            ff1_g=g1(), ff1_b=z(),
            ff1_w1=w((F_MODEL, FF_DIM)), ff1_b1=w((1, FF_DIM), 0.01),
            ff1_w2=w((FF_DIM, F_MODEL)), ff1_b2=w((1, F_MODEL), 0.01),
            att_g=g1(), att_b=z(),
            wq=w((F_MODEL, F_MODEL)), bq=w((1, F_MODEL), 0.01),
            wk=w((F_MODEL, F_MODEL)), bk=w((1, F_MODEL), 0.01),
            wv=w((F_MODEL, F_MODEL)), bv=w((1, F_MODEL), 0.01),
            wo=w((F_MODEL, F_MODEL)), bo=w((1, F_MODEL), 0.01),
            cv_g=g1(), cv_b=z(),
            cv_wv=w((F_MODEL, F_MODEL)), cv_bv=w((1, F_MODEL), 0.01),
            cv_wg=w((F_MODEL, F_MODEL)), cv_bg=w((1, F_MODEL), 0.01),
            cv_dw=w((CONV_K, F_MODEL)), cv_db=w((1, F_MODEL), 0.01),
            cv_ng=g1(), cv_nb=z(),
            cv_w2=w((F_MODEL, F_MODEL)), cv_b2=w((1, F_MODEL), 0.01),
            ff2_g=g1(), ff2_b=z(),
            ff2_w1=w((F_MODEL, FF_DIM)), ff2_b1=w((1, FF_DIM), 0.01),
            ff2_w2=w((FF_DIM, F_MODEL)), ff2_b2=w((1, F_MODEL), 0.01),
            fin_g=g1(), fin_b=z(),
        )
        blocks.append(blk)
    frontend = (w((F_IN, F_MODEL)), z())
    return frontend, blocks


def prepare_params(frontend_raw, blocks_raw):
    """Offline transforms: fold 1/sqrt(head_dim) into Wq/bq, fold Wv@Wo per head,
    fold bv@Wo into the attention output bias, stack per-layer params with a
    leading [L] axis, pack small gains/biases into slabs, cast MXU weights bf16."""
    fw, fb = frontend_raw
    fe_w = fw.astype(jnp.bfloat16)
    fe_b = fb
    scale = 1.0 / float(np.sqrt(HEAD_DIM))

    def stack_w(name):
        return jnp.stack([blk[name] for blk in blocks_raw], 0).astype(jnp.bfloat16)

    stacked = {
        "ff1_w1": stack_w("ff1_w1"), "ff1_w2": stack_w("ff1_w2"),
        "ff2_w1": stack_w("ff2_w1"), "ff2_w2": stack_w("ff2_w2"),
        "wk": stack_w("wk"),
        "cv_wv": stack_w("cv_wv"), "cv_wg": stack_w("cv_wg"), "cv_w2": stack_w("cv_w2"),
        "wq": jnp.stack([blk["wq"] * scale for blk in blocks_raw],
                        0).astype(jnp.bfloat16),
        "cv_dw": jnp.stack(
            [jnp.concatenate(
                [blk["cv_dw"],
                 jnp.zeros((DW_ROWS - CONV_K, F_MODEL), jnp.float32)], 0)
             for blk in blocks_raw], 0),
    }

    def wvo_one(blk):
        pieces = []
        for h in range(N_HEADS):
            sl = slice(h * HEAD_DIM, (h + 1) * HEAD_DIM)
            pieces.append(blk["wv"][:, sl] @ blk["wo"][sl, :])     # [F, F]
        return jnp.concatenate(pieces, axis=0)                      # [heads*F, F]
    stacked["wvo"] = jnp.stack([wvo_one(b) for b in blocks_raw], 0).astype(jnp.bfloat16)

    def vec64_one(blk):
        bo_fold = blk["bo"] + blk["bv"] @ blk["wo"]
        rows = [blk["ff1_g"], blk["ff1_b"], blk["ff1_b2"],
                blk["att_g"], blk["att_b"], blk["bq"] * scale, blk["bk"], bo_fold,
                blk["cv_g"], blk["cv_b"], blk["cv_bv"], blk["cv_bg"], blk["cv_db"],
                blk["cv_ng"], blk["cv_nb"], blk["cv_b2"],
                blk["ff2_g"], blk["ff2_b"], blk["ff2_b2"],
                blk["fin_g"], blk["fin_b"]]
        slab = jnp.concatenate(rows, axis=0)                        # [21, F]
        padrows = jnp.zeros((VEC64_ROWS - N_VEC64, F_MODEL), jnp.float32)
        return jnp.concatenate([slab, padrows], axis=0)
    stacked["vec64"] = jnp.stack([vec64_one(b) for b in blocks_raw], 0)

    def vec256_one(blk):
        slab = jnp.concatenate([blk["ff1_b1"], blk["ff2_b1"]], axis=0)  # [2, 4F]
        padrows = jnp.zeros((VEC256_ROWS - 2, FF_DIM), jnp.float32)
        return jnp.concatenate([slab, padrows], axis=0)
    stacked["vec256"] = jnp.stack([vec256_one(b) for b in blocks_raw], 0)

    return (fe_w, fe_b), stacked


# ------------------------------------ main -----------------------------------
if __name__ == "__main__":
    key = jax.random.PRNGKey(0)
    kd, kp = jax.random.split(key)

    # batch, chunks, chunk size, lookahead (chunk_ext = C+R = 8, T = N*8 = 32)
    B, N, C, R = 2, 4, 6, 2
    data = jax.random.normal(kd, (B, N, C, F_IN), jnp.float32)
    lengths = jnp.array([19, 24], dtype=jnp.int32)   # true lengths (of N*C = 24)

    frontend_raw, blocks_raw = init_params(kp)
    fe_params, stacked_params = prepare_params(frontend_raw, blocks_raw)

    out, out_mask = conformer_encoder_v3_forward(
        data, lengths, fe_params, stacked_params,
        lookahead_size=R, num_layers=NUM_LAYERS)
    jax.block_until_ready(out)

    assert out.shape == (B, N, C, F_MODEL), out.shape
    assert out_mask.shape == (B, N, C), out_mask.shape
    assert bool(jnp.all(jnp.isfinite(out)))
    print("KERNEL_OK")
</pallas_src>

<mosaic_0001>
module attributes {stable_mosaic.version = 11 : i64} {
  func.func @kernel(%arg0: i32, %arg1: memref<2xi32, #tpu.memory_space<smem>>, %arg2: memref<1x32x16xf32, #tpu.memory_space<vmem>>, %arg3: memref<16x64xbf16, #tpu.memory_space<vmem>>, %arg4: memref<1x64xf32, #tpu.memory_space<vmem>>, %arg5: memref<2x64x256xbf16, #tpu.memory_space<vmem>>, %arg6: memref<2x256x64xbf16, #tpu.memory_space<vmem>>, %arg7: memref<2x64x64xbf16, #tpu.memory_space<vmem>>, %arg8: memref<2x64x64xbf16, #tpu.memory_space<vmem>>, %arg9: memref<2x256x64xbf16, #tpu.memory_space<vmem>>, %arg10: memref<2x64x64xbf16, #tpu.memory_space<vmem>>, %arg11: memref<2x64x64xbf16, #tpu.memory_space<vmem>>, %arg12: memref<2x64x64xbf16, #tpu.memory_space<vmem>>, %arg13: memref<2x8x64xf32, #tpu.memory_space<vmem>>, %arg14: memref<2x64x256xbf16, #tpu.memory_space<vmem>>, %arg15: memref<2x256x64xbf16, #tpu.memory_space<vmem>>, %arg16: memref<2x24x64xf32, #tpu.memory_space<vmem>>, %arg17: memref<2x8x256xf32, #tpu.memory_space<vmem>>, %arg18: memref<1x32x64xf32, #tpu.memory_space<vmem>>) attributes {dimension_semantics = [#tpu.dimension_semantics<parallel>], iteration_bounds = array<i64: 2>, scalar_prefetch = 1 : i64, scratch_operands = 0 : i64, tpu.core_type = #tpu.core_type<tc>, window_params = [{transform_indices = @transform_0, window_bounds = array<i64: 1, 32, 16>}, {pipeline_mode = #tpu.pipeline_mode<synchronous>, transform_indices = @transform_1, window_bounds = array<i64: 16, 64>}, {pipeline_mode = #tpu.pipeline_mode<synchronous>, transform_indices = @transform_2, window_bounds = array<i64: 1, 64>}, {pipeline_mode = #tpu.pipeline_mode<synchronous>, transform_indices = @transform_3, window_bounds = array<i64: 2, 64, 256>}, {pipeline_mode = #tpu.pipeline_mode<synchronous>, transform_indices = @transform_4, window_bounds = array<i64: 2, 256, 64>}, {pipeline_mode = #tpu.pipeline_mode<synchronous>, transform_indices = @transform_5, window_bounds = array<i64: 2, 64, 64>}, {pipeline_mode = #tpu.pipeline_mode<synchronous>, transform_indices = @transform_6, window_bounds = array<i64: 2, 64, 64>}, {pipeline_mode = #tpu.pipeline_mode<synchronous>, transform_indices = @transform_7, window_bounds = array<i64: 2, 256, 64>}, {pipeline_mode = #tpu.pipeline_mode<synchronous>, transform_indices = @transform_8, window_bounds = array<i64: 2, 64, 64>}, {pipeline_mode = #tpu.pipeline_mode<synchronous>, transform_indices = @transform_9, window_bounds = array<i64: 2, 64, 64>}, {pipeline_mode = #tpu.pipeline_mode<synchronous>, transform_indices = @transform_10, window_bounds = array<i64: 2, 64, 64>}, {pipeline_mode = #tpu.pipeline_mode<synchronous>, transform_indices = @transform_11, window_bounds = array<i64: 2, 8, 64>}, {pipeline_mode = #tpu.pipeline_mode<synchronous>, transform_indices = @transform_12, window_bounds = array<i64: 2, 64, 256>}, {pipeline_mode = #tpu.pipeline_mode<synchronous>, transform_indices = @transform_13, window_bounds = array<i64: 2, 256, 64>}, {pipeline_mode = #tpu.pipeline_mode<synchronous>, transform_indices = @transform_14, window_bounds = array<i64: 2, 24, 64>}, {pipeline_mode = #tpu.pipeline_mode<synchronous>, transform_indices = @transform_15, window_bounds = array<i64: 2, 8, 256>}, {transform_indices = @transform_16, window_bounds = array<i64: 1, 32, 64>}]} {
    %0 = arith.index_cast %arg0 : i32 to index
    %1 = memref.load %arg1[%0] : memref<2xi32, #tpu.memory_space<smem>>
    %c0 = arith.constant 0 : index
    %c0_0 = arith.constant 0 : index
    %c0_1 = arith.constant 0 : index
    %2 = vector.load %arg2[%c0, %c0_0, %c0_1] : memref<1x32x16xf32, #tpu.memory_space<vmem>>, vector<1x32x16xf32>
    %3 = vector.shape_cast %2 : vector<1x32x16xf32> to vector<32x16xf32>
    %4 = arith.truncf %3 : vector<32x16xf32> to vector<32x16xbf16>
    %c0_2 = arith.constant 0 : index
    %c0_3 = arith.constant 0 : index
    %5 = vector.load %arg3[%c0_2, %c0_3] : memref<16x64xbf16, #tpu.memory_space<vmem>>, vector<16x64xbf16>
    %cst = arith.constant dense<0.000000e+00> : vector<32x64xf32>
    %6 = tpu.matmul %4, %5, %cst {dimension_numbers = #tpu.dot_dimension_numbers<[1], [0], [0], [1], [0, 0, 1, 1], [], []>} : vector<32x16xbf16>, vector<16x64xbf16>, vector<32x64xf32> -> vector<32x64xf32>
    %c0_4 = arith.constant 0 : index
    %c0_5 = arith.constant 0 : index
    %7 = vector.load %arg4[%c0_4, %c0_5] : memref<1x64xf32, #tpu.memory_space<vmem>>, vector<1x64xf32>
    %8 = vector.broadcast %7 : vector<1x64xf32> to vector<32x64xf32>
    %9 = arith.addf %6, %8 : vector<32x64xf32>
    %10 = tpu.iota {dimensions = array<i32: 0>} : vector<32x1xi32>
    %c3_i32 = arith.constant 3 : i32
    %11 = vector.broadcast %c3_i32 : i32 to vector<32x1xi32>
    %12 = arith.shrsi %10, %11 : vector<32x1xi32>
    %c8_i32 = arith.constant 8 : i32
    %13 = vector.broadcast %c8_i32 : i32 to vector<32x1xi32>
    %14 = arith.muli %12, %13 : vector<32x1xi32>
    %15 = arith.subi %10, %14 : vector<32x1xi32>
    %c6_i32 = arith.constant 6 : i32
    %16 = vector.broadcast %c6_i32 : i32 to vector<32x1xi32>
    %17 = arith.cmpi slt, %15, %16 : vector<32x1xi32>
    %c6_i32_6 = arith.constant 6 : i32
    %18 = vector.broadcast %c6_i32_6 : i32 to vector<32x1xi32>
    %19 = arith.muli %12, %18 : vector<32x1xi32>
    %20 = arith.addi %19, %15 : vector<32x1xi32>
    %c1_i32 = arith.constant 1 : i32
    %21 = vector.broadcast %c1_i32 : i32 to vector<32x1xi32>
    %22 = arith.addi %12, %21 : vector<32x1xi32>
    %c6_i32_7 = arith.constant 6 : i32
    %23 = vector.broadcast %c6_i32_7 : i32 to vector<32x1xi32>
    %24 = arith.muli %22, %23 : vector<32x1xi32>
    %c6_i32_8 = arith.constant 6 : i32
    %25 = vector.broadcast %c6_i32_8 : i32 to vector<32x1xi32>
    %26 = arith.subi %15, %25 : vector<32x1xi32>
    %27 = arith.addi %24, %26 : vector<32x1xi32>
    %28 = arith.select %17, %20, %27 : vector<32x1xi1>, vector<32x1xi32>
    %29 = vector.broadcast %1 : i32 to vector<32x1xi32>
    %30 = arith.cmpi slt, %28, %29 : vector<32x1xi32>
    %c3_i32_9 = arith.constant 3 : i32
    %31 = vector.broadcast %c3_i32_9 : i32 to vector<32x1xi32>
    %32 = arith.cmpi slt, %12, %31 : vector<32x1xi32>
    %33 = arith.ori %17, %32 : vector<32x1xi1>
    %34 = arith.andi %30, %33 : vector<32x1xi1>
    %35 = arith.extui %34 : vector<32x1xi1> to vector<32x1xi32>
    %36 = arith.sitofp %35 : vector<32x1xi32> to vector<32x1xf32>
    %37 = tpu.iota {dimensions = array<i32: 0>} : vector<128x128xi32>
    %38 = tpu.iota {dimensions = array<i32: 1>} : vector<128x128xi32>
    %c5_i32 = arith.constant 5 : i32
    %39 = vector.broadcast %c5_i32 : i32 to vector<128x128xi32>
    %40 = arith.shrsi %37, %39 : vector<128x128xi32>
    %c32_i32 = arith.constant 32 : i32
    %41 = vector.broadcast %c32_i32 : i32 to vector<128x128xi32>
    %42 = arith.muli %40, %41 : vector<128x128xi32>
    %43 = arith.subi %37, %42 : vector<128x128xi32>
    %c5_i32_10 = arith.constant 5 : i32
    %44 = vector.broadcast %c5_i32_10 : i32 to vector<128x128xi32>
    %45 = arith.shrsi %38, %44 : vector<128x128xi32>
    %c32_i32_11 = arith.constant 32 : i32
    %46 = vector.broadcast %c32_i32_11 : i32 to vector<128x128xi32>
    %47 = arith.muli %45, %46 : vector<128x128xi32>
    %48 = arith.subi %38, %47 : vector<128x128xi32>
    %c3_i32_12 = arith.constant 3 : i32
    %49 = vector.broadcast %c3_i32_12 : i32 to vector<128x128xi32>
    %50 = arith.shrsi %43, %49 : vector<128x128xi32>
    %c3_i32_13 = arith.constant 3 : i32
    %51 = vector.broadcast %c3_i32_13 : i32 to vector<128x128xi32>
    %52 = arith.shrsi %48, %51 : vector<128x128xi32>
    %c8_i32_14 = arith.constant 8 : i32
    %53 = vector.broadcast %c8_i32_14 : i32 to vector<128x128xi32>
    %54 = arith.muli %52, %53 : vector<128x128xi32>
    %55 = arith.subi %48, %54 : vector<128x128xi32>
    %56 = arith.cmpi eq, %52, %50 : vector<128x128xi32>
    %c1_i32_15 = arith.constant 1 : i32
    %57 = vector.broadcast %c1_i32_15 : i32 to vector<128x128xi32>
    %58 = arith.subi %50, %57 : vector<128x128xi32>
    %59 = arith.cmpi eq, %52, %58 : vector<128x128xi32>
    %c6_i32_16 = arith.constant 6 : i32
    %60 = vector.broadcast %c6_i32_16 : i32 to vector<128x128xi32>
    %61 = arith.cmpi slt, %55, %60 : vector<128x128xi32>
    %62 = arith.andi %59, %61 : vector<128x128xi1>
    %63 = arith.ori %56, %62 : vector<128x128xi1>
    %64 = arith.cmpi eq, %40, %45 : vector<128x128xi32>
    %65 = arith.andi %64, %63 : vector<128x128xi1>
    %c3_i32_17 = arith.constant 3 : i32
    %66 = vector.broadcast %c3_i32_17 : i32 to vector<128x128xi32>
    %67 = arith.shrsi %48, %66 : vector<128x128xi32>
    %c8_i32_18 = arith.constant 8 : i32
    %68 = vector.broadcast %c8_i32_18 : i32 to vector<128x128xi32>
    %69 = arith.muli %67, %68 : vector<128x128xi32>
    %70 = arith.subi %48, %69 : vector<128x128xi32>
    %c6_i32_19 = arith.constant 6 : i32
    %71 = vector.broadcast %c6_i32_19 : i32 to vector<128x128xi32>
    %72 = arith.cmpi slt, %70, %71 : vector<128x128xi32>
    %c6_i32_20 = arith.constant 6 : i32
    %73 = vector.broadcast %c6_i32_20 : i32 to vector<128x128xi32>
    %74 = arith.muli %67, %73 : vector<128x128xi32>
    %75 = arith.addi %74, %70 : vector<128x128xi32>
    %c1_i32_21 = arith.constant 1 : i32
    %76 = vector.broadcast %c1_i32_21 : i32 to vector<128x128xi32>
    %77 = arith.addi %67, %76 : vector<128x128xi32>
    %c6_i32_22 = arith.constant 6 : i32
    %78 = vector.broadcast %c6_i32_22 : i32 to vector<128x128xi32>
    %79 = arith.muli %77, %78 : vector<128x128xi32>
    %c6_i32_23 = arith.constant 6 : i32
    %80 = vector.broadcast %c6_i32_23 : i32 to vector<128x128xi32>
    %81 = arith.subi %70, %80 : vector<128x128xi32>
    %82 = arith.addi %79, %81 : vector<128x128xi32>
    %83 = arith.select %72, %75, %82 : vector<128x128xi1>, vector<128x128xi32>
    %84 = vector.broadcast %1 : i32 to vector<128x128xi32>
    %85 = arith.cmpi slt, %83, %84 : vector<128x128xi32>
    %c3_i32_24 = arith.constant 3 : i32
    %86 = vector.broadcast %c3_i32_24 : i32 to vector<128x128xi32>
    %87 = arith.cmpi slt, %67, %86 : vector<128x128xi32>
    %88 = arith.ori %72, %87 : vector<128x128xi1>
    %89 = arith.andi %85, %88 : vector<128x128xi1>
    %90 = arith.andi %65, %89 : vector<128x128xi1>
    %91 = arith.extui %90 : vector<128x128xi1> to vector<128x128xi32>
    %92 = arith.sitofp %91 : vector<128x128xi32> to vector<128x128xf32>
    %c7_i32 = arith.constant 7 : i32
    %93 = vector.broadcast %c7_i32 : i32 to vector<32x1xi32>
    %94 = arith.andi %10, %93 : vector<32x1xi32>
    %c-3_i32 = arith.constant -3 : i32
    %95 = vector.broadcast %c-3_i32 : i32 to vector<32x1xi32>
    %96 = arith.addi %94, %95 : vector<32x1xi32>
    %c0_i32 = arith.constant 0 : i32
    %97 = vector.broadcast %c0_i32 : i32 to vector<32x1xi32>
    %98 = arith.cmpi sge, %96, %97 : vector<32x1xi32>
    %c-3_i32_25 = arith.constant -3 : i32
    %99 = vector.broadcast %c-3_i32_25 : i32 to vector<32x1xi32>
    %100 = arith.addi %94, %99 : vector<32x1xi32>
    %c8_i32_26 = arith.constant 8 : i32
    %101 = vector.broadcast %c8_i32_26 : i32 to vector<32x1xi32>
    %102 = arith.cmpi slt, %100, %101 : vector<32x1xi32>
    %103 = arith.andi %98, %102 : vector<32x1xi1>
    %104 = arith.extui %103 : vector<32x1xi1> to vector<32x1xi32>
    %105 = arith.sitofp %104 : vector<32x1xi32> to vector<32x1xf32>
    %106 = vector.shape_cast %105 : vector<32x1xf32> to vector<32x1xf32>
    %107 = vector.broadcast %106 : vector<32x1xf32> to vector<32x64xf32>
    %c-2_i32 = arith.constant -2 : i32
    %108 = vector.broadcast %c-2_i32 : i32 to vector<32x1xi32>
    %109 = arith.addi %94, %108 : vector<32x1xi32>
    %c0_i32_27 = arith.constant 0 : i32
    %110 = vector.broadcast %c0_i32_27 : i32 to vector<32x1xi32>
    %111 = arith.cmpi sge, %109, %110 : vector<32x1xi32>
    %c-2_i32_28 = arith.constant -2 : i32
    %112 = vector.broadcast %c-2_i32_28 : i32 to vector<32x1xi32>
    %113 = arith.addi %94, %112 : vector<32x1xi32>
    %c8_i32_29 = arith.constant 8 : i32
    %114 = vector.broadcast %c8_i32_29 : i32 to vector<32x1xi32>
    %115 = arith.cmpi slt, %113, %114 : vector<32x1xi32>
    %116 = arith.andi %111, %115 : vector<32x1xi1>
    %117 = arith.extui %116 : vector<32x1xi1> to vector<32x1xi32>
    %118 = arith.sitofp %117 : vector<32x1xi32> to vector<32x1xf32>
    %119 = vector.shape_cast %118 : vector<32x1xf32> to vector<32x1xf32>
    %120 = vector.broadcast %119 : vector<32x1xf32> to vector<32x64xf32>
    %c-1_i32 = arith.constant -1 : i32
    %121 = vector.broadcast %c-1_i32 : i32 to vector<32x1xi32>
    %122 = arith.addi %94, %121 : vector<32x1xi32>
    %c0_i32_30 = arith.constant 0 : i32
    %123 = vector.broadcast %c0_i32_30 : i32 to vector<32x1xi32>
    %124 = arith.cmpi sge, %122, %123 : vector<32x1xi32>
    %c-1_i32_31 = arith.constant -1 : i32
    %125 = vector.broadcast %c-1_i32_31 : i32 to vector<32x1xi32>
    %126 = arith.addi %94, %125 : vector<32x1xi32>
    %c8_i32_32 = arith.constant 8 : i32
    %127 = vector.broadcast %c8_i32_32 : i32 to vector<32x1xi32>
    %128 = arith.cmpi slt, %126, %127 : vector<32x1xi32>
    %129 = arith.andi %124, %128 : vector<32x1xi1>
    %130 = arith.extui %129 : vector<32x1xi1> to vector<32x1xi32>
    %131 = arith.sitofp %130 : vector<32x1xi32> to vector<32x1xf32>
    %132 = vector.shape_cast %131 : vector<32x1xf32> to vector<32x1xf32>
    %133 = vector.broadcast %132 : vector<32x1xf32> to vector<32x64xf32>
    %c0_i32_33 = arith.constant 0 : i32
    %134 = vector.broadcast %c0_i32_33 : i32 to vector<32x1xi32>
    %135 = arith.addi %94, %134 : vector<32x1xi32>
    %c0_i32_34 = arith.constant 0 : i32
    %136 = vector.broadcast %c0_i32_34 : i32 to vector<32x1xi32>
    %137 = arith.cmpi sge, %135, %136 : vector<32x1xi32>
    %c0_i32_35 = arith.constant 0 : i32
    %138 = vector.broadcast %c0_i32_35 : i32 to vector<32x1xi32>
    %139 = arith.addi %94, %138 : vector<32x1xi32>
    %c8_i32_36 = arith.constant 8 : i32
    %140 = vector.broadcast %c8_i32_36 : i32 to vector<32x1xi32>
    %141 = arith.cmpi slt, %139, %140 : vector<32x1xi32>
    %142 = arith.andi %137, %141 : vector<32x1xi1>
    %143 = arith.extui %142 : vector<32x1xi1> to vector<32x1xi32>
    %144 = arith.sitofp %143 : vector<32x1xi32> to vector<32x1xf32>
    %145 = vector.shape_cast %144 : vector<32x1xf32> to vector<32x1xf32>
    %146 = vector.broadcast %145 : vector<32x1xf32> to vector<32x64xf32>
    %c1_i32_37 = arith.constant 1 : i32
    %147 = vector.broadcast %c1_i32_37 : i32 to vector<32x1xi32>
    %148 = arith.addi %94, %147 : vector<32x1xi32>
    %c0_i32_38 = arith.constant 0 : i32
    %149 = vector.broadcast %c0_i32_38 : i32 to vector<32x1xi32>
    %150 = arith.cmpi sge, %148, %149 : vector<32x1xi32>
    %c1_i32_39 = arith.constant 1 : i32
    %151 = vector.broadcast %c1_i32_39 : i32 to vector<32x1xi32>
    %152 = arith.addi %94, %151 : vector<32x1xi32>
    %c8_i32_40 = arith.constant 8 : i32
    %153 = vector.broadcast %c8_i32_40 : i32 to vector<32x1xi32>
    %154 = arith.cmpi slt, %152, %153 : vector<32x1xi32>
    %155 = arith.andi %150, %154 : vector<32x1xi1>
    %156 = arith.extui %155 : vector<32x1xi1> to vector<32x1xi32>
    %157 = arith.sitofp %156 : vector<32x1xi32> to vector<32x1xf32>
    %158 = vector.shape_cast %157 : vector<32x1xf32> to vector<32x1xf32>
    %159 = vector.broadcast %158 : vector<32x1xf32> to vector<32x64xf32>
    %c2_i32 = arith.constant 2 : i32
    %160 = vector.broadcast %c2_i32 : i32 to vector<32x1xi32>
    %161 = arith.addi %94, %160 : vector<32x1xi32>
    %c0_i32_41 = arith.constant 0 : i32
    %162 = vector.broadcast %c0_i32_41 : i32 to vector<32x1xi32>
    %163 = arith.cmpi sge, %161, %162 : vector<32x1xi32>
    %c2_i32_42 = arith.constant 2 : i32
    %164 = vector.broadcast %c2_i32_42 : i32 to vector<32x1xi32>
    %165 = arith.addi %94, %164 : vector<32x1xi32>
    %c8_i32_43 = arith.constant 8 : i32
    %166 = vector.broadcast %c8_i32_43 : i32 to vector<32x1xi32>
    %167 = arith.cmpi slt, %165, %166 : vector<32x1xi32>
    %168 = arith.andi %163, %167 : vector<32x1xi1>
    %169 = arith.extui %168 : vector<32x1xi1> to vector<32x1xi32>
    %170 = arith.sitofp %169 : vector<32x1xi32> to vector<32x1xf32>
    %171 = vector.shape_cast %170 : vector<32x1xf32> to vector<32x1xf32>
    %172 = vector.broadcast %171 : vector<32x1xf32> to vector<32x64xf32>
    %c3_i32_44 = arith.constant 3 : i32
    %173 = vector.broadcast %c3_i32_44 : i32 to vector<32x1xi32>
    %174 = arith.addi %94, %173 : vector<32x1xi32>
    %c0_i32_45 = arith.constant 0 : i32
    %175 = vector.broadcast %c0_i32_45 : i32 to vector<32x1xi32>
    %176 = arith.cmpi sge, %174, %175 : vector<32x1xi32>
    %c3_i32_46 = arith.constant 3 : i32
    %177 = vector.broadcast %c3_i32_46 : i32 to vector<32x1xi32>
    %178 = arith.addi %94, %177 : vector<32x1xi32>
    %c8_i32_47 = arith.constant 8 : i32
    %179 = vector.broadcast %c8_i32_47 : i32 to vector<32x1xi32>
    %180 = arith.cmpi slt, %178, %179 : vector<32x1xi32>
    %181 = arith.andi %176, %180 : vector<32x1xi1>
    %182 = arith.extui %181 : vector<32x1xi1> to vector<32x1xi32>
    %183 = arith.sitofp %182 : vector<32x1xi32> to vector<32x1xf32>
    %184 = vector.shape_cast %183 : vector<32x1xf32> to vector<32x1xf32>
    %185 = vector.broadcast %184 : vector<32x1xf32> to vector<32x64xf32>
    %cst_48 = arith.constant -1.000000e+09 : f32
    %c0_i32_49 = arith.constant 0 : i32
    %c2_i32_50 = arith.constant 2 : i32
    %186 = arith.addi %c0_i32_49, %c2_i32_50 : i32
    %c1_i32_51 = arith.constant 1 : i32
    %187 = scf.for %arg19 = %c0_i32_49 to %186 step %c1_i32_51 iter_args(%arg20 = %9) -> (vector<32x64xf32>)  : i32 {
      %191 = arith.index_cast %arg19 : i32 to index
      %c0_56 = arith.constant 0 : index
      %c0_57 = arith.constant 0 : index
      %192 = vector.load %arg16[%191, %c0_56, %c0_57] : memref<2x24x64xf32, #tpu.memory_space<vmem>>, vector<1x24x64xf32>
      %193 = vector.shape_cast %192 : vector<1x24x64xf32> to vector<24x64xf32>
      %194 = arith.index_cast %arg19 : i32 to index
      %c0_58 = arith.constant 0 : index
      %c0_59 = arith.constant 0 : index
      %195 = vector.load %arg17[%194, %c0_58, %c0_59] : memref<2x8x256xf32, #tpu.memory_space<vmem>>, vector<1x8x256xf32>
      %196 = vector.shape_cast %195 : vector<1x8x256xf32> to vector<8x256xf32>
      %197 = vector.extract_strided_slice %193 {offsets = [0, 0], sizes = [1, 64], strides = [1, 1]} : vector<24x64xf32> to vector<1x64xf32>
      %198 = vector.extract_strided_slice %193 {offsets = [1, 0], sizes = [1, 64], strides = [1, 1]} : vector<24x64xf32> to vector<1x64xf32>
      %199 = arith.index_cast %arg19 : i32 to index
      %c0_60 = arith.constant 0 : index
      %c0_61 = arith.constant 0 : index
      %200 = vector.load %arg5[%199, %c0_60, %c0_61] : memref<2x64x256xbf16, #tpu.memory_space<vmem>>, vector<1x64x256xbf16>
      %201 = vector.shape_cast %200 : vector<1x64x256xbf16> to vector<64x256xbf16>
      %202 = vector.extract_strided_slice %196 {offsets = [0, 0], sizes = [1, 256], strides = [1, 1]} : vector<8x256xf32> to vector<1x256xf32>
      %203 = arith.index_cast %arg19 : i32 to index
      %c0_62 = arith.constant 0 : index
      %c0_63 = arith.constant 0 : index
      %204 = vector.load %arg6[%203, %c0_62, %c0_63] : memref<2x256x64xbf16, #tpu.memory_space<vmem>>, vector<1x256x64xbf16>
      %205 = vector.shape_cast %204 : vector<1x256x64xbf16> to vector<256x64xbf16>
      %206 = vector.extract_strided_slice %193 {offsets = [2, 0], sizes = [1, 64], strides = [1, 1]} : vector<24x64xf32> to vector<1x64xf32>
      %cst_64 = arith.constant dense<0.000000e+00> : vector<32xf32>
      %207 = vector.multi_reduction <add>, %arg20, %cst_64 [1] : vector<32x64xf32> to vector<32xf32>
      %208 = vector.shape_cast %207 : vector<32xf32> to vector<32x1xf32>
      %cst_65 = arith.constant 6.400000e+01 : f32
      %209 = vector.broadcast %cst_65 : f32 to vector<32x1xf32>
      %210 = arith.divf %208, %209 : vector<32x1xf32>
      %211 = arith.mulf %arg20, %arg20 : vector<32x64xf32>
      %cst_66 = arith.constant dense<0.000000e+00> : vector<32xf32>
      %212 = vector.multi_reduction <add>, %211, %cst_66 [1] : vector<32x64xf32> to vector<32xf32>
      %213 = vector.shape_cast %212 : vector<32xf32> to vector<32x1xf32>
      %cst_67 = arith.constant 6.400000e+01 : f32
      %214 = vector.broadcast %cst_67 : f32 to vector<32x1xf32>
      %215 = arith.divf %213, %214 : vector<32x1xf32>
      %216 = arith.mulf %210, %210 : vector<32x1xf32>
      %217 = arith.subf %215, %216 : vector<32x1xf32>
      %cst_68 = arith.constant 0.000000e+00 : f32
      %218 = vector.broadcast %cst_68 : f32 to vector<32x1xf32>
      %219 = arith.maximumf %217, %218 : vector<32x1xf32>
      %220 = vector.broadcast %210 : vector<32x1xf32> to vector<32x64xf32>
      %221 = arith.subf %arg20, %220 : vector<32x64xf32>
      %cst_69 = arith.constant 9.99999974E-6 : f32
      %222 = vector.broadcast %cst_69 : f32 to vector<32x1xf32>
      %223 = arith.addf %219, %222 : vector<32x1xf32>
      %224 = math.rsqrt %223 : vector<32x1xf32>
      %225 = vector.broadcast %224 : vector<32x1xf32> to vector<32x64xf32>
      %226 = arith.mulf %221, %225 : vector<32x64xf32>
      %227 = vector.broadcast %197 : vector<1x64xf32> to vector<32x64xf32>
      %228 = arith.mulf %226, %227 : vector<32x64xf32>
      %229 = vector.broadcast %198 : vector<1x64xf32> to vector<32x64xf32>
      %230 = arith.addf %228, %229 : vector<32x64xf32>
      %231 = arith.truncf %230 : vector<32x64xf32> to vector<32x64xbf16>
      %cst_70 = arith.constant dense<0.000000e+00> : vector<32x256xf32>
      %232 = tpu.matmul %231, %201, %cst_70 {dimension_numbers = #tpu.dot_dimension_numbers<[1], [0], [0], [1], [0, 0, 1, 1], [], []>} : vector<32x64xbf16>, vector<64x256xbf16>, vector<32x256xf32> -> vector<32x256xf32>
      %233 = vector.broadcast %202 : vector<1x256xf32> to vector<32x256xf32>
      %234 = arith.addf %232, %233 : vector<32x256xf32>
      %235 = arith.negf %234 : vector<32x256xf32>
      %236 = math.exp %235 : vector<32x256xf32>
      %cst_71 = arith.constant 1.000000e+00 : f32
      %237 = vector.broadcast %cst_71 : f32 to vector<32x256xf32>
      %238 = arith.addf %237, %236 : vector<32x256xf32>
      %239 = arith.divf %237, %238 : vector<32x256xf32>
      %240 = arith.mulf %234, %239 : vector<32x256xf32>
      %241 = arith.truncf %240 : vector<32x256xf32> to vector<32x256xbf16>
      %cst_72 = arith.constant dense<0.000000e+00> : vector<32x64xf32>
      %242 = tpu.matmul %241, %205, %cst_72 {dimension_numbers = #tpu.dot_dimension_numbers<[1], [0], [0], [1], [0, 0, 1, 1], [], []>} : vector<32x256xbf16>, vector<256x64xbf16>, vector<32x64xf32> -> vector<32x64xf32>
      %243 = vector.broadcast %206 : vector<1x64xf32> to vector<32x64xf32>
      %244 = arith.addf %242, %243 : vector<32x64xf32>
      %cst_73 = arith.constant 5.000000e-01 : f32
      %245 = vector.broadcast %cst_73 : f32 to vector<32x64xf32>
      %246 = arith.mulf %245, %244 : vector<32x64xf32>
      %247 = arith.addf %246, %arg20 : vector<32x64xf32>
      %248 = vector.extract_strided_slice %193 {offsets = [3, 0], sizes = [1, 64], strides = [1, 1]} : vector<24x64xf32> to vector<1x64xf32>
      %249 = vector.extract_strided_slice %193 {offsets = [4, 0], sizes = [1, 64], strides = [1, 1]} : vector<24x64xf32> to vector<1x64xf32>
      %cst_74 = arith.constant dense<0.000000e+00> : vector<32xf32>
      %250 = vector.multi_reduction <add>, %247, %cst_74 [1] : vector<32x64xf32> to vector<32xf32>
      %251 = vector.shape_cast %250 : vector<32xf32> to vector<32x1xf32>
      %cst_75 = arith.constant 6.400000e+01 : f32
      %252 = vector.broadcast %cst_75 : f32 to vector<32x1xf32>
      %253 = arith.divf %251, %252 : vector<32x1xf32>
      %254 = arith.mulf %247, %247 : vector<32x64xf32>
      %cst_76 = arith.constant dense<0.000000e+00> : vector<32xf32>
      %255 = vector.multi_reduction <add>, %254, %cst_76 [1] : vector<32x64xf32> to vector<32xf32>
      %256 = vector.shape_cast %255 : vector<32xf32> to vector<32x1xf32>
      %cst_77 = arith.constant 6.400000e+01 : f32
      %257 = vector.broadcast %cst_77 : f32 to vector<32x1xf32>
      %258 = arith.divf %256, %257 : vector<32x1xf32>
      %259 = arith.mulf %253, %253 : vector<32x1xf32>
      %260 = arith.subf %258, %259 : vector<32x1xf32>
      %cst_78 = arith.constant 0.000000e+00 : f32
      %261 = vector.broadcast %cst_78 : f32 to vector<32x1xf32>
      %262 = arith.maximumf %260, %261 : vector<32x1xf32>
      %263 = vector.broadcast %253 : vector<32x1xf32> to vector<32x64xf32>
      %264 = arith.subf %247, %263 : vector<32x64xf32>
      %cst_79 = arith.constant 9.99999974E-6 : f32
      %265 = vector.broadcast %cst_79 : f32 to vector<32x1xf32>
      %266 = arith.addf %262, %265 : vector<32x1xf32>
      %267 = math.rsqrt %266 : vector<32x1xf32>
      %268 = vector.broadcast %267 : vector<32x1xf32> to vector<32x64xf32>
      %269 = arith.mulf %264, %268 : vector<32x64xf32>
      %270 = vector.broadcast %248 : vector<1x64xf32> to vector<32x64xf32>
      %271 = arith.mulf %269, %270 : vector<32x64xf32>
      %272 = vector.broadcast %249 : vector<1x64xf32> to vector<32x64xf32>
      %273 = arith.addf %271, %272 : vector<32x64xf32>
      %274 = arith.truncf %273 : vector<32x64xf32> to vector<32x64xbf16>
      %275 = arith.index_cast %arg19 : i32 to index
      %c0_80 = arith.constant 0 : index
      %c0_81 = arith.constant 0 : index
      %276 = vector.load %arg7[%275, %c0_80, %c0_81] : memref<2x64x64xbf16, #tpu.memory_space<vmem>>, vector<1x64x64xbf16>
      %277 = vector.shape_cast %276 : vector<1x64x64xbf16> to vector<64x64xbf16>
      %cst_82 = arith.constant dense<0.000000e+00> : vector<32x64xf32>
      %278 = tpu.matmul %274, %277, %cst_82 {dimension_numbers = #tpu.dot_dimension_numbers<[1], [0], [0], [1], [0, 0, 1, 1], [], []>} : vector<32x64xbf16>, vector<64x64xbf16>, vector<32x64xf32> -> vector<32x64xf32>
      %279 = vector.extract_strided_slice %193 {offsets = [5, 0], sizes = [1, 64], strides = [1, 1]} : vector<24x64xf32> to vector<1x64xf32>
      %280 = vector.broadcast %279 : vector<1x64xf32> to vector<32x64xf32>
      %281 = arith.addf %278, %280 : vector<32x64xf32>
      %282 = arith.index_cast %arg19 : i32 to index
      %c0_83 = arith.constant 0 : index
      %c0_84 = arith.constant 0 : index
      %283 = vector.load %arg8[%282, %c0_83, %c0_84] : memref<2x64x64xbf16, #tpu.memory_space<vmem>>, vector<1x64x64xbf16>
      %284 = vector.shape_cast %283 : vector<1x64x64xbf16> to vector<64x64xbf16>
      %cst_85 = arith.constant dense<0.000000e+00> : vector<32x64xf32>
      %285 = tpu.matmul %274, %284, %cst_85 {dimension_numbers = #tpu.dot_dimension_numbers<[1], [0], [0], [1], [0, 0, 1, 1], [], []>} : vector<32x64xbf16>, vector<64x64xbf16>, vector<32x64xf32> -> vector<32x64xf32>
      %286 = vector.extract_strided_slice %193 {offsets = [6, 0], sizes = [1, 64], strides = [1, 1]} : vector<24x64xf32> to vector<1x64xf32>
      %287 = vector.broadcast %286 : vector<1x64xf32> to vector<32x64xf32>
      %288 = arith.addf %285, %287 : vector<32x64xf32>
      %289 = vector.extract_strided_slice %281 {offsets = [0, 0], sizes = [32, 16], strides = [1, 1]} : vector<32x64xf32> to vector<32x16xf32>
      %290 = vector.extract_strided_slice %281 {offsets = [0, 16], sizes = [32, 16], strides = [1, 1]} : vector<32x64xf32> to vector<32x16xf32>
      %291 = vector.extract_strided_slice %281 {offsets = [0, 32], sizes = [32, 16], strides = [1, 1]} : vector<32x64xf32> to vector<32x16xf32>
      %292 = vector.extract_strided_slice %281 {offsets = [0, 48], sizes = [32, 16], strides = [1, 1]} : vector<32x64xf32> to vector<32x16xf32>
      %293 = tpu.concatenate %289, %290, %291, %292 in 0 : vector<32x16xf32>, vector<32x16xf32>, vector<32x16xf32>, vector<32x16xf32> -> vector<128x16xf32>
      %294 = vector.extract_strided_slice %288 {offsets = [0, 0], sizes = [32, 16], strides = [1, 1]} : vector<32x64xf32> to vector<32x16xf32>
      %295 = vector.extract_strided_slice %288 {offsets = [0, 16], sizes = [32, 16], strides = [1, 1]} : vector<32x64xf32> to vector<32x16xf32>
      %296 = vector.extract_strided_slice %288 {offsets = [0, 32], sizes = [32, 16], strides = [1, 1]} : vector<32x64xf32> to vector<32x16xf32>
      %297 = vector.extract_strided_slice %288 {offsets = [0, 48], sizes = [32, 16], strides = [1, 1]} : vector<32x64xf32> to vector<32x16xf32>
      %298 = tpu.concatenate %294, %295, %296, %297 in 0 : vector<32x16xf32>, vector<32x16xf32>, vector<32x16xf32>, vector<32x16xf32> -> vector<128x16xf32>
      %299 = arith.truncf %293 : vector<128x16xf32> to vector<128x16xbf16>
      %300 = arith.truncf %298 : vector<128x16xf32> to vector<128x16xbf16>
      %cst_86 = arith.constant dense<0.000000e+00> : vector<128x128xf32>
      %301 = tpu.matmul %299, %300, %cst_86 {dimension_numbers = #tpu.dot_dimension_numbers<[1], [1], [0], [0], [0, 0, 1, 0], [], []>} : vector<128x16xbf16>, vector<128x16xbf16>, vector<128x128xf32> -> vector<128x128xf32>
      %cst_87 = arith.constant 0.000000e+00 : f32
      %302 = vector.broadcast %cst_87 : f32 to vector<128x128xf32>
      %303 = arith.cmpf one, %92, %302 : vector<128x128xf32>
      %304 = vector.broadcast %cst_48 : f32 to vector<128x128xf32>
      %305 = arith.select %303, %301, %304 : vector<128x128xi1>, vector<128x128xf32>
      %cst_88 = arith.constant dense<0xFF800000> : vector<128xf32>
      %306 = vector.multi_reduction <maximumf>, %305, %cst_88 [1] : vector<128x128xf32> to vector<128xf32>
      %307 = vector.shape_cast %306 : vector<128xf32> to vector<128x1xf32>
      %308 = vector.broadcast %307 : vector<128x1xf32> to vector<128x128xf32>
      %309 = arith.subf %305, %308 : vector<128x128xf32>
      %310 = math.exp %309 : vector<128x128xf32>
      %cst_89 = arith.constant dense<0.000000e+00> : vector<128xf32>
      %311 = vector.multi_reduction <add>, %310, %cst_89 [1] : vector<128x128xf32> to vector<128xf32>
      %312 = vector.shape_cast %311 : vector<128xf32> to vector<128x1xf32>
      %313 = tpu.reciprocal %312 {approx = true} : vector<128x1xf32> -> vector<128x1xf32>
      %314 = vector.broadcast %313 : vector<128x1xf32> to vector<128x128xf32>
      %315 = arith.mulf %310, %314 : vector<128x128xf32>
      %316 = arith.index_cast %arg19 : i32 to index
      %c0_90 = arith.constant 0 : index
      %c0_91 = arith.constant 0 : index
      %317 = vector.load %arg9[%316, %c0_90, %c0_91] : memref<2x256x64xbf16, #tpu.memory_space<vmem>>, vector<1x256x64xbf16>
      %318 = vector.shape_cast %317 : vector<1x256x64xbf16> to vector<256x64xbf16>
      %319 = vector.extract_strided_slice %318 {offsets = [0, 0], sizes = [64, 64], strides = [1, 1]} : vector<256x64xbf16> to vector<64x64xbf16>
      %cst_92 = arith.constant dense<0.000000e+00> : vector<32x64xf32>
      %320 = tpu.matmul %274, %319, %cst_92 {dimension_numbers = #tpu.dot_dimension_numbers<[1], [0], [0], [1], [0, 0, 1, 1], [], []>} : vector<32x64xbf16>, vector<64x64xbf16>, vector<32x64xf32> -> vector<32x64xf32>
      %321 = vector.extract_strided_slice %318 {offsets = [64, 0], sizes = [64, 64], strides = [1, 1]} : vector<256x64xbf16> to vector<64x64xbf16>
      %cst_93 = arith.constant dense<0.000000e+00> : vector<32x64xf32>
      %322 = tpu.matmul %274, %321, %cst_93 {dimension_numbers = #tpu.dot_dimension_numbers<[1], [0], [0], [1], [0, 0, 1, 1], [], []>} : vector<32x64xbf16>, vector<64x64xbf16>, vector<32x64xf32> -> vector<32x64xf32>
      %323 = vector.extract_strided_slice %318 {offsets = [128, 0], sizes = [64, 64], strides = [1, 1]} : vector<256x64xbf16> to vector<64x64xbf16>
      %cst_94 = arith.constant dense<0.000000e+00> : vector<32x64xf32>
      %324 = tpu.matmul %274, %323, %cst_94 {dimension_numbers = #tpu.dot_dimension_numbers<[1], [0], [0], [1], [0, 0, 1, 1], [], []>} : vector<32x64xbf16>, vector<64x64xbf16>, vector<32x64xf32> -> vector<32x64xf32>
      %325 = vector.extract_strided_slice %318 {offsets = [192, 0], sizes = [64, 64], strides = [1, 1]} : vector<256x64xbf16> to vector<64x64xbf16>
      %cst_95 = arith.constant dense<0.000000e+00> : vector<32x64xf32>
      %326 = tpu.matmul %274, %325, %cst_95 {dimension_numbers = #tpu.dot_dimension_numbers<[1], [0], [0], [1], [0, 0, 1, 1], [], []>} : vector<32x64xbf16>, vector<64x64xbf16>, vector<32x64xf32> -> vector<32x64xf32>
      %327 = tpu.concatenate %320, %322, %324, %326 in 0 : vector<32x64xf32>, vector<32x64xf32>, vector<32x64xf32>, vector<32x64xf32> -> vector<128x64xf32>
      %328 = arith.truncf %315 : vector<128x128xf32> to vector<128x128xbf16>
      %329 = arith.truncf %327 : vector<128x64xf32> to vector<128x64xbf16>
      %cst_96 = arith.constant dense<0.000000e+00> : vector<128x64xf32>
      %330 = tpu.matmul %328, %329, %cst_96 {dimension_numbers = #tpu.dot_dimension_numbers<[1], [0], [0], [1], [0, 0, 1, 1], [], []>} : vector<128x128xbf16>, vector<128x64xbf16>, vector<128x64xf32> -> vector<128x64xf32>
      %331 = vector.extract_strided_slice %330 {offsets = [0, 0], sizes = [32, 64], strides = [1, 1]} : vector<128x64xf32> to vector<32x64xf32>
      %332 = vector.extract_strided_slice %330 {offsets = [32, 0], sizes = [32, 64], strides = [1, 1]} : vector<128x64xf32> to vector<32x64xf32>
      %333 = arith.addf %331, %332 : vector<32x64xf32>
      %334 = vector.extract_strided_slice %330 {offsets = [64, 0], sizes = [32, 64], strides = [1, 1]} : vector<128x64xf32> to vector<32x64xf32>
      %335 = arith.addf %333, %334 : vector<32x64xf32>
      %336 = vector.extract_strided_slice %330 {offsets = [96, 0], sizes = [32, 64], strides = [1, 1]} : vector<128x64xf32> to vector<32x64xf32>
      %337 = arith.addf %335, %336 : vector<32x64xf32>
      %338 = vector.extract_strided_slice %193 {offsets = [7, 0], sizes = [1, 64], strides = [1, 1]} : vector<24x64xf32> to vector<1x64xf32>
      %339 = vector.broadcast %338 : vector<1x64xf32> to vector<32x64xf32>
      %340 = arith.addf %337, %339 : vector<32x64xf32>
      %341 = arith.addf %340, %247 : vector<32x64xf32>
      %342 = vector.broadcast %36 : vector<32x1xf32> to vector<32x64xf32>
      %343 = arith.mulf %341, %342 : vector<32x64xf32>
      %344 = vector.extract_strided_slice %193 {offsets = [8, 0], sizes = [1, 64], strides = [1, 1]} : vector<24x64xf32> to vector<1x64xf32>
      %345 = vector.extract_strided_slice %193 {offsets = [9, 0], sizes = [1, 64], strides = [1, 1]} : vector<24x64xf32> to vector<1x64xf32>
      %cst_97 = arith.constant dense<0.000000e+00> : vector<32xf32>
      %346 = vector.multi_reduction <add>, %343, %cst_97 [1] : vector<32x64xf32> to vector<32xf32>
      %347 = vector.shape_cast %346 : vector<32xf32> to vector<32x1xf32>
      %cst_98 = arith.constant 6.400000e+01 : f32
      %348 = vector.broadcast %cst_98 : f32 to vector<32x1xf32>
      %349 = arith.divf %347, %348 : vector<32x1xf32>
      %350 = arith.mulf %343, %343 : vector<32x64xf32>
      %cst_99 = arith.constant dense<0.000000e+00> : vector<32xf32>
      %351 = vector.multi_reduction <add>, %350, %cst_99 [1] : vector<32x64xf32> to vector<32xf32>
      %352 = vector.shape_cast %351 : vector<32xf32> to vector<32x1xf32>
      %cst_100 = arith.constant 6.400000e+01 : f32
      %353 = vector.broadcast %cst_100 : f32 to vector<32x1xf32>
      %354 = arith.divf %352, %353 : vector<32x1xf32>
      %355 = arith.mulf %349, %349 : vector<32x1xf32>
      %356 = arith.subf %354, %355 : vector<32x1xf32>
      %cst_101 = arith.constant 0.000000e+00 : f32
      %357 = vector.broadcast %cst_101 : f32 to vector<32x1xf32>
      %358 = arith.maximumf %356, %357 : vector<32x1xf32>
      %359 = vector.broadcast %349 : vector<32x1xf32> to vector<32x64xf32>
      %360 = arith.subf %343, %359 : vector<32x64xf32>
      %cst_102 = arith.constant 9.99999974E-6 : f32
      %361 = vector.broadcast %cst_102 : f32 to vector<32x1xf32>
      %362 = arith.addf %358, %361 : vector<32x1xf32>
      %363 = math.rsqrt %362 : vector<32x1xf32>
      %364 = vector.broadcast %363 : vector<32x1xf32> to vector<32x64xf32>
      %365 = arith.mulf %360, %364 : vector<32x64xf32>
      %366 = vector.broadcast %344 : vector<1x64xf32> to vector<32x64xf32>
      %367 = arith.mulf %365, %366 : vector<32x64xf32>
      %368 = vector.broadcast %345 : vector<1x64xf32> to vector<32x64xf32>
      %369 = arith.addf %367, %368 : vector<32x64xf32>
      %370 = arith.truncf %369 : vector<32x64xf32> to vector<32x64xbf16>
      %371 = arith.index_cast %arg19 : i32 to index
      %c0_103 = arith.constant 0 : index
      %c0_104 = arith.constant 0 : index
      %372 = vector.load %arg10[%371, %c0_103, %c0_104] : memref<2x64x64xbf16, #tpu.memory_space<vmem>>, vector<1x64x64xbf16>
      %373 = vector.shape_cast %372 : vector<1x64x64xbf16> to vector<64x64xbf16>
      %cst_105 = arith.constant dense<0.000000e+00> : vector<32x64xf32>
      %374 = tpu.matmul %370, %373, %cst_105 {dimension_numbers = #tpu.dot_dimension_numbers<[1], [0], [0], [1], [0, 0, 1, 1], [], []>} : vector<32x64xbf16>, vector<64x64xbf16>, vector<32x64xf32> -> vector<32x64xf32>
      %375 = vector.extract_strided_slice %193 {offsets = [10, 0], sizes = [1, 64], strides = [1, 1]} : vector<24x64xf32> to vector<1x64xf32>
      %376 = vector.broadcast %375 : vector<1x64xf32> to vector<32x64xf32>
      %377 = arith.addf %374, %376 : vector<32x64xf32>
      %378 = arith.index_cast %arg19 : i32 to index
      %c0_106 = arith.constant 0 : index
      %c0_107 = arith.constant 0 : index
      %379 = vector.load %arg11[%378, %c0_106, %c0_107] : memref<2x64x64xbf16, #tpu.memory_space<vmem>>, vector<1x64x64xbf16>
      %380 = vector.shape_cast %379 : vector<1x64x64xbf16> to vector<64x64xbf16>
      %cst_108 = arith.constant dense<0.000000e+00> : vector<32x64xf32>
      %381 = tpu.matmul %370, %380, %cst_108 {dimension_numbers = #tpu.dot_dimension_numbers<[1], [0], [0], [1], [0, 0, 1, 1], [], []>} : vector<32x64xbf16>, vector<64x64xbf16>, vector<32x64xf32> -> vector<32x64xf32>
      %382 = vector.extract_strided_slice %193 {offsets = [11, 0], sizes = [1, 64], strides = [1, 1]} : vector<24x64xf32> to vector<1x64xf32>
      %383 = vector.broadcast %382 : vector<1x64xf32> to vector<32x64xf32>
      %384 = arith.addf %381, %383 : vector<32x64xf32>
      %385 = arith.negf %384 : vector<32x64xf32>
      %386 = math.exp %385 : vector<32x64xf32>
      %cst_109 = arith.constant 1.000000e+00 : f32
      %387 = vector.broadcast %cst_109 : f32 to vector<32x64xf32>
      %388 = arith.addf %387, %386 : vector<32x64xf32>
      %389 = arith.divf %387, %388 : vector<32x64xf32>
      %390 = arith.mulf %377, %389 : vector<32x64xf32>
      %391 = arith.index_cast %arg19 : i32 to index
      %c0_110 = arith.constant 0 : index
      %c0_111 = arith.constant 0 : index
      %392 = vector.load %arg13[%391, %c0_110, %c0_111] : memref<2x8x64xf32, #tpu.memory_space<vmem>>, vector<1x8x64xf32>
      %393 = vector.shape_cast %392 : vector<1x8x64xf32> to vector<8x64xf32>
      %cst_112 = arith.constant 0.000000e+00 : f32
      %394 = vector.broadcast %cst_112 : f32 to vector<32x64xf32>
      %395 = vector.extract_strided_slice %393 {offsets = [0, 0], sizes = [1, 64], strides = [1, 1]} : vector<8x64xf32> to vector<1x64xf32>
      %396 = vector.broadcast %395 : vector<1x64xf32> to vector<32x64xf32>
      %397 = arith.mulf %107, %396 : vector<32x64xf32>
      %c3_i32_113 = arith.constant 3 : i32
      %398 = tpu.dynamic_rotate %390 by %c3_i32_113 dim 0 : vector<32x64xf32>, i32 -> vector<32x64xf32>
      %399 = arith.mulf %398, %397 : vector<32x64xf32>
      %400 = arith.addf %394, %399 : vector<32x64xf32>
      %401 = vector.extract_strided_slice %393 {offsets = [1, 0], sizes = [1, 64], strides = [1, 1]} : vector<8x64xf32> to vector<1x64xf32>
      %402 = vector.broadcast %401 : vector<1x64xf32> to vector<32x64xf32>
      %403 = arith.mulf %120, %402 : vector<32x64xf32>
      %c2_i32_114 = arith.constant 2 : i32
      %404 = tpu.dynamic_rotate %390 by %c2_i32_114 dim 0 : vector<32x64xf32>, i32 -> vector<32x64xf32>
      %405 = arith.mulf %404, %403 : vector<32x64xf32>
      %406 = arith.addf %400, %405 : vector<32x64xf32>
      %407 = vector.extract_strided_slice %393 {offsets = [2, 0], sizes = [1, 64], strides = [1, 1]} : vector<8x64xf32> to vector<1x64xf32>
      %408 = vector.broadcast %407 : vector<1x64xf32> to vector<32x64xf32>
      %409 = arith.mulf %133, %408 : vector<32x64xf32>
      %c1_i32_115 = arith.constant 1 : i32
      %410 = tpu.dynamic_rotate %390 by %c1_i32_115 dim 0 : vector<32x64xf32>, i32 -> vector<32x64xf32>
      %411 = arith.mulf %410, %409 : vector<32x64xf32>
      %412 = arith.addf %406, %411 : vector<32x64xf32>
      %413 = vector.extract_strided_slice %393 {offsets = [3, 0], sizes = [1, 64], strides = [1, 1]} : vector<8x64xf32> to vector<1x64xf32>
      %414 = vector.broadcast %413 : vector<1x64xf32> to vector<32x64xf32>
      %415 = arith.mulf %146, %414 : vector<32x64xf32>
      %416 = arith.mulf %390, %415 : vector<32x64xf32>
      %417 = arith.addf %412, %416 : vector<32x64xf32>
      %418 = vector.extract_strided_slice %393 {offsets = [4, 0], sizes = [1, 64], strides = [1, 1]} : vector<8x64xf32> to vector<1x64xf32>
      %419 = vector.broadcast %418 : vector<1x64xf32> to vector<32x64xf32>
      %420 = arith.mulf %159, %419 : vector<32x64xf32>
      %c31_i32 = arith.constant 31 : i32
      %421 = tpu.dynamic_rotate %390 by %c31_i32 dim 0 : vector<32x64xf32>, i32 -> vector<32x64xf32>
      %422 = arith.mulf %421, %420 : vector<32x64xf32>
      %423 = arith.addf %417, %422 : vector<32x64xf32>
      %424 = vector.extract_strided_slice %393 {offsets = [5, 0], sizes = [1, 64], strides = [1, 1]} : vector<8x64xf32> to vector<1x64xf32>
      %425 = vector.broadcast %424 : vector<1x64xf32> to vector<32x64xf32>
      %426 = arith.mulf %172, %425 : vector<32x64xf32>
      %c30_i32 = arith.constant 30 : i32
      %427 = tpu.dynamic_rotate %390 by %c30_i32 dim 0 : vector<32x64xf32>, i32 -> vector<32x64xf32>
      %428 = arith.mulf %427, %426 : vector<32x64xf32>
      %429 = arith.addf %423, %428 : vector<32x64xf32>
      %430 = vector.extract_strided_slice %393 {offsets = [6, 0], sizes = [1, 64], strides = [1, 1]} : vector<8x64xf32> to vector<1x64xf32>
      %431 = vector.broadcast %430 : vector<1x64xf32> to vector<32x64xf32>
      %432 = arith.mulf %185, %431 : vector<32x64xf32>
      %c29_i32 = arith.constant 29 : i32
      %433 = tpu.dynamic_rotate %390 by %c29_i32 dim 0 : vector<32x64xf32>, i32 -> vector<32x64xf32>
      %434 = arith.mulf %433, %432 : vector<32x64xf32>
      %435 = arith.addf %429, %434 : vector<32x64xf32>
      %436 = vector.extract_strided_slice %193 {offsets = [12, 0], sizes = [1, 64], strides = [1, 1]} : vector<24x64xf32> to vector<1x64xf32>
      %437 = vector.broadcast %436 : vector<1x64xf32> to vector<32x64xf32>
      %438 = arith.addf %435, %437 : vector<32x64xf32>
      %439 = vector.extract_strided_slice %193 {offsets = [13, 0], sizes = [1, 64], strides = [1, 1]} : vector<24x64xf32> to vector<1x64xf32>
      %440 = vector.extract_strided_slice %193 {offsets = [14, 0], sizes = [1, 64], strides = [1, 1]} : vector<24x64xf32> to vector<1x64xf32>
      %cst_116 = arith.constant dense<0.000000e+00> : vector<32xf32>
      %441 = vector.multi_reduction <add>, %438, %cst_116 [1] : vector<32x64xf32> to vector<32xf32>
      %442 = vector.shape_cast %441 : vector<32xf32> to vector<32x1xf32>
      %cst_117 = arith.constant 6.400000e+01 : f32
      %443 = vector.broadcast %cst_117 : f32 to vector<32x1xf32>
      %444 = arith.divf %442, %443 : vector<32x1xf32>
      %445 = arith.mulf %438, %438 : vector<32x64xf32>
      %cst_118 = arith.constant dense<0.000000e+00> : vector<32xf32>
      %446 = vector.multi_reduction <add>, %445, %cst_118 [1] : vector<32x64xf32> to vector<32xf32>
      %447 = vector.shape_cast %446 : vector<32xf32> to vector<32x1xf32>
      %cst_119 = arith.constant 6.400000e+01 : f32
      %448 = vector.broadcast %cst_119 : f32 to vector<32x1xf32>
      %449 = arith.divf %447, %448 : vector<32x1xf32>
      %450 = arith.mulf %444, %444 : vector<32x1xf32>
      %451 = arith.subf %449, %450 : vector<32x1xf32>
      %cst_120 = arith.constant 0.000000e+00 : f32
      %452 = vector.broadcast %cst_120 : f32 to vector<32x1xf32>
      %453 = arith.maximumf %451, %452 : vector<32x1xf32>
      %454 = vector.broadcast %444 : vector<32x1xf32> to vector<32x64xf32>
      %455 = arith.subf %438, %454 : vector<32x64xf32>
      %cst_121 = arith.constant 9.99999974E-6 : f32
      %456 = vector.broadcast %cst_121 : f32 to vector<32x1xf32>
      %457 = arith.addf %453, %456 : vector<32x1xf32>
      %458 = math.rsqrt %457 : vector<32x1xf32>
      %459 = vector.broadcast %458 : vector<32x1xf32> to vector<32x64xf32>
      %460 = arith.mulf %455, %459 : vector<32x64xf32>
      %461 = vector.broadcast %439 : vector<1x64xf32> to vector<32x64xf32>
      %462 = arith.mulf %460, %461 : vector<32x64xf32>
      %463 = vector.broadcast %440 : vector<1x64xf32> to vector<32x64xf32>
      %464 = arith.addf %462, %463 : vector<32x64xf32>
      %465 = arith.negf %464 : vector<32x64xf32>
      %466 = math.exp %465 : vector<32x64xf32>
      %cst_122 = arith.constant 1.000000e+00 : f32
      %467 = vector.broadcast %cst_122 : f32 to vector<32x64xf32>
      %468 = arith.addf %467, %466 : vector<32x64xf32>
      %469 = arith.divf %467, %468 : vector<32x64xf32>
      %470 = arith.mulf %464, %469 : vector<32x64xf32>
      %471 = arith.truncf %470 : vector<32x64xf32> to vector<32x64xbf16>
      %472 = arith.index_cast %arg19 : i32 to index
      %c0_123 = arith.constant 0 : index
      %c0_124 = arith.constant 0 : index
      %473 = vector.load %arg12[%472, %c0_123, %c0_124] : memref<2x64x64xbf16, #tpu.memory_space<vmem>>, vector<1x64x64xbf16>
      %474 = vector.shape_cast %473 : vector<1x64x64xbf16> to vector<64x64xbf16>
      %cst_125 = arith.constant dense<0.000000e+00> : vector<32x64xf32>
      %475 = tpu.matmul %471, %474, %cst_125 {dimension_numbers = #tpu.dot_dimension_numbers<[1], [0], [0], [1], [0, 0, 1, 1], [], []>} : vector<32x64xbf16>, vector<64x64xbf16>, vector<32x64xf32> -> vector<32x64xf32>
      %476 = vector.extract_strided_slice %193 {offsets = [15, 0], sizes = [1, 64], strides = [1, 1]} : vector<24x64xf32> to vector<1x64xf32>
      %477 = vector.broadcast %476 : vector<1x64xf32> to vector<32x64xf32>
      %478 = arith.addf %475, %477 : vector<32x64xf32>
      %479 = arith.addf %478, %343 : vector<32x64xf32>
      %480 = vector.extract_strided_slice %193 {offsets = [16, 0], sizes = [1, 64], strides = [1, 1]} : vector<24x64xf32> to vector<1x64xf32>
      %481 = vector.extract_strided_slice %193 {offsets = [17, 0], sizes = [1, 64], strides = [1, 1]} : vector<24x64xf32> to vector<1x64xf32>
      %482 = arith.index_cast %arg19 : i32 to index
      %c0_126 = arith.constant 0 : index
      %c0_127 = arith.constant 0 : index
      %483 = vector.load %arg14[%482, %c0_126, %c0_127] : memref<2x64x256xbf16, #tpu.memory_space<vmem>>, vector<1x64x256xbf16>
      %484 = vector.shape_cast %483 : vector<1x64x256xbf16> to vector<64x256xbf16>
      %485 = vector.extract_strided_slice %196 {offsets = [1, 0], sizes = [1, 256], strides = [1, 1]} : vector<8x256xf32> to vector<1x256xf32>
      %486 = arith.index_cast %arg19 : i32 to index
      %c0_128 = arith.constant 0 : index
      %c0_129 = arith.constant 0 : index
      %487 = vector.load %arg15[%486, %c0_128, %c0_129] : memref<2x256x64xbf16, #tpu.memory_space<vmem>>, vector<1x256x64xbf16>
      %488 = vector.shape_cast %487 : vector<1x256x64xbf16> to vector<256x64xbf16>
      %489 = vector.extract_strided_slice %193 {offsets = [18, 0], sizes = [1, 64], strides = [1, 1]} : vector<24x64xf32> to vector<1x64xf32>
      %cst_130 = arith.constant dense<0.000000e+00> : vector<32xf32>
      %490 = vector.multi_reduction <add>, %479, %cst_130 [1] : vector<32x64xf32> to vector<32xf32>
      %491 = vector.shape_cast %490 : vector<32xf32> to vector<32x1xf32>
      %cst_131 = arith.constant 6.400000e+01 : f32
      %492 = vector.broadcast %cst_131 : f32 to vector<32x1xf32>
      %493 = arith.divf %491, %492 : vector<32x1xf32>
      %494 = arith.mulf %479, %479 : vector<32x64xf32>
      %cst_132 = arith.constant dense<0.000000e+00> : vector<32xf32>
      %495 = vector.multi_reduction <add>, %494, %cst_132 [1] : vector<32x64xf32> to vector<32xf32>
      %496 = vector.shape_cast %495 : vector<32xf32> to vector<32x1xf32>
      %cst_133 = arith.constant 6.400000e+01 : f32
      %497 = vector.broadcast %cst_133 : f32 to vector<32x1xf32>
      %498 = arith.divf %496, %497 : vector<32x1xf32>
      %499 = arith.mulf %493, %493 : vector<32x1xf32>
      %500 = arith.subf %498, %499 : vector<32x1xf32>
      %cst_134 = arith.constant 0.000000e+00 : f32
      %501 = vector.broadcast %cst_134 : f32 to vector<32x1xf32>
      %502 = arith.maximumf %500, %501 : vector<32x1xf32>
      %503 = vector.broadcast %493 : vector<32x1xf32> to vector<32x64xf32>
      %504 = arith.subf %479, %503 : vector<32x64xf32>
      %cst_135 = arith.constant 9.99999974E-6 : f32
      %505 = vector.broadcast %cst_135 : f32 to vector<32x1xf32>
      %506 = arith.addf %502, %505 : vector<32x1xf32>
      %507 = math.rsqrt %506 : vector<32x1xf32>
      %508 = vector.broadcast %507 : vector<32x1xf32> to vector<32x64xf32>
      %509 = arith.mulf %504, %508 : vector<32x64xf32>
      %510 = vector.broadcast %480 : vector<1x64xf32> to vector<32x64xf32>
      %511 = arith.mulf %509, %510 : vector<32x64xf32>
      %512 = vector.broadcast %481 : vector<1x64xf32> to vector<32x64xf32>
      %513 = arith.addf %511, %512 : vector<32x64xf32>
      %514 = arith.truncf %513 : vector<32x64xf32> to vector<32x64xbf16>
      %cst_136 = arith.constant dense<0.000000e+00> : vector<32x256xf32>
      %515 = tpu.matmul %514, %484, %cst_136 {dimension_numbers = #tpu.dot_dimension_numbers<[1], [0], [0], [1], [0, 0, 1, 1], [], []>} : vector<32x64xbf16>, vector<64x256xbf16>, vector<32x256xf32> -> vector<32x256xf32>
      %516 = vector.broadcast %485 : vector<1x256xf32> to vector<32x256xf32>
      %517 = arith.addf %515, %516 : vector<32x256xf32>
      %518 = arith.negf %517 : vector<32x256xf32>
      %519 = math.exp %518 : vector<32x256xf32>
      %cst_137 = arith.constant 1.000000e+00 : f32
      %520 = vector.broadcast %cst_137 : f32 to vector<32x256xf32>
      %521 = arith.addf %520, %519 : vector<32x256xf32>
      %522 = arith.divf %520, %521 : vector<32x256xf32>
      %523 = arith.mulf %517, %522 : vector<32x256xf32>
      %524 = arith.truncf %523 : vector<32x256xf32> to vector<32x256xbf16>
      %cst_138 = arith.constant dense<0.000000e+00> : vector<32x64xf32>
      %525 = tpu.matmul %524, %488, %cst_138 {dimension_numbers = #tpu.dot_dimension_numbers<[1], [0], [0], [1], [0, 0, 1, 1], [], []>} : vector<32x256xbf16>, vector<256x64xbf16>, vector<32x64xf32> -> vector<32x64xf32>
      %526 = vector.broadcast %489 : vector<1x64xf32> to vector<32x64xf32>
      %527 = arith.addf %525, %526 : vector<32x64xf32>
      %cst_139 = arith.constant 5.000000e-01 : f32
      %528 = vector.broadcast %cst_139 : f32 to vector<32x64xf32>
      %529 = arith.mulf %528, %527 : vector<32x64xf32>
      %530 = arith.addf %529, %479 : vector<32x64xf32>
      %531 = vector.extract_strided_slice %193 {offsets = [19, 0], sizes = [1, 64], strides = [1, 1]} : vector<24x64xf32> to vector<1x64xf32>
      %532 = vector.extract_strided_slice %193 {offsets = [20, 0], sizes = [1, 64], strides = [1, 1]} : vector<24x64xf32> to vector<1x64xf32>
      %cst_140 = arith.constant dense<0.000000e+00> : vector<32xf32>
      %533 = vector.multi_reduction <add>, %530, %cst_140 [1] : vector<32x64xf32> to vector<32xf32>
      %534 = vector.shape_cast %533 : vector<32xf32> to vector<32x1xf32>
      %cst_141 = arith.constant 6.400000e+01 : f32
      %535 = vector.broadcast %cst_141 : f32 to vector<32x1xf32>
      %536 = arith.divf %534, %535 : vector<32x1xf32>
      %537 = arith.mulf %530, %530 : vector<32x64xf32>
      %cst_142 = arith.constant dense<0.000000e+00> : vector<32xf32>
      %538 = vector.multi_reduction <add>, %537, %cst_142 [1] : vector<32x64xf32> to vector<32xf32>
      %539 = vector.shape_cast %538 : vector<32xf32> to vector<32x1xf32>
      %cst_143 = arith.constant 6.400000e+01 : f32
      %540 = vector.broadcast %cst_143 : f32 to vector<32x1xf32>
      %541 = arith.divf %539, %540 : vector<32x1xf32>
      %542 = arith.mulf %536, %536 : vector<32x1xf32>
      %543 = arith.subf %541, %542 : vector<32x1xf32>
      %cst_144 = arith.constant 0.000000e+00 : f32
      %544 = vector.broadcast %cst_144 : f32 to vector<32x1xf32>
      %545 = arith.maximumf %543, %544 : vector<32x1xf32>
      %546 = vector.broadcast %536 : vector<32x1xf32> to vector<32x64xf32>
      %547 = arith.subf %530, %546 : vector<32x64xf32>
      %cst_145 = arith.constant 9.99999974E-6 : f32
      %548 = vector.broadcast %cst_145 : f32 to vector<32x1xf32>
      %549 = arith.addf %545, %548 : vector<32x1xf32>
      %550 = math.rsqrt %549 : vector<32x1xf32>
      %551 = vector.broadcast %550 : vector<32x1xf32> to vector<32x64xf32>
      %552 = arith.mulf %547, %551 : vector<32x64xf32>
      %553 = vector.broadcast %531 : vector<1x64xf32> to vector<32x64xf32>
      %554 = arith.mulf %552, %553 : vector<32x64xf32>
      %555 = vector.broadcast %532 : vector<1x64xf32> to vector<32x64xf32>
      %556 = arith.addf %554, %555 : vector<32x64xf32>
      scf.yield %556 : vector<32x64xf32>
    }
    %c2_i32_52 = arith.constant 2 : i32
    %c0_53 = arith.constant 0 : index
    %c0_54 = arith.constant 0 : index
    %c0_55 = arith.constant 0 : index
    %188 = vector.load %arg18[%c0_53, %c0_54, %c0_55] : memref<1x32x64xf32, #tpu.memory_space<vmem>>, vector<1x32x64xf32>
    %189 = vector.shape_cast %188 : vector<1x32x64xf32> to vector<32x64xf32>
    %190 = vector.shape_cast %187 : vector<32x64xf32> to vector<1x32x64xf32>
    tpu.vector_store %arg18[%c0_53, %c0_54, %c0_55], %190 {strides = array<i32>} : memref<1x32x64xf32, #tpu.memory_space<vmem>>, vector<1x32x64xf32>,
    return
  }
  func.func @transform_0(%arg0: i32, %arg1: memref<2xi32, #tpu.memory_space<smem>>) -> (i32, i32, i32) {
    %c0_i32 = arith.constant 0 : i32
    %c0_i32_0 = arith.constant 0 : i32
    %c0_i32_1 = arith.constant 0 : i32
    return %arg0, %c0_i32, %c0_i32_0 : i32, i32, i32
  }
  func.func @transform_1(%arg0: i32, %arg1: memref<2xi32, #tpu.memory_space<smem>>) -> (i32, i32) {
    %c0_i32 = arith.constant 0 : i32
    %c0_i32_0 = arith.constant 0 : i32
    %c0_i32_1 = arith.constant 0 : i32
    return %c0_i32, %c0_i32_0 : i32, i32
  }
  func.func @transform_2(%arg0: i32, %arg1: memref<2xi32, #tpu.memory_space<smem>>) -> (i32, i32) {
    %c0_i32 = arith.constant 0 : i32
    %c0_i32_0 = arith.constant 0 : i32
    %c0_i32_1 = arith.constant 0 : i32
    return %c0_i32, %c0_i32_0 : i32, i32
  }
  func.func @transform_3(%arg0: i32, %arg1: memref<2xi32, #tpu.memory_space<smem>>) -> (i32, i32, i32) {
    %c0_i32 = arith.constant 0 : i32
    %c0_i32_0 = arith.constant 0 : i32
    %c0_i32_1 = arith.constant 0 : i32
    %c0_i32_2 = arith.constant 0 : i32
    return %c0_i32, %c0_i32_0, %c0_i32_1 : i32, i32, i32
  }
  func.func @transform_4(%arg0: i32, %arg1: memref<2xi32, #tpu.memory_space<smem>>) -> (i32, i32, i32) {
    %c0_i32 = arith.constant 0 : i32
    %c0_i32_0 = arith.constant 0 : i32
    %c0_i32_1 = arith.constant 0 : i32
    %c0_i32_2 = arith.constant 0 : i32
    return %c0_i32, %c0_i32_0, %c0_i32_1 : i32, i32, i32
  }
  func.func @transform_5(%arg0: i32, %arg1: memref<2xi32, #tpu.memory_space<smem>>) -> (i32, i32, i32) {
    %c0_i32 = arith.constant 0 : i32
    %c0_i32_0 = arith.constant 0 : i32
    %c0_i32_1 = arith.constant 0 : i32
    %c0_i32_2 = arith.constant 0 : i32
    return %c0_i32, %c0_i32_0, %c0_i32_1 : i32, i32, i32
  }
  func.func @transform_6(%arg0: i32, %arg1: memref<2xi32, #tpu.memory_space<smem>>) -> (i32, i32, i32) {
    %c0_i32 = arith.constant 0 : i32
    %c0_i32_0 = arith.constant 0 : i32
    %c0_i32_1 = arith.constant 0 : i32
    %c0_i32_2 = arith.constant 0 : i32
    return %c0_i32, %c0_i32_0, %c0_i32_1 : i32, i32, i32
  }
  func.func @transform_7(%arg0: i32, %arg1: memref<2xi32, #tpu.memory_space<smem>>) -> (i32, i32, i32) {
    %c0_i32 = arith.constant 0 : i32
    %c0_i32_0 = arith.constant 0 : i32
    %c0_i32_1 = arith.constant 0 : i32
    %c0_i32_2 = arith.constant 0 : i32
    return %c0_i32, %c0_i32_0, %c0_i32_1 : i32, i32, i32
  }
  func.func @transform_8(%arg0: i32, %arg1: memref<2xi32, #tpu.memory_space<smem>>) -> (i32, i32, i32) {
    %c0_i32 = arith.constant 0 : i32
    %c0_i32_0 = arith.constant 0 : i32
    %c0_i32_1 = arith.constant 0 : i32
    %c0_i32_2 = arith.constant 0 : i32
    return %c0_i32, %c0_i32_0, %c0_i32_1 : i32, i32, i32
  }
  func.func @transform_9(%arg0: i32, %arg1: memref<2xi32, #tpu.memory_space<smem>>) -> (i32, i32, i32) {
    %c0_i32 = arith.constant 0 : i32
    %c0_i32_0 = arith.constant 0 : i32
    %c0_i32_1 = arith.constant 0 : i32
    %c0_i32_2 = arith.constant 0 : i32
    return %c0_i32, %c0_i32_0, %c0_i32_1 : i32, i32, i32
  }
  func.func @transform_10(%arg0: i32, %arg1: memref<2xi32, #tpu.memory_space<smem>>) -> (i32, i32, i32) {
    %c0_i32 = arith.constant 0 : i32
    %c0_i32_0 = arith.constant 0 : i32
    %c0_i32_1 = arith.constant 0 : i32
    %c0_i32_2 = arith.constant 0 : i32
    return %c0_i32, %c0_i32_0, %c0_i32_1 : i32, i32, i32
  }
  func.func @transform_11(%arg0: i32, %arg1: memref<2xi32, #tpu.memory_space<smem>>) -> (i32, i32, i32) {
    %c0_i32 = arith.constant 0 : i32
    %c0_i32_0 = arith.constant 0 : i32
    %c0_i32_1 = arith.constant 0 : i32
    %c0_i32_2 = arith.constant 0 : i32
    return %c0_i32, %c0_i32_0, %c0_i32_1 : i32, i32, i32
  }
  func.func @transform_12(%arg0: i32, %arg1: memref<2xi32, #tpu.memory_space<smem>>) -> (i32, i32, i32) {
    %c0_i32 = arith.constant 0 : i32
    %c0_i32_0 = arith.constant 0 : i32
    %c0_i32_1 = arith.constant 0 : i32
    %c0_i32_2 = arith.constant 0 : i32
    return %c0_i32, %c0_i32_0, %c0_i32_1 : i32, i32, i32
  }
  func.func @transform_13(%arg0: i32, %arg1: memref<2xi32, #tpu.memory_space<smem>>) -> (i32, i32, i32) {
    %c0_i32 = arith.constant 0 : i32
    %c0_i32_0 = arith.constant 0 : i32
    %c0_i32_1 = arith.constant 0 : i32
    %c0_i32_2 = arith.constant 0 : i32
    return %c0_i32, %c0_i32_0, %c0_i32_1 : i32, i32, i32
  }
  func.func @transform_14(%arg0: i32, %arg1: memref<2xi32, #tpu.memory_space<smem>>) -> (i32, i32, i32) {
    %c0_i32 = arith.constant 0 : i32
    %c0_i32_0 = arith.constant 0 : i32
    %c0_i32_1 = arith.constant 0 : i32
    %c0_i32_2 = arith.constant 0 : i32
    return %c0_i32, %c0_i32_0, %c0_i32_1 : i32, i32, i32
  }
  func.func @transform_15(%arg0: i32, %arg1: memref<2xi32, #tpu.memory_space<smem>>) -> (i32, i32, i32) {
    %c0_i32 = arith.constant 0 : i32
    %c0_i32_0 = arith.constant 0 : i32
    %c0_i32_1 = arith.constant 0 : i32
    %c0_i32_2 = arith.constant 0 : i32
    return %c0_i32, %c0_i32_0, %c0_i32_1 : i32, i32, i32
  }
  func.func @transform_16(%arg0: i32, %arg1: memref<2xi32, #tpu.memory_space<smem>>) -> (i32, i32, i32) {
    %c0_i32 = arith.constant 0 : i32
    %c0_i32_0 = arith.constant 0 : i32
    %c0_i32_1 = arith.constant 0 : i32
    return %arg0, %c0_i32, %c0_i32_0 : i32, i32, i32
  }
}

</mosaic_0001>

<llo_original>
// kernel: tpu_custom_call.1
$region0: #{tpu_custom_call.1}
  #allocation0 [shape = 'u32[]', space=smem, size = 0x4, offset = 0x4, fixed_abs, tag = 'smem constant byte address 0x4 - core index']
  #allocation1 [shape = 'u32[144,128]{1,0:T(1,128)}', space=vmem, size = 0x12000, scoped, tag = 'internal scratch']
  #allocation2 [shape = 's32[1]{0}', space=sflag, size = 0x4, scoped, tag = 'scoped memory for tpu_custom_call.1']
  #allocation3 [shape = 'u8[512]{0}', space=smem, size = 0x200, scoped, tag = 'prefetched SMEM operand 0']
  %s0 = inlined_call_operand.vmem [shape: s32[2], index: 0, kind: input, shape index: {}]
  %s1 = inlined_call_operand.vmem [shape: f32[2,32,16], index: 1, kind: input, shape index: {}]
  %s2 = inlined_call_operand.vmem [shape: bf16[16,64], index: 2, kind: input, shape index: {}]
  %s3 = inlined_call_operand.vmem [shape: f32[1,64], index: 3, kind: input, shape index: {}]
  %s4 = inlined_call_operand.vmem [shape: bf16[2,64,256], index: 4, kind: input, shape index: {}]
  %s5 = inlined_call_operand.vmem [shape: bf16[2,256,64], index: 5, kind: input, shape index: {}]
  %s6 = inlined_call_operand.vmem [shape: bf16[2,64,64], index: 6, kind: input, shape index: {}]
  %s7 = inlined_call_operand.vmem [shape: bf16[2,64,64], index: 7, kind: input, shape index: {}]
  %s8 = inlined_call_operand.vmem [shape: bf16[2,256,64], index: 8, kind: input, shape index: {}]
  %s9 = inlined_call_operand.vmem [shape: bf16[2,64,64], index: 9, kind: input, shape index: {}]
  %s10 = inlined_call_operand.vmem [shape: bf16[2,64,64], index: 10, kind: input, shape index: {}]
  %s11 = inlined_call_operand.vmem [shape: bf16[2,64,64], index: 11, kind: input, shape index: {}]
  %s12 = inlined_call_operand.vmem [shape: f32[2,8,64], index: 12, kind: input, shape index: {}]
  %s13 = inlined_call_operand.vmem [shape: bf16[2,64,256], index: 13, kind: input, shape index: {}]
  %s14 = inlined_call_operand.vmem [shape: bf16[2,256,64], index: 14, kind: input, shape index: {}]
  %s15 = inlined_call_operand.vmem [shape: f32[2,24,64], index: 15, kind: input, shape index: {}]
  %s16 = inlined_call_operand.vmem [shape: f32[2,8,256], index: 16, kind: input, shape index: {}]
  %s17 = inlined_call_operand.hbm [shape: f32[2,32,64], index: 17, kind: output, shape index: {}]
  %s18 = sld [smem:[#allocation0]]
  $region104: #{tpu_custom_call.1} parent=0
    _
  %s20 = ssub.s32 1, %s18
  %s21 = scalar_select 0, %s20, %s18
  %s22 = sshll.u32 %s0, 4
  %s23 = int_to_ptr.vmem [resolvable:$true] %s22
  %25 = dma.vmem_to_smem %s23, 16, [#allocation3], [#allocation2]
  %26 = dma.done [#allocation2], 16
  %27 = sfence
  $region1: #{tpu_custom_call.1} parent=0
    #allocation4 [shape = 'u8[32768]{0}', space=vmem, size = 0x8000, scoped, tag = 'output window, operand 0']
    #allocation5 [shape = 's32[2]{0}', space=sflag, size = 0x8, scoped, tag = 'scoped memory for tpu_custom_call.1']
    %28 = vsyncpa [#allocation5], 0
    %s29 = scalar_lea.sflag [#allocation5], 1
    %30 = vsyncpa %s29, 0
    loop: start=0, step=1, limit=4
    $region2: #{tpu_custom_call.1} parent=1 // loop_pre_header
      _
    $region3: #{tpu_custom_call.1} parent=1 // loop_header
      %s32 = sphi 0, %s36
      %p33 = scmp.ge.s32.totalorder %s32, 4
      %s42 = sphi 0, %s44
      %s45 = sphi 0, %s42
      %s46 = sphi 0, %s45
      %s62 = sphi 0, %s46
      %s66 = sphi 0, %s66
      %s68 = sphi 0, %s66
      %s69 = sphi 0, %s68
      %s83 = sphi 0, %s69
      %s87 = sphi 0, %s87
      %s89 = sphi 0, %s87
      %s90 = sphi 0, %s89
      %s104 = sphi 0, %s90
      %s108 = sphi 0, %s108
      %s110 = sphi 0, %s108
      %s111 = sphi 0, %s110
      %s125 = sphi 0, %s111
      %s129 = sphi 0, %s129
      %s131 = sphi 0, %s129
      %s132 = sphi 0, %s131
      %s146 = sphi 0, %s132
      %s150 = sphi 0, %s150
      %s152 = sphi 0, %s150
      %s153 = sphi 0, %s152
      %s167 = sphi 0, %s153
      %s171 = sphi 0, %s171
      %s173 = sphi 0, %s171
      %s174 = sphi 0, %s173
      %s188 = sphi 0, %s174
      %s192 = sphi 0, %s192
      %s194 = sphi 0, %s192
      %s195 = sphi 0, %s194
      %s209 = sphi 0, %s195
      %s213 = sphi 0, %s213
      %s215 = sphi 0, %s213
      %s216 = sphi 0, %s215
      %s230 = sphi 0, %s216
      %s234 = sphi 0, %s234
      %s236 = sphi 0, %s234
      %s237 = sphi 0, %s236
      %s251 = sphi 0, %s237
      %s255 = sphi 0, %s255
      %s257 = sphi 0, %s255
      %s258 = sphi 0, %s257
      %s272 = sphi 0, %s258
      %s276 = sphi 0, %s276
      %s278 = sphi 0, %s276
      %s279 = sphi 0, %s278
      %s293 = sphi 0, %s279
      %s297 = sphi 0, %s297
      %s299 = sphi 0, %s297
      %s300 = sphi 0, %s299
      %s314 = sphi 0, %s300
      %s318 = sphi 0, %s318
      %s320 = sphi 0, %s318
      %s321 = sphi 0, %s320
      %s335 = sphi 0, %s321
      %s339 = sphi 0, %s339
      %s341 = sphi 0, %s339
      %s342 = sphi 0, %s341
      %s356 = sphi 0, %s342
      %s360 = sphi 0, %s360
      %s362 = sphi 0, %s360
      %s363 = sphi 0, %s362
      %s377 = sphi 0, %s363
      %s383 = sphi 0, %s385
      %s386 = sphi 0, %s383
      %s387 = sphi 0, %s386
      %s403 = sphi 0, %s387
    $region4: #{tpu_custom_call.1} parent=1 // loop_header_branch
      %35 = sbr.rel (%p33) target = $region8
    $region5: #{tpu_custom_call.1} parent=1 // loop_body
      %s37 = ssub.s32 %s32, 1
      %s38 = ssub.s32 %s32, 2
      %s39 = sadd.s32 %s32, 1
      %s40 = ssub.s32 %s32, %s39
      %p41 = scmp.eq.s32.totalorder %s40, 0
      %s43 = sadd.s32 %s42, 1
      %s44 = scalar_select %p41, %s42, %s43
      %p47 = pneg %p41
      %p48 = scmp.eq.s32.totalorder %s32, 1
      %p49 = por %p47, %p48
      %p50 = scmp.ne.s32.totalorder %s42, %s45
      %p51 = scmp.eq.s32.totalorder %s32, 0
      %p52 = por %p50, %p51
      %p53 = scmp.ne.s32.totalorder %s42, %s45
      %p54 = scmp.eq.s32.totalorder %s37, 1
      %p55 = por %p53, %p54
      %p56 = scmp.ne.s32.totalorder %s45, %s46
      %p57 = scmp.eq.s32.totalorder %s37, 0
      %p58 = por %p56, %p57
      %p59 = scmp.ne.s32.totalorder %s45, %s46
      %p60 = scmp.eq.s32.totalorder %s38, 1
      %p61 = por %p59, %p60
      %p63 = scmp.ne.s32.totalorder %s46, %s62
      %p64 = scmp.eq.s32.totalorder %s38, 0
      %p65 = por %p63, %p64
      %s67 = sadd.s32 %s66, 1
      %p70 = scmp.eq.s32.totalorder %s32, 1
      %p71 = scmp.ne.s32.totalorder %s66, %s68
      %p72 = scmp.eq.s32.totalorder %s32, 0
      %p73 = por %p71, %p72
      %p74 = scmp.ne.s32.totalorder %s66, %s68
      %p75 = scmp.eq.s32.totalorder %s37, 1
      %p76 = por %p74, %p75
      %p77 = scmp.ne.s32.totalorder %s68, %s69
      %p78 = scmp.eq.s32.totalorder %s37, 0
      %p79 = por %p77, %p78
      %p80 = scmp.ne.s32.totalorder %s68, %s69
      %p81 = scmp.eq.s32.totalorder %s38, 1
      %p82 = por %p80, %p81
      %p84 = scmp.ne.s32.totalorder %s69, %s83
      %p85 = scmp.eq.s32.totalorder %s38, 0
      %p86 = por %p84, %p85
      %s88 = sadd.s32 %s87, 1
      %p91 = scmp.eq.s32.totalorder %s32, 1
      %p92 = scmp.ne.s32.totalorder %s87, %s89
      %p93 = scmp.eq.s32.totalorder %s32, 0
      %p94 = por %p92, %p93
      %p95 = scmp.ne.s32.totalorder %s87, %s89
      %p96 = scmp.eq.s32.totalorder %s37, 1
      %p97 = por %p95, %p96
      %p98 = scmp.ne.s32.totalorder %s89, %s90
      %p99 = scmp.eq.s32.totalorder %s37, 0
      %p100 = por %p98, %p99
      %p101 = scmp.ne.s32.totalorder %s89, %s90
      %p102 = scmp.eq.s32.totalorder %s38, 1
      %p103 = por %p101, %p102
      %p105 = scmp.ne.s32.totalorder %s90, %s104
      %p106 = scmp.eq.s32.totalorder %s38, 0
      %p107 = por %p105, %p106
      %s109 = sadd.s32 %s108, 1
      %p112 = scmp.eq.s32.totalorder %s32, 1
      %p113 = scmp.ne.s32.totalorder %s108, %s110
      %p114 = scmp.eq.s32.totalorder %s32, 0
      %p115 = por %p113, %p114
      %p116 = scmp.ne.s32.totalorder %s108, %s110
      %p117 = scmp.eq.s32.totalorder %s37, 1
      %p118 = por %p116, %p117
      %p119 = scmp.ne.s32.totalorder %s110, %s111
      %p120 = scmp.eq.s32.totalorder %s37, 0
      %p121 = por %p119, %p120
      %p122 = scmp.ne.s32.totalorder %s110, %s111
      %p123 = scmp.eq.s32.totalorder %s38, 1
      %p124 = por %p122, %p123
      %p126 = scmp.ne.s32.totalorder %s111, %s125
      %p127 = scmp.eq.s32.totalorder %s38, 0
      %p128 = por %p126, %p127
      %s130 = sadd.s32 %s129, 1
      %p133 = scmp.eq.s32.totalorder %s32, 1
      %p134 = scmp.ne.s32.totalorder %s129, %s131
      %p135 = scmp.eq.s32.totalorder %s32, 0
      %p136 = por %p134, %p135
      %p137 = scmp.ne.s32.totalorder %s129, %s131
      %p138 = scmp.eq.s32.totalorder %s37, 1
      %p139 = por %p137, %p138
      %p140 = scmp.ne.s32.totalorder %s131, %s132
      %p141 = scmp.eq.s32.totalorder %s37, 0
      %p142 = por %p140, %p141
      %p143 = scmp.ne.s32.totalorder %s131, %s132
      %p144 = scmp.eq.s32.totalorder %s38, 1
      %p145 = por %p143, %p144
      %p147 = scmp.ne.s32.totalorder %s132, %s146
      %p148 = scmp.eq.s32.totalorder %s38, 0
      %p149 = por %p147, %p148
      %s151 = sadd.s32 %s150, 1
      %p154 = scmp.eq.s32.totalorder %s32, 1
      %p155 = scmp.ne.s32.totalorder %s150, %s152
      %p156 = scmp.eq.s32.totalorder %s32, 0
      %p157 = por %p155, %p156
      %p158 = scmp.ne.s32.totalorder %s150, %s152
      %p159 = scmp.eq.s32.totalorder %s37, 1
      %p160 = por %p158, %p159
      %p161 = scmp.ne.s32.totalorder %s152, %s153
      %p162 = scmp.eq.s32.totalorder %s37, 0
      %p163 = por %p161, %p162
      %p164 = scmp.ne.s32.totalorder %s152, %s153
      %p165 = scmp.eq.s32.totalorder %s38, 1
      %p166 = por %p164, %p165
      %p168 = scmp.ne.s32.totalorder %s153, %s167
      %p169 = scmp.eq.s32.totalorder %s38, 0
      %p170 = por %p168, %p169
      %s172 = sadd.s32 %s171, 1
      %p175 = scmp.eq.s32.totalorder %s32, 1
      %p176 = scmp.ne.s32.totalorder %s171, %s173
      %p177 = scmp.eq.s32.totalorder %s32, 0
      %p178 = por %p176, %p177
      %p179 = scmp.ne.s32.totalorder %s171, %s173
      %p180 = scmp.eq.s32.totalorder %s37, 1
      %p181 = por %p179, %p180
      %p182 = scmp.ne.s32.totalorder %s173, %s174
      %p183 = scmp.eq.s32.totalorder %s37, 0
      %p184 = por %p182, %p183
      %p185 = scmp.ne.s32.totalorder %s173, %s174
      %p186 = scmp.eq.s32.totalorder %s38, 1
      %p187 = por %p185, %p186
      %p189 = scmp.ne.s32.totalorder %s174, %s188
      %p190 = scmp.eq.s32.totalorder %s38, 0
      %p191 = por %p189, %p190
      %s193 = sadd.s32 %s192, 1
      %p196 = scmp.eq.s32.totalorder %s32, 1
      %p197 = scmp.ne.s32.totalorder %s192, %s194
      %p198 = scmp.eq.s32.totalorder %s32, 0
      %p199 = por %p197, %p198
      %p200 = scmp.ne.s32.totalorder %s192, %s194
      %p201 = scmp.eq.s32.totalorder %s37, 1
      %p202 = por %p200, %p201
      %p203 = scmp.ne.s32.totalorder %s194, %s195
      %p204 = scmp.eq.s32.totalorder %s37, 0
      %p205 = por %p203, %p204
      %p206 = scmp.ne.s32.totalorder %s194, %s195
      %p207 = scmp.eq.s32.totalorder %s38, 1
      %p208 = por %p206, %p207
      %p210 = scmp.ne.s32.totalorder %s195, %s209
      %p211 = scmp.eq.s32.totalorder %s38, 0
      %p212 = por %p210, %p211
      %s214 = sadd.s32 %s213, 1
      %p217 = scmp.eq.s32.totalorder %s32, 1
      %p218 = scmp.ne.s32.totalorder %s213, %s215
      %p219 = scmp.eq.s32.totalorder %s32, 0
      %p220 = por %p218, %p219
      %p221 = scmp.ne.s32.totalorder %s213, %s215
      %p222 = scmp.eq.s32.totalorder %s37, 1
      %p223 = por %p221, %p222
      %p224 = scmp.ne.s32.totalorder %s215, %s216
      %p225 = scmp.eq.s32.totalorder %s37, 0
      %p226 = por %p224, %p225
      %p227 = scmp.ne.s32.totalorder %s215, %s216
      %p228 = scmp.eq.s32.totalorder %s38, 1
      %p229 = por %p227, %p228
      %p231 = scmp.ne.s32.totalorder %s216, %s230
      %p232 = scmp.eq.s32.totalorder %s38, 0
      %p233 = por %p231, %p232
      %s235 = sadd.s32 %s234, 1
      %p238 = scmp.eq.s32.totalorder %s32, 1
      %p239 = scmp.ne.s32.totalorder %s234, %s236
      %p240 = scmp.eq.s32.totalorder %s32, 0
      %p241 = por %p239, %p240
      %p242 = scmp.ne.s32.totalorder %s234, %s236
      %p243 = scmp.eq.s32.totalorder %s37, 1
      %p244 = por %p242, %p243
      %p245 = scmp.ne.s32.totalorder %s236, %s237
      %p246 = scmp.eq.s32.totalorder %s37, 0
      %p247 = por %p245, %p246
      %p248 = scmp.ne.s32.totalorder %s236, %s237
      %p249 = scmp.eq.s32.totalorder %s38, 1
      %p250 = por %p248, %p249
      %p252 = scmp.ne.s32.totalorder %s237, %s251
      %p253 = scmp.eq.s32.totalorder %s38, 0
      %p254 = por %p252, %p253
      %s256 = sadd.s32 %s255, 1
      %p259 = scmp.eq.s32.totalorder %s32, 1
      %p260 = scmp.ne.s32.totalorder %s255, %s257
      %p261 = scmp.eq.s32.totalorder %s32, 0
      %p262 = por %p260, %p261
      %p263 = scmp.ne.s32.totalorder %s255, %s257
      %p264 = scmp.eq.s32.totalorder %s37, 1
      %p265 = por %p263, %p264
      %p266 = scmp.ne.s32.totalorder %s257, %s258
      %p267 = scmp.eq.s32.totalorder %s37, 0
      %p268 = por %p266, %p267
      %p269 = scmp.ne.s32.totalorder %s257, %s258
      %p270 = scmp.eq.s32.totalorder %s38, 1
      %p271 = por %p269, %p270
      %p273 = scmp.ne.s32.totalorder %s258, %s272
      %p274 = scmp.eq.s32.totalorder %s38, 0
      %p275 = por %p273, %p274
      %s277 = sadd.s32 %s276, 1
      %p280 = scmp.eq.s32.totalorder %s32, 1
      %p281 = scmp.ne.s32.totalorder %s276, %s278
      %p282 = scmp.eq.s32.totalorder %s32, 0
      %p283 = por %p281, %p282
      %p284 = scmp.ne.s32.totalorder %s276, %s278
      %p285 = scmp.eq.s32.totalorder %s37, 1
      %p286 = por %p284, %p285
      %p287 = scmp.ne.s32.totalorder %s278, %s279
      %p288 = scmp.eq.s32.totalorder %s37, 0
      %p289 = por %p287, %p288
      %p290 = scmp.ne.s32.totalorder %s278, %s279
      %p291 = scmp.eq.s32.totalorder %s38, 1
      %p292 = por %p290, %p291
      %p294 = scmp.ne.s32.totalorder %s279, %s293
      %p295 = scmp.eq.s32.totalorder %s38, 0
      %p296 = por %p294, %p295
      %s298 = sadd.s32 %s297, 1
      %p301 = scmp.eq.s32.totalorder %s32, 1
      %p302 = scmp.ne.s32.totalorder %s297, %s299
      %p303 = scmp.eq.s32.totalorder %s32, 0
      %p304 = por %p302, %p303
      %p305 = scmp.ne.s32.totalorder %s297, %s299
      %p306 = scmp.eq.s32.totalorder %s37, 1
      %p307 = por %p305, %p306
      %p308 = scmp.ne.s32.totalorder %s299, %s300
      %p309 = scmp.eq.s32.totalorder %s37, 0
      %p310 = por %p308, %p309
      %p311 = scmp.ne.s32.totalorder %s299, %s300
      %p312 = scmp.eq.s32.totalorder %s38, 1
      %p313 = por %p311, %p312
      %p315 = scmp.ne.s32.totalorder %s300, %s314
      %p316 = scmp.eq.s32.totalorder %s38, 0
      %p317 = por %p315, %p316
      %s319 = sadd.s32 %s318, 1
      %p322 = scmp.eq.s32.totalorder %s32, 1
      %p323 = scmp.ne.s32.totalorder %s318, %s320
      %p324 = scmp.eq.s32.totalorder %s32, 0
      %p325 = por %p323, %p324
      %p326 = scmp.ne.s32.totalorder %s318, %s320
      %p327 = scmp.eq.s32.totalorder %s37, 1
      %p328 = por %p326, %p327
      %p329 = scmp.ne.s32.totalorder %s320, %s321
      %p330 = scmp.eq.s32.totalorder %s37, 0
      %p331 = por %p329, %p330
      %p332 = scmp.ne.s32.totalorder %s320, %s321
      %p333 = scmp.eq.s32.totalorder %s38, 1
      %p334 = por %p332, %p333
      %p336 = scmp.ne.s32.totalorder %s321, %s335
      %p337 = scmp.eq.s32.totalorder %s38, 0
      %p338 = por %p336, %p337
      %s340 = sadd.s32 %s339, 1
      %p343 = scmp.eq.s32.totalorder %s32, 1
      %p344 = scmp.ne.s32.totalorder %s339, %s341
      %p345 = scmp.eq.s32.totalorder %s32, 0
      %p346 = por %p344, %p345
      %p347 = scmp.ne.s32.totalorder %s339, %s341
      %p348 = scmp.eq.s32.totalorder %s37, 1
      %p349 = por %p347, %p348
      %p350 = scmp.ne.s32.totalorder %s341, %s342
      %p351 = scmp.eq.s32.totalorder %s37, 0
      %p352 = por %p350, %p351
      %p353 = scmp.ne.s32.totalorder %s341, %s342
      %p354 = scmp.eq.s32.totalorder %s38, 1
      %p355 = por %p353, %p354
      %p357 = scmp.ne.s32.totalorder %s342, %s356
      %p358 = scmp.eq.s32.totalorder %s38, 0
      %p359 = por %p357, %p358
      %s361 = sadd.s32 %s360, 1
      %p364 = scmp.eq.s32.totalorder %s32, 1
      %p365 = scmp.ne.s32.totalorder %s360, %s362
      %p366 = scmp.eq.s32.totalorder %s32, 0
      %p367 = por %p365, %p366
      %p368 = scmp.ne.s32.totalorder %s360, %s362
      %p369 = scmp.eq.s32.totalorder %s37, 1
      %p370 = por %p368, %p369
      %p371 = scmp.ne.s32.totalorder %s362, %s363
      %p372 = scmp.eq.s32.totalorder %s37, 0
      %p373 = por %p371, %p372
      %p374 = scmp.ne.s32.totalorder %s362, %s363
      %p375 = scmp.eq.s32.totalorder %s38, 1
      %p376 = por %p374, %p375
      %p378 = scmp.ne.s32.totalorder %s363, %s377
      %p379 = scmp.eq.s32.totalorder %s38, 0
      %p380 = por %p378, %p379
      %s381 = ssub.s32 %s32, %s39
      %p382 = scmp.eq.s32.totalorder %s381, 0
      %s384 = sadd.s32 %s383, 1
      %s385 = scalar_select %p382, %s383, %s384
      %p388 = pneg %p382
      %p389 = scmp.eq.s32.totalorder %s32, 1
      %p390 = por %p388, %p389
      %p391 = scmp.ne.s32.totalorder %s383, %s386
      %p392 = scmp.eq.s32.totalorder %s32, 0
      %p393 = por %p391, %p392
      %p394 = scmp.ne.s32.totalorder %s383, %s386
      %p395 = scmp.eq.s32.totalorder %s37, 1
      %p396 = por %p394, %p395
      %p397 = scmp.ne.s32.totalorder %s386, %s387
      %p398 = scmp.eq.s32.totalorder %s37, 0
      %p399 = por %p397, %p398
      %p400 = scmp.ne.s32.totalorder %s386, %s387
      %p401 = scmp.eq.s32.totalorder %s38, 1
      %p402 = por %p400, %p401
      %p404 = scmp.ne.s32.totalorder %s387, %s403
      %p405 = scmp.eq.s32.totalorder %s38, 0
      %p406 = por %p404, %p405
      %p407 = scmp.le.s32.totalorder 1, %s32
      %p408 = scmp.lt.s32.totalorder %s32, 3
      %p409 = pnand %p407, %p408
      %p410 = pneg %p409
      // Predicated region
      $region9: #{tpu_custom_call.1} parent=5 // pred_check
        _
      $region10: #{tpu_custom_call.1} parent=5 // pred_check_branch
        %412 = sbr.rel (%p409) target = $region12
      $region11: #{tpu_custom_call.1} parent=5 // pred_region
        %s413 = ssub.s32 %s32, 1
        // Predicated region
        $region13: #{tpu_custom_call.1} parent=11 // pred_check
          %p414 = pneg %p79
        $region14: #{tpu_custom_call.1} parent=11 // pred_check_branch
          %416 = sbr.rel (%p414) target = $region16
        $region15: #{tpu_custom_call.1} parent=11 // pred_region
          _
        $region16: #{tpu_custom_call.1} parent=11 // pred_fallthru
          _
        // Predicated region
        $region17: #{tpu_custom_call.1} parent=11 // pred_check
          %p417 = pneg %p100
        $region18: #{tpu_custom_call.1} parent=11 // pred_check_branch
          %419 = sbr.rel (%p417) target = $region20
        $region19: #{tpu_custom_call.1} parent=11 // pred_region
          _
        $region20: #{tpu_custom_call.1} parent=11 // pred_fallthru
          _
        // Predicated region
        $region21: #{tpu_custom_call.1} parent=11 // pred_check
          %p420 = pneg %p121
        $region22: #{tpu_custom_call.1} parent=11 // pred_check_branch
          %422 = sbr.rel (%p420) target = $region24
        $region23: #{tpu_custom_call.1} parent=11 // pred_region
          _
        $region24: #{tpu_custom_call.1} parent=11 // pred_fallthru
          _
        // Predicated region
        $region25: #{tpu_custom_call.1} parent=11 // pred_check
          %p423 = pneg %p142
        $region26: #{tpu_custom_call.1} parent=11 // pred_check_branch
          %425 = sbr.rel (%p423) target = $region28
        $region27: #{tpu_custom_call.1} parent=11 // pred_region
          _
        $region28: #{tpu_custom_call.1} parent=11 // pred_fallthru
          _
        // Predicated region
        $region29: #{tpu_custom_call.1} parent=11 // pred_check
          %p426 = pneg %p163
        $region30: #{tpu_custom_call.1} parent=11 // pred_check_branch
          %428 = sbr.rel (%p426) target = $region32
        $region31: #{tpu_custom_call.1} parent=11 // pred_region
          _
        $region32: #{tpu_custom_call.1} parent=11 // pred_fallthru
          _
        // Predicated region
        $region33: #{tpu_custom_call.1} parent=11 // pred_check
          %p429 = pneg %p184
        $region34: #{tpu_custom_call.1} parent=11 // pred_check_branch
          %431 = sbr.rel (%p429) target = $region36
        $region35: #{tpu_custom_call.1} parent=11 // pred_region
          _
        $region36: #{tpu_custom_call.1} parent=11 // pred_fallthru
          _
        // Predicated region
        $region37: #{tpu_custom_call.1} parent=11 // pred_check
          %p432 = pneg %p205
        $region38: #{tpu_custom_call.1} parent=11 // pred_check_branch
          %434 = sbr.rel (%p432) target = $region40
        $region39: #{tpu_custom_call.1} parent=11 // pred_region
          _
        $region40: #{tpu_custom_call.1} parent=11 // pred_fallthru
          _
        // Predicated region
        $region41: #{tpu_custom_call.1} parent=11 // pred_check
          %p435 = pneg %p226
        $region42: #{tpu_custom_call.1} parent=11 // pred_check_branch
          %437 = sbr.rel (%p435) target = $region44
        $region43: #{tpu_custom_call.1} parent=11 // pred_region
          _
        $region44: #{tpu_custom_call.1} parent=11 // pred_fallthru
          _
        // Predicated region
        $region45: #{tpu_custom_call.1} parent=11 // pred_check
          %p438 = pneg %p247
        $region46: #{tpu_custom_call.1} parent=11 // pred_check_branch
          %440 = sbr.rel (%p438) target = $region48
        $region47: #{tpu_custom_call.1} parent=11 // pred_region
          _
        $region48: #{tpu_custom_call.1} parent=11 // pred_fallthru
          _
        // Predicated region
        $region49: #{tpu_custom_call.1} parent=11 // pred_check
          %p441 = pneg %p268
        $region50: #{tpu_custom_call.1} parent=11 // pred_check_branch
          %443 = sbr.rel (%p441) target = $region52
        $region51: #{tpu_custom_call.1} parent=11 // pred_region
          _
        $region52: #{tpu_custom_call.1} parent=11 // pred_fallthru
          _
        // Predicated region
        $region53: #{tpu_custom_call.1} parent=11 // pred_check
          %p444 = pneg %p289
        $region54: #{tpu_custom_call.1} parent=11 // pred_check_branch
          %446 = sbr.rel (%p444) target = $region56
        $region55: #{tpu_custom_call.1} parent=11 // pred_region
          _
        $region56: #{tpu_custom_call.1} parent=11 // pred_fallthru
          _
        // Predicated region
        $region57: #{tpu_custom_call.1} parent=11 // pred_check
          %p447 = pneg %p310
        $region58: #{tpu_custom_call.1} parent=11 // pred_check_branch
          %449 = sbr.rel (%p447) target = $region60
        $region59: #{tpu_custom_call.1} parent=11 // pred_region
          _
        $region60: #{tpu_custom_call.1} parent=11 // pred_fallthru
          _
        // Predicated region
        $region61: #{tpu_custom_call.1} parent=11 // pred_check
          %p450 = pneg %p331
        $region62: #{tpu_custom_call.1} parent=11 // pred_check_branch
          %452 = sbr.rel (%p450) target = $region64
        $region63: #{tpu_custom_call.1} parent=11 // pred_region
          _
        $region64: #{tpu_custom_call.1} parent=11 // pred_fallthru
          _
        // Predicated region
        $region65: #{tpu_custom_call.1} parent=11 // pred_check
          %p453 = pneg %p352
        $region66: #{tpu_custom_call.1} parent=11 // pred_check_branch
          %455 = sbr.rel (%p453) target = $region68
        $region67: #{tpu_custom_call.1} parent=11 // pred_region
          _
        $region68: #{tpu_custom_call.1} parent=11 // pred_fallthru
          _
        // Predicated region
        $region69: #{tpu_custom_call.1} parent=11 // pred_check
          %p456 = pneg %p373
        $region70: #{tpu_custom_call.1} parent=11 // pred_check_branch
          %458 = sbr.rel (%p456) target = $region72
        $region71: #{tpu_custom_call.1} parent=11 // pred_region
          _
        $region72: #{tpu_custom_call.1} parent=11 // pred_fallthru
          _
      $region12: #{tpu_custom_call.1} parent=5 // pred_fallthru
        _
      %p459 = scmp.lt.s32.totalorder %s32, 2
      // Predicated region
      $region73: #{tpu_custom_call.1} parent=5 // pred_check
        %p460 = pneg %p459
      $region74: #{tpu_custom_call.1} parent=5 // pred_check_branch
        %462 = sbr.rel (%p460) target = $region76
      $region75: #{tpu_custom_call.1} parent=5 // pred_region
        // Predicated region
        $region77: #{tpu_custom_call.1} parent=75 // pred_check
          %p463 = pneg %p52
        $region78: #{tpu_custom_call.1} parent=75 // pred_check_branch
          %465 = sbr.rel (%p463) target = $region80
        $region79: #{tpu_custom_call.1} parent=75 // pred_region
          %p466 = scmp.lt.s32.totalorder %s32, 1
          %s467 = scalar_select %p466, %s32, 1
          %s468 = smul.addr %s467, 4
          %s469 = smul.addr %s468, 8
          %s470 = scalar_lea.vmem %s1, %s469
        $region80: #{tpu_custom_call.1} parent=75 // pred_fallthru
          _
      $region76: #{tpu_custom_call.1} parent=5 // pred_fallthru
        _
      %p471 = scmp.le.s32.totalorder 1, %s32
      %p472 = scmp.lt.s32.totalorder %s32, 3
      %p473 = pnand %p471, %p472
      %p474 = pneg %p473
      // Predicated region
      $region81: #{tpu_custom_call.1} parent=5 // pred_check
        _
      $region82: #{tpu_custom_call.1} parent=5 // pred_check_branch
        %476 = sbr.rel (%p473) target = $region84
      $region83: #{tpu_custom_call.1} parent=5 // pred_region
        %s477 = ssub.s32 %s32, 1
        %p478 = scmp.lt.s32.totalorder %s37, 1
        %s479 = scalar_select %p478, %s37, 1
        %s480 = smul.addr %s479, 4
        %s481 = smul.addr %s480, 8
        %s482 = scalar_lea.vmem %s1, %s481
        %p483 = pneg %p58
        %p484 = pneg %p55
        %p485 = pneg %p79
        %p486 = pneg %p76
        %p487 = pneg %p100
        %p488 = pneg %p97
        %p489 = pneg %p121
        %p490 = pneg %p118
        %p491 = pneg %p142
        %p492 = pneg %p139
        %p493 = pneg %p163
        %p494 = pneg %p160
        %p495 = pneg %p184
        %p496 = pneg %p181
        %p497 = pneg %p205
        %p498 = pneg %p202
        %p499 = pneg %p226
        %p500 = pneg %p223
        %p501 = pneg %p247
        %p502 = pneg %p244
        %p503 = pneg %p268
        %p504 = pneg %p265
        %p505 = pneg %p289
        %p506 = pneg %p286
        %p507 = pneg %p310
        %p508 = pneg %p307
        %p509 = pneg %p331
        %p510 = pneg %p328
        %p511 = pneg %p352
        %p512 = pneg %p349
        %p513 = pneg %p373
        %p514 = pneg %p370
        %p515 = pneg %p399
        %p516 = pneg %p396
        %s517 = sand.u32 %s386, 1
        %s518 = scalar_lea.sflag [#allocation5], %s517
        %s519 = sand.u32 %s386, 1
        %s520 = smul.addr %s519, 32
        %s521 = scalar_lea.vmem [#allocation4], %s520
        %p522 = scmp.lt.s32.totalorder %s37, 1
        %s523 = scalar_select %p522, %s37, 1
        %s524 = smul.addr %s523, 4
        %s525 = smul.addr %s524, 8
        %s526 = scalar_lea.vmem %s1, %s525
        %s528 = sld [smem:[#allocation3 + %s37]]
        %v529 = vld [vmem:[%s526] sm:$0xff]
        %v530 = vld [vmem:[%s526 + $0x8] sm:$0xff]
        %v531 = vld [vmem:[%s526 + $0x10] sm:$0xff]
        %v532 = vld [vmem:[%s526 + $0x18] sm:$0xff]
        %v533 = vpack.c.bf16 %v530, %v529
        %v534 = vpack.c.bf16 %v532, %v531
        %v535 = vld [vmem:[%s2] sm:$0xf]
        %v536 = vld [vmem:[%s2 + $0x4] sm:$0xf]
        %v537 = vld [vmem:[%s3] sm:$0x1]
        %v539 = vlaneseq
        %v540 = vshrl.u32 %v539, 7
        %v541 = vsub.s32 0, %v540
        %v542 = vrot.slane %v537, %v541
        %v546 = vunpack.c.l.b16 %v535
        %v547 = vunpack.c.l.b16 %v536
        %v548 = vpack.c.b16 %v547, %v546
        %vm550 = vcmask 130048
        %v552 = vsel %vm550, %v533, 0
        %v555 = vsel %vm550, %v534, 0
        %557 = vmatprep.subr.bf16.mxu0 0
        %558 = vmatpush1.bf16.msra.mxu0 %v548
        %559 = vmatprep.subr.bf16.mxu0 0
        %560 = vmatpush1.bf16.msra.mxu0 0
        %561 = vmatprep.subr.bf16.mxu0 0
        %562 = vmatpush1.bf16.msra.mxu0 0
        %563 = vmatprep.subr.bf16.mxu0 0
        %564 = vmatpush1.bf16.msra.mxu0 0
        %565 = vmatprep.subr.bf16.mxu0 0
        %566 = vmatpush1.bf16.msra.mxu0 0
        %567 = vmatprep.subr.bf16.mxu0 0
        %568 = vmatpush1.bf16.msra.mxu0 0
        %569 = vmatprep.subr.bf16.mxu0 0
        %570 = vmatpush1.bf16.msra.mxu0 0
        %571 = vmatprep.subr.bf16.mxu0 0
        %572 = vmatpush1.bf16.msra.mxu0 0
        %573 = vmatprep.subr.bf16.mxu0 0
        %574 = vmatpush1.bf16.msra.mxu0 0
        %575 = vmatprep.subr.bf16.mxu0 0
        %576 = vmatpush1.bf16.msra.mxu0 0
        %577 = vmatprep.subr.bf16.mxu0 0
        %578 = vmatpush1.bf16.msra.mxu0 0
        %579 = vmatprep.subr.bf16.mxu0 0
        %580 = vmatpush1.bf16.msra.mxu0 0
        %581 = vmatprep.subr.bf16.mxu0 0
        %582 = vmatpush1.bf16.msra.mxu0 0
        %583 = vmatprep.subr.bf16.mxu0 0
        %584 = vmatpush1.bf16.msra.mxu0 0
        %585 = vmatprep.subr.bf16.mxu0 0
        %586 = vmatpush1.bf16.msra.mxu0 0
        %587 = vmatprep.subr.bf16.mxu0 0
        %588 = vmatpush1.bf16.msra.mxu0 0
        %589 = vmatprep.mubr.bf16.mxu0 0
        %590 = vmatmul.mubr.bf16.gmra.mrb[0].mxu0 %v552
        %v591 = vpop.f32.mrb[0].mxu0
        %v592 = vadd.f32 %v542, %v591
        %v593 = vpop.f32.mrb[0].mxu0
        %v594 = vpop.f32.mrb[0].mxu0
        %v595 = vadd.f32 %v542, %v594
        %v596 = vpop.f32.mrb[0].mxu0
        %597 = vmatprep.mubr.bf16.mxu0 0
        %598 = vmatmul.mubr.bf16.gmra.mrb[0].mxu0 %v555
        %v599 = vpop.f32.mrb[0].mxu0
        %v600 = vadd.f32 %v542, %v599
        %v601 = vpop.f32.mrb[0].mxu0
        %v602 = vpop.f32.mrb[0].mxu0
        %v603 = vadd.f32 %v542, %v602
        %v604 = vpop.f32.mrb[0].mxu0
        %605 = vdwg.mxu0
        %v606 = vlaneseq
        %v607 = vshrl.u32 %v606, 7
        %v608 = vadd.s32 %v607, 8
        %v609 = vadd.s32 %v607, 16
        %v610 = vadd.s32 %v607, 24
        %v611 = vshra.s32 %v607, 3
        %v612 = vshra.s32 %v608, 3
        %v613 = vshra.s32 %v609, 3
        %v614 = vshra.s32 %v610, 3
        %v615 = vmul.u32 %v611, 8
        %v616 = vmul.u32 %v612, 8
        %v617 = vmul.u32 %v613, 8
        %v618 = vmul.u32 %v614, 8
        %v619 = vsub.s32 %v607, %v615
        %v620 = vsub.s32 %v608, %v616
        %v621 = vsub.s32 %v609, %v617
        %v622 = vsub.s32 %v610, %v618
        %vm623 = vcmp.lt.s32.totalorder %v619, 6
        %vm624 = vcmp.lt.s32.totalorder %v620, 6
        %vm625 = vcmp.lt.s32.totalorder %v621, 6
        %vm626 = vcmp.lt.s32.totalorder %v622, 6
        %v627 = vmul.u32 %v611, 6
        %v628 = vmul.u32 %v612, 6
        %v629 = vmul.u32 %v613, 6
        %v630 = vmul.u32 %v614, 6
        %v631 = vadd.s32 %v627, %v619
        %v632 = vadd.s32 %v628, %v620
        %v633 = vadd.s32 %v629, %v621
        %v634 = vadd.s32 %v630, %v622
        %v635 = vadd.s32 %v611, 1
        %v636 = vadd.s32 %v612, 1
        %v637 = vadd.s32 %v613, 1
        %v638 = vadd.s32 %v614, 1
        %v639 = vmul.u32 %v635, 6
        %v640 = vmul.u32 %v636, 6
        %v641 = vmul.u32 %v637, 6
        %v642 = vmul.u32 %v638, 6
        %v643 = vsub.s32 %v619, 6
        %v644 = vsub.s32 %v620, 6
        %v645 = vsub.s32 %v621, 6
        %v646 = vsub.s32 %v622, 6
        %v647 = vadd.s32 %v639, %v643
        %v648 = vadd.s32 %v640, %v644
        %v649 = vadd.s32 %v641, %v645
        %v650 = vadd.s32 %v642, %v646
        %v651 = vsel %vm623, %v631, %v647
        %v652 = vsel %vm624, %v632, %v648
        %v653 = vsel %vm625, %v633, %v649
        %v654 = vsel %vm626, %v634, %v650
        %v655 = vstv %s528
        %vm656 = vcmp.lt.s32.totalorder %v651, %v655
        %vm657 = vcmp.lt.s32.totalorder %v652, %v655
        %vm658 = vcmp.lt.s32.totalorder %v653, %v655
        %vm659 = vcmp.lt.s32.totalorder %v654, %v655
        %vm660 = vcmp.lt.s32.totalorder %v611, 3
        %vm661 = vcmp.lt.s32.totalorder %v612, 3
        %vm662 = vcmp.lt.s32.totalorder %v613, 3
        %vm663 = vcmp.lt.s32.totalorder %v614, 3
        %vm664 = vmor %vm623, %vm660
        %vm665 = vmor %vm624, %vm661
        %vm666 = vmor %vm625, %vm662
        %vm667 = vmor %vm626, %vm663
        %vm668 = vmand %vm656, %vm664
        %vm669 = vmand %vm657, %vm665
        %vm670 = vmand %vm658, %vm666
        %vm671 = vmand %vm659, %vm667
        %v672 = vsel %vm668, 1, 0
        %v673 = vsel %vm669, 1, 0
        %v674 = vsel %vm670, 1, 0
        %v675 = vsel %vm671, 1, 0
        %v676 = vcvt.s32.f32 %v672
        %v677 = vcvt.s32.f32 %v673
        %v678 = vcvt.s32.f32 %v674
        %v679 = vcvt.s32.f32 %v675
        %v680 = vadd.s32 %v607, 32
        %v681 = vadd.s32 %v607, 40
        %v682 = vadd.s32 %v607, 48
        %v683 = vadd.s32 %v607, 56
        %v684 = vadd.s32 %v607, 64
        %v685 = vadd.s32 %v607, 72
        %v686 = vadd.s32 %v607, 80
        %v687 = vadd.s32 %v607, 88
        %v688 = vadd.s32 %v607, 96
        %v689 = vadd.s32 %v607, 104
        %v690 = vadd.s32 %v607, 112
        %v691 = vadd.s32 %v607, 120
        %v692 = vlaneseq
        %v693 = vand.u32 %v692, 127
        %v694 = vshra.s32 %v607, 5
        %v695 = vshra.s32 %v608, 5
        %v696 = vshra.s32 %v609, 5
        %v697 = vshra.s32 %v610, 5
        %v698 = vshra.s32 %v680, 5
        %v699 = vshra.s32 %v681, 5
        %v700 = vshra.s32 %v682, 5
        %v701 = vshra.s32 %v683, 5
        %v702 = vshra.s32 %v684, 5
        %v703 = vshra.s32 %v685, 5
        %v704 = vshra.s32 %v686, 5
        %v705 = vshra.s32 %v687, 5
        %v706 = vshra.s32 %v688, 5
        %v707 = vshra.s32 %v689, 5
        %v708 = vshra.s32 %v690, 5
        %v709 = vshra.s32 %v691, 5
        %v710 = vmul.u32 %v694, 32
        %v711 = vmul.u32 %v695, 32
        %v712 = vmul.u32 %v696, 32
        %v713 = vmul.u32 %v697, 32
        %v714 = vmul.u32 %v698, 32
        %v715 = vmul.u32 %v699, 32
        %v716 = vmul.u32 %v700, 32
        %v717 = vmul.u32 %v701, 32
        %v718 = vmul.u32 %v702, 32
        %v719 = vmul.u32 %v703, 32
        %v720 = vmul.u32 %v704, 32
        %v721 = vmul.u32 %v705, 32
        %v722 = vmul.u32 %v706, 32
        %v723 = vmul.u32 %v707, 32
        %v724 = vmul.u32 %v708, 32
        %v725 = vmul.u32 %v709, 32
        %v726 = vsub.s32 %v607, %v710
        %v727 = vsub.s32 %v608, %v711
        %v728 = vsub.s32 %v609, %v712
        %v729 = vsub.s32 %v610, %v713
        %v730 = vsub.s32 %v680, %v714
        %v731 = vsub.s32 %v681, %v715
        %v732 = vsub.s32 %v682, %v716
        %v733 = vsub.s32 %v683, %v717
        %v734 = vsub.s32 %v684, %v718
        %v735 = vsub.s32 %v685, %v719
        %v736 = vsub.s32 %v686, %v720
        %v737 = vsub.s32 %v687, %v721
        %v738 = vsub.s32 %v688, %v722
        %v739 = vsub.s32 %v689, %v723
        %v740 = vsub.s32 %v690, %v724
        %v741 = vsub.s32 %v691, %v725
        %v742 = vshra.s32 %v693, 5
        %v743 = vmul.u32 %v742, 32
        %v744 = vsub.s32 %v693, %v743
        %v745 = vshra.s32 %v726, 3
        %v746 = vshra.s32 %v727, 3
        %v747 = vshra.s32 %v728, 3
        %v748 = vshra.s32 %v729, 3
        %v749 = vshra.s32 %v730, 3
        %v750 = vshra.s32 %v731, 3
        %v751 = vshra.s32 %v732, 3
        %v752 = vshra.s32 %v733, 3
        %v753 = vshra.s32 %v734, 3
        %v754 = vshra.s32 %v735, 3
        %v755 = vshra.s32 %v736, 3
        %v756 = vshra.s32 %v737, 3
        %v757 = vshra.s32 %v738, 3
        %v758 = vshra.s32 %v739, 3
        %v759 = vshra.s32 %v740, 3
        %v760 = vshra.s32 %v741, 3
        %v761 = vshra.s32 %v744, 3
        %v762 = vmul.u32 %v761, 8
        %v763 = vsub.s32 %v744, %v762
        %vm764 = vcmp.eq.s32.totalorder %v761, %v745
        %vm765 = vcmp.eq.s32.totalorder %v761, %v746
        %vm766 = vcmp.eq.s32.totalorder %v761, %v747
        %vm767 = vcmp.eq.s32.totalorder %v761, %v748
        %vm768 = vcmp.eq.s32.totalorder %v761, %v749
        %vm769 = vcmp.eq.s32.totalorder %v761, %v750
        %vm770 = vcmp.eq.s32.totalorder %v761, %v751
        %vm771 = vcmp.eq.s32.totalorder %v761, %v752
        %vm772 = vcmp.eq.s32.totalorder %v761, %v753
        %vm773 = vcmp.eq.s32.totalorder %v761, %v754
        %vm774 = vcmp.eq.s32.totalorder %v761, %v755
        %vm775 = vcmp.eq.s32.totalorder %v761, %v756
        %vm776 = vcmp.eq.s32.totalorder %v761, %v757
        %vm777 = vcmp.eq.s32.totalorder %v761, %v758
        %vm778 = vcmp.eq.s32.totalorder %v761, %v759
        %vm779 = vcmp.eq.s32.totalorder %v761, %v760
        %v780 = vsub.s32 %v745, 1
        %v781 = vsub.s32 %v746, 1
        %v782 = vsub.s32 %v747, 1
        %v783 = vsub.s32 %v748, 1
        %v784 = vsub.s32 %v749, 1
        %v785 = vsub.s32 %v750, 1
        %v786 = vsub.s32 %v751, 1
        %v787 = vsub.s32 %v752, 1
        %v788 = vsub.s32 %v753, 1
        %v789 = vsub.s32 %v754, 1
        %v790 = vsub.s32 %v755, 1
        %v791 = vsub.s32 %v756, 1
        %v792 = vsub.s32 %v757, 1
        %v793 = vsub.s32 %v758, 1
        %v794 = vsub.s32 %v759, 1
        %v795 = vsub.s32 %v760, 1
        %vm796 = vcmp.eq.s32.totalorder %v761, %v780
        %vm797 = vcmp.eq.s32.totalorder %v761, %v781
        %vm798 = vcmp.eq.s32.totalorder %v761, %v782
        %vm799 = vcmp.eq.s32.totalorder %v761, %v783
        %vm800 = vcmp.eq.s32.totalorder %v761, %v784
        %vm801 = vcmp.eq.s32.totalorder %v761, %v785
        %vm802 = vcmp.eq.s32.totalorder %v761, %v786
        %vm803 = vcmp.eq.s32.totalorder %v761, %v787
        %vm804 = vcmp.eq.s32.totalorder %v761, %v788
        %vm805 = vcmp.eq.s32.totalorder %v761, %v789
        %vm806 = vcmp.eq.s32.totalorder %v761, %v790
        %vm807 = vcmp.eq.s32.totalorder %v761, %v791
        %vm808 = vcmp.eq.s32.totalorder %v761, %v792
        %vm809 = vcmp.eq.s32.totalorder %v761, %v793
        %vm810 = vcmp.eq.s32.totalorder %v761, %v794
        %vm811 = vcmp.eq.s32.totalorder %v761, %v795
        %vm812 = vcmp.lt.s32.totalorder %v763, 6
        %vm813 = vmand %vm796, %vm812
        %vm814 = vmand %vm797, %vm812
        %vm815 = vmand %vm798, %vm812
        %vm816 = vmand %vm799, %vm812
        %vm817 = vmand %vm800, %vm812
        %vm818 = vmand %vm801, %vm812
        %vm819 = vmand %vm802, %vm812
        %vm820 = vmand %vm803, %vm812
        %vm821 = vmand %vm804, %vm812
        %vm822 = vmand %vm805, %vm812
        %vm823 = vmand %vm806, %vm812
        %vm824 = vmand %vm807, %vm812
        %vm825 = vmand %vm808, %vm812
        %vm826 = vmand %vm809, %vm812
        %vm827 = vmand %vm810, %vm812
        %vm828 = vmand %vm811, %vm812
        %vm829 = vmor %vm764, %vm813
        %vm830 = vmor %vm765, %vm814
        %vm831 = vmor %vm766, %vm815
        %vm832 = vmor %vm767, %vm816
        %vm833 = vmor %vm768, %vm817
        %vm834 = vmor %vm769, %vm818
        %vm835 = vmor %vm770, %vm819
        %vm836 = vmor %vm771, %vm820
        %vm837 = vmor %vm772, %vm821
        %vm838 = vmor %vm773, %vm822
        %vm839 = vmor %vm774, %vm823
        %vm840 = vmor %vm775, %vm824
        %vm841 = vmor %vm776, %vm825
        %vm842 = vmor %vm777, %vm826
        %vm843 = vmor %vm778, %vm827
        %vm844 = vmor %vm779, %vm828
        %vm845 = vcmp.eq.s32.totalorder %v694, %v742
        %vm846 = vcmp.eq.s32.totalorder %v695, %v742
        %vm847 = vcmp.eq.s32.totalorder %v696, %v742
        %vm848 = vcmp.eq.s32.totalorder %v697, %v742
        %vm849 = vcmp.eq.s32.totalorder %v698, %v742
        %vm850 = vcmp.eq.s32.totalorder %v699, %v742
        %vm851 = vcmp.eq.s32.totalorder %v700, %v742
        %vm852 = vcmp.eq.s32.totalorder %v701, %v742
        %vm853 = vcmp.eq.s32.totalorder %v702, %v742
        %vm854 = vcmp.eq.s32.totalorder %v703, %v742
        %vm855 = vcmp.eq.s32.totalorder %v704, %v742
        %vm856 = vcmp.eq.s32.totalorder %v705, %v742
        %vm857 = vcmp.eq.s32.totalorder %v706, %v742
        %vm858 = vcmp.eq.s32.totalorder %v707, %v742
        %vm859 = vcmp.eq.s32.totalorder %v708, %v742
        %vm860 = vcmp.eq.s32.totalorder %v709, %v742
        %vm861 = vmand %vm845, %vm829
        %vm862 = vmand %vm846, %vm830
        %vm863 = vmand %vm847, %vm831
        %vm864 = vmand %vm848, %vm832
        %vm865 = vmand %vm849, %vm833
        %vm866 = vmand %vm850, %vm834
        %vm867 = vmand %vm851, %vm835
        %vm868 = vmand %vm852, %vm836
        %vm869 = vmand %vm853, %vm837
        %vm870 = vmand %vm854, %vm838
        %vm871 = vmand %vm855, %vm839
        %vm872 = vmand %vm856, %vm840
        %vm873 = vmand %vm857, %vm841
        %vm874 = vmand %vm858, %vm842
        %vm875 = vmand %vm859, %vm843
        %vm876 = vmand %vm860, %vm844
        %v877 = vmul.u32 %v761, 6
        %v878 = vadd.s32 %v877, %v763
        %v879 = vadd.s32 %v761, 1
        %v880 = vmul.u32 %v879, 6
        %v881 = vsub.s32 %v763, 6
        %v882 = vadd.s32 %v880, %v881
        %v883 = vsel %vm812, %v878, %v882
        %vm884 = vcmp.lt.s32.totalorder %v883, %v655
        %vm885 = vcmp.lt.s32.totalorder %v761, 3
        %vm886 = vmor %vm812, %vm885
        %vm887 = vmand %vm884, %vm886
        %vm888 = vmand %vm861, %vm887
        %vm889 = vmand %vm862, %vm887
        %vm890 = vmand %vm863, %vm887
        %vm891 = vmand %vm864, %vm887
        %vm892 = vmand %vm865, %vm887
        %vm893 = vmand %vm866, %vm887
        %vm894 = vmand %vm867, %vm887
        %vm895 = vmand %vm868, %vm887
        %vm896 = vmand %vm869, %vm887
        %vm897 = vmand %vm870, %vm887
        %vm898 = vmand %vm871, %vm887
        %vm899 = vmand %vm872, %vm887
        %vm900 = vmand %vm873, %vm887
        %vm901 = vmand %vm874, %vm887
        %vm902 = vmand %vm875, %vm887
        %vm903 = vmand %vm876, %vm887
        %v904 = vsel %vm888, 1, 0
        %v905 = vsel %vm889, 1, 0
        %v906 = vsel %vm890, 1, 0
        %v907 = vsel %vm891, 1, 0
        %v908 = vsel %vm892, 1, 0
        %v909 = vsel %vm893, 1, 0
        %v910 = vsel %vm894, 1, 0
        %v911 = vsel %vm895, 1, 0
        %v912 = vsel %vm896, 1, 0
        %v913 = vsel %vm897, 1, 0
        %v914 = vsel %vm898, 1, 0
        %v915 = vsel %vm899, 1, 0
        %v916 = vsel %vm900, 1, 0
        %v917 = vsel %vm901, 1, 0
        %v918 = vsel %vm902, 1, 0
        %v919 = vsel %vm903, 1, 0
        %v920 = vcvt.s32.f32 %v904
        %v921 = vcvt.s32.f32 %v905
        %v922 = vcvt.s32.f32 %v906
        %v923 = vcvt.s32.f32 %v907
        %v924 = vcvt.s32.f32 %v908
        %v925 = vcvt.s32.f32 %v909
        %v926 = vcvt.s32.f32 %v910
        %v927 = vcvt.s32.f32 %v911
        %v928 = vcvt.s32.f32 %v912
        %v929 = vcvt.s32.f32 %v913
        %v930 = vcvt.s32.f32 %v914
        %v931 = vcvt.s32.f32 %v915
        %v932 = vcvt.s32.f32 %v916
        %v933 = vcvt.s32.f32 %v917
        %v934 = vcvt.s32.f32 %v918
        %v935 = vcvt.s32.f32 %v919
        %v936 = vand.u32 %v607, 7
        %v937 = vand.u32 %v608, 7
        %v938 = vand.u32 %v609, 7
        %v939 = vand.u32 %v610, 7
        %v940 = vadd.s32 %v936, 4294967293
        %v941 = vadd.s32 %v937, 4294967293
        %v942 = vadd.s32 %v938, 4294967293
        %v943 = vadd.s32 %v939, 4294967293
        %vm944 = vcmp.ge.s32.totalorder %v940, 0
        %vm945 = vcmp.ge.s32.totalorder %v941, 0
        %vm946 = vcmp.ge.s32.totalorder %v942, 0
        %vm947 = vcmp.ge.s32.totalorder %v943, 0
        %vm948 = vcmp.lt.s32.totalorder %v940, 8
        %vm949 = vcmp.lt.s32.totalorder %v941, 8
        %vm950 = vcmp.lt.s32.totalorder %v942, 8
        %vm951 = vcmp.lt.s32.totalorder %v943, 8
        %vm952 = vmand %vm944, %vm948
        %vm953 = vmand %vm945, %vm949
        %vm954 = vmand %vm946, %vm950
        %vm955 = vmand %vm947, %vm951
        %v956 = vsel %vm952, 1, 0
        %v957 = vsel %vm953, 1, 0
        %v958 = vsel %vm954, 1, 0
        %v959 = vsel %vm955, 1, 0
        %v960 = vcvt.s32.f32 %v956
        %v961 = vcvt.s32.f32 %v957
        %v962 = vcvt.s32.f32 %v958
        %v963 = vcvt.s32.f32 %v959
        %v964 = vadd.s32 %v936, 4294967294
        %v965 = vadd.s32 %v937, 4294967294
        %v966 = vadd.s32 %v938, 4294967294
        %v967 = vadd.s32 %v939, 4294967294
        %vm968 = vcmp.ge.s32.totalorder %v964, 0
        %vm969 = vcmp.ge.s32.totalorder %v965, 0
        %vm970 = vcmp.ge.s32.totalorder %v966, 0
        %vm971 = vcmp.ge.s32.totalorder %v967, 0
        %vm972 = vcmp.lt.s32.totalorder %v964, 8
        %vm973 = vcmp.lt.s32.totalorder %v965, 8
        %vm974 = vcmp.lt.s32.totalorder %v966, 8
        %vm975 = vcmp.lt.s32.totalorder %v967, 8
        %vm976 = vmand %vm968, %vm972
        %vm977 = vmand %vm969, %vm973
        %vm978 = vmand %vm970, %vm974
        %vm979 = vmand %vm971, %vm975
        %v980 = vsel %vm976, 1, 0
        %v981 = vsel %vm977, 1, 0
        %v982 = vsel %vm978, 1, 0
        %v983 = vsel %vm979, 1, 0
        %v984 = vcvt.s32.f32 %v980
        %v985 = vcvt.s32.f32 %v981
        %v986 = vcvt.s32.f32 %v982
        %v987 = vcvt.s32.f32 %v983
        %v988 = vadd.s32 %v936, 4294967295
        %v989 = vadd.s32 %v937, 4294967295
        %v990 = vadd.s32 %v938, 4294967295
        %v991 = vadd.s32 %v939, 4294967295
        %vm992 = vcmp.ge.s32.totalorder %v988, 0
        %vm993 = vcmp.ge.s32.totalorder %v989, 0
        %vm994 = vcmp.ge.s32.totalorder %v990, 0
        %vm995 = vcmp.ge.s32.totalorder %v991, 0
        %vm996 = vcmp.lt.s32.totalorder %v988, 8
        %vm997 = vcmp.lt.s32.totalorder %v989, 8
        %vm998 = vcmp.lt.s32.totalorder %v990, 8
        %vm999 = vcmp.lt.s32.totalorder %v991, 8
        %vm1000 = vmand %vm992, %vm996
        %vm1001 = vmand %vm993, %vm997
        %vm1002 = vmand %vm994, %vm998
        %vm1003 = vmand %vm995, %vm999
        %v1004 = vsel %vm1000, 1, 0
        %v1005 = vsel %vm1001, 1, 0
        %v1006 = vsel %vm1002, 1, 0
        %v1007 = vsel %vm1003, 1, 0
        %v1008 = vcvt.s32.f32 %v1004
        %v1009 = vcvt.s32.f32 %v1005
        %v1010 = vcvt.s32.f32 %v1006
        %v1011 = vcvt.s32.f32 %v1007
        %vm1012 = vcmp.ge.s32.totalorder %v936, 0
        %vm1013 = vcmp.ge.s32.totalorder %v937, 0
        %vm1014 = vcmp.ge.s32.totalorder %v938, 0
        %vm1015 = vcmp.ge.s32.totalorder %v939, 0
        %vm1016 = vcmp.lt.s32.totalorder %v936, 8
        %vm1017 = vcmp.lt.s32.totalorder %v937, 8
        %vm1018 = vcmp.lt.s32.totalorder %v938, 8
        %vm1019 = vcmp.lt.s32.totalorder %v939, 8
        %vm1020 = vmand %vm1012, %vm1016
        %vm1021 = vmand %vm1013, %vm1017
        %vm1022 = vmand %vm1014, %vm1018
        %vm1023 = vmand %vm1015, %vm1019
        %v1024 = vsel %vm1020, 1, 0
        %v1025 = vsel %vm1021, 1, 0
        %v1026 = vsel %vm1022, 1, 0
        %v1027 = vsel %vm1023, 1, 0
        %v1028 = vcvt.s32.f32 %v1024
        %v1029 = vcvt.s32.f32 %v1025
        %v1030 = vcvt.s32.f32 %v1026
        %v1031 = vcvt.s32.f32 %v1027
        %v1032 = vadd.s32 %v936, 1
        %v1033 = vadd.s32 %v937, 1
        %v1034 = vadd.s32 %v938, 1
        %v1035 = vadd.s32 %v939, 1
        %vm1036 = vcmp.ge.s32.totalorder %v1032, 0
        %vm1037 = vcmp.ge.s32.totalorder %v1033, 0
        %vm1038 = vcmp.ge.s32.totalorder %v1034, 0
        %vm1039 = vcmp.ge.s32.totalorder %v1035, 0
        %vm1040 = vcmp.lt.s32.totalorder %v1032, 8
        %vm1041 = vcmp.lt.s32.totalorder %v1033, 8
        %vm1042 = vcmp.lt.s32.totalorder %v1034, 8
        %vm1043 = vcmp.lt.s32.totalorder %v1035, 8
        %vm1044 = vmand %vm1036, %vm1040
        %vm1045 = vmand %vm1037, %vm1041
        %vm1046 = vmand %vm1038, %vm1042
        %vm1047 = vmand %vm1039, %vm1043
        %v1048 = vsel %vm1044, 1, 0
        %v1049 = vsel %vm1045, 1, 0
        %v1050 = vsel %vm1046, 1, 0
        %v1051 = vsel %vm1047, 1, 0
        %v1052 = vcvt.s32.f32 %v1048
        %v1053 = vcvt.s32.f32 %v1049
        %v1054 = vcvt.s32.f32 %v1050
        %v1055 = vcvt.s32.f32 %v1051
        %v1056 = vadd.s32 %v936, 2
        %v1057 = vadd.s32 %v937, 2
        %v1058 = vadd.s32 %v938, 2
        %v1059 = vadd.s32 %v939, 2
        %vm1060 = vcmp.ge.s32.totalorder %v1056, 0
        %vm1061 = vcmp.ge.s32.totalorder %v1057, 0
        %vm1062 = vcmp.ge.s32.totalorder %v1058, 0
        %vm1063 = vcmp.ge.s32.totalorder %v1059, 0
        %vm1064 = vcmp.lt.s32.totalorder %v1056, 8
        %vm1065 = vcmp.lt.s32.totalorder %v1057, 8
        %vm1066 = vcmp.lt.s32.totalorder %v1058, 8
        %vm1067 = vcmp.lt.s32.totalorder %v1059, 8
        %vm1068 = vmand %vm1060, %vm1064
        %vm1069 = vmand %vm1061, %vm1065
        %vm1070 = vmand %vm1062, %vm1066
        %vm1071 = vmand %vm1063, %vm1067
        %v1072 = vsel %vm1068, 1, 0
        %v1073 = vsel %vm1069, 1, 0
        %v1074 = vsel %vm1070, 1, 0
        %v1075 = vsel %vm1071, 1, 0
        %v1076 = vcvt.s32.f32 %v1072
        %v1077 = vcvt.s32.f32 %v1073
        %v1078 = vcvt.s32.f32 %v1074
        %v1079 = vcvt.s32.f32 %v1075
        %v1080 = vadd.s32 %v936, 3
        %v1081 = vadd.s32 %v937, 3
        %v1082 = vadd.s32 %v938, 3
        %v1083 = vadd.s32 %v939, 3
        %vm1084 = vcmp.ge.s32.totalorder %v1080, 0
        %vm1085 = vcmp.ge.s32.totalorder %v1081, 0
        %vm1086 = vcmp.ge.s32.totalorder %v1082, 0
        %vm1087 = vcmp.ge.s32.totalorder %v1083, 0
        %vm1088 = vcmp.lt.s32.totalorder %v1080, 8
        %vm1089 = vcmp.lt.s32.totalorder %v1081, 8
        %vm1090 = vcmp.lt.s32.totalorder %v1082, 8
        %vm1091 = vcmp.lt.s32.totalorder %v1083, 8
        %vm1092 = vmand %vm1084, %vm1088
        %vm1093 = vmand %vm1085, %vm1089
        %vm1094 = vmand %vm1086, %vm1090
        %vm1095 = vmand %vm1087, %vm1091
        %v1096 = vsel %vm1092, 1, 0
        %v1097 = vsel %vm1093, 1, 0
        %v1098 = vsel %vm1094, 1, 0
        %v1099 = vsel %vm1095, 1, 0
        %v1100 = vcvt.s32.f32 %v1096
        %v1101 = vcvt.s32.f32 %v1097
        %v1102 = vcvt.s32.f32 %v1098
        %v1103 = vcvt.s32.f32 %v1099
        loop: start=0, step=1, limit=2
        $region85: #{tpu_custom_call.1} parent=83 // loop_pre_header
          _
        $region86: #{tpu_custom_call.1} parent=83 // loop_header
          %s1105 = sphi 0, %s1109
          %p1106 = scmp.ge.s32.totalorder %s1105, 2
          %v1110 = vphi %v592, %v3924
          %v1111 = vphi %v595, %v3925
          %v1112 = vphi %v600, %v3926
          %v1113 = vphi %v603, %v3927
        $region87: #{tpu_custom_call.1} parent=83 // loop_header_branch
          %1108 = sbr.rel (%p1106) target = $region91
        $region88: #{tpu_custom_call.1} parent=83 // loop_body
          %s1114 = smul.u32 %s1105, 24
          %s1115 = scalar_lea.vmem %s15, %s1114
          %v1116 = vld [vmem:[%s1115] sm:$0xff]
          %v1117 = vld [vmem:[%s1115 + $0x8] sm:$0xff]
          %v1118 = vld [vmem:[%s1115 + $0x10] sm:$0xff]
          %s1119 = smul.u32 %s1105, 2
          %s1120 = smul.addr %s1119, 8
          %s1121 = scalar_lea.vmem %s16, %s1120
          %v1122 = vld [vmem:[%s1121] sm:$0xff]
          %v1123 = vld [vmem:[%s1121 + $0x8] sm:$0xff]
          %s1124 = smul.u32 %s1105, 16
          %s1125 = smul.addr %s1124, 4
          %s1126 = scalar_lea.vmem %s4, %s1125
          %v1127 = vld [vmem:[%s1126] sm:$0xff]
          %v1128 = vld [vmem:[%s1126 + $0x8] sm:$0xff]
          %v1129 = vld [vmem:[%s1126 + $0x10] sm:$0xff]
          %v1130 = vld [vmem:[%s1126 + $0x18] sm:$0xff]
          %v1131 = vld [vmem:[%s1126 + $0x20] sm:$0xff]
          %v1132 = vld [vmem:[%s1126 + $0x28] sm:$0xff]
          %v1133 = vld [vmem:[%s1126 + $0x30] sm:$0xff]
          %v1134 = vld [vmem:[%s1126 + $0x38] sm:$0xff]
          %s1135 = smul.u32 %s1105, 32
          %s1136 = smul.addr %s1135, 4
          %s1137 = scalar_lea.vmem %s5, %s1136
          %v1138 = vld [vmem:[%s1137] sm:$0xf]
          %v1139 = vld [vmem:[%s1137 + $0x4] sm:$0xf]
          %v1140 = vld [vmem:[%s1137 + $0x8] sm:$0xf]
          %v1141 = vld [vmem:[%s1137 + $0xc] sm:$0xf]
          %v1142 = vld [vmem:[%s1137 + $0x10] sm:$0xf]
          %v1143 = vld [vmem:[%s1137 + $0x14] sm:$0xf]
          %v1144 = vld [vmem:[%s1137 + $0x18] sm:$0xf]
          %v1145 = vld [vmem:[%s1137 + $0x1c] sm:$0xf]
          %v1146 = vld [vmem:[%s1137 + $0x20] sm:$0xf]
          %v1147 = vld [vmem:[%s1137 + $0x24] sm:$0xf]
          %v1148 = vld [vmem:[%s1137 + $0x28] sm:$0xf]
          %v1149 = vld [vmem:[%s1137 + $0x2c] sm:$0xf]
          %v1150 = vld [vmem:[%s1137 + $0x30] sm:$0xf]
          %v1151 = vld [vmem:[%s1137 + $0x34] sm:$0xf]
          %v1152 = vld [vmem:[%s1137 + $0x38] sm:$0xf]
          %v1153 = vld [vmem:[%s1137 + $0x3c] sm:$0xf]
          %v1154 = vld [vmem:[%s1137 + $0x40] sm:$0xf]
          %v1155 = vld [vmem:[%s1137 + $0x44] sm:$0xf]
          %v1156 = vld [vmem:[%s1137 + $0x48] sm:$0xf]
          %v1157 = vld [vmem:[%s1137 + $0x4c] sm:$0xf]
          %v1158 = vld [vmem:[%s1137 + $0x50] sm:$0xf]
          %v1159 = vld [vmem:[%s1137 + $0x54] sm:$0xf]
          %v1160 = vld [vmem:[%s1137 + $0x58] sm:$0xf]
          %v1161 = vld [vmem:[%s1137 + $0x5c] sm:$0xf]
          %v1162 = vld [vmem:[%s1137 + $0x60] sm:$0xf]
          %v1163 = vld [vmem:[%s1137 + $0x64] sm:$0xf]
          %v1164 = vld [vmem:[%s1137 + $0x68] sm:$0xf]
          %v1165 = vld [vmem:[%s1137 + $0x6c] sm:$0xf]
          %v1166 = vld [vmem:[%s1137 + $0x70] sm:$0xf]
          %v1167 = vld [vmem:[%s1137 + $0x74] sm:$0xf]
          %v1168 = vld [vmem:[%s1137 + $0x78] sm:$0xf]
          %v1169 = vld [vmem:[%s1137 + $0x7c] sm:$0xf]
          %vm1170 = vcmask 523264
          %v1171 = vsel %vm1170, %v1110, 0.0
          %1172 = vadd.xlane.f32.xlu0 %v1171
          %v1173 = vpop.xlane.xlu0 %1172
          %v1174 = vsel %vm1170, %v1111, 0.0
          %1175 = vadd.xlane.f32.xlu0 %v1174
          %v1176 = vpop.xlane.xlu0 %1175
          %v1177 = vsel %vm1170, %v1112, 0.0
          %1178 = vadd.xlane.f32.xlu0 %v1177
          %v1179 = vpop.xlane.xlu0 %1178
          %v1180 = vsel %vm1170, %v1113, 0.0
          %1181 = vadd.xlane.f32.xlu0 %v1180
          %v1182 = vpop.xlane.xlu0 %1181
          %v1183 = vrcp.pop 64.0
          %v1184 = vmul.f32 %v1173, %v1183
          %v1185 = vmul.f32 %v1176, %v1183
          %v1186 = vmul.f32 %v1179, %v1183
          %v1187 = vmul.f32 %v1182, %v1183
          %v1188 = vmul.f32 %v1110, %v1110
          %v1189 = vmul.f32 %v1111, %v1111
          %v1190 = vmul.f32 %v1112, %v1112
          %v1191 = vmul.f32 %v1113, %v1113
          %v1192 = vsel %vm1170, %v1188, 0.0
          %1193 = vadd.xlane.f32.xlu0 %v1192
          %v1194 = vpop.xlane.xlu0 %1193
          %v1195 = vsel %vm1170, %v1189, 0.0
          %1196 = vadd.xlane.f32.xlu0 %v1195
          %v1197 = vpop.xlane.xlu0 %1196
          %v1198 = vsel %vm1170, %v1190, 0.0
          %1199 = vadd.xlane.f32.xlu0 %v1198
          %v1200 = vpop.xlane.xlu0 %1199
          %v1201 = vsel %vm1170, %v1191, 0.0
          %1202 = vadd.xlane.f32.xlu0 %v1201
          %v1203 = vpop.xlane.xlu0 %1202
          %v1204 = vmul.f32 %v1194, %v1183
          %v1205 = vmul.f32 %v1197, %v1183
          %v1206 = vmul.f32 %v1200, %v1183
          %v1207 = vmul.f32 %v1203, %v1183
          %v1208 = vmul.f32 %v1184, %v1184
          %v1209 = vmul.f32 %v1185, %v1185
          %v1210 = vmul.f32 %v1186, %v1186
          %v1211 = vmul.f32 %v1187, %v1187
          %v1212 = vsub.f32 %v1204, %v1208
          %v1213 = vsub.f32 %v1205, %v1209
          %v1214 = vsub.f32 %v1206, %v1210
          %v1215 = vsub.f32 %v1207, %v1211
          %v1216 = vmax.f32 %v1212, 0.0
          %v1217 = vmax.f32 %v1213, 0.0
          %v1218 = vmax.f32 %v1214, 0.0
          %v1219 = vmax.f32 %v1215, 0.0
          %v1220 = vsub.f32 %v1110, %v1184
          %v1221 = vsub.f32 %v1111, %v1185
          %v1222 = vsub.f32 %v1112, %v1186
          %v1223 = vsub.f32 %v1113, %v1187
          %v1224 = vadd.f32 %v1216, 1e-05
          %v1225 = vadd.f32 %v1217, 1e-05
          %v1226 = vadd.f32 %v1218, 1e-05
          %v1227 = vadd.f32 %v1219, 1e-05
          %v1228 = vrsqrt.pop %v1224
          %v1229 = vrsqrt.pop %v1225
          %v1230 = vrsqrt.pop %v1226
          %v1231 = vrsqrt.pop %v1227
          %v1232 = vmul.f32 %v1220, %v1228
          %v1233 = vmul.f32 %v1221, %v1229
          %v1234 = vmul.f32 %v1222, %v1230
          %v1235 = vmul.f32 %v1223, %v1231
          %v1236 = vlaneseq
          %v1237 = vshrl.u32 %v1236, 7
          %v1238 = vsub.s32 0, %v1237
          %v1239 = vrot.slane %v1116, %v1238
          %v1240 = vmul.f32 %v1232, %v1239
          %v1241 = vmul.f32 %v1233, %v1239
          %v1242 = vmul.f32 %v1234, %v1239
          %v1243 = vmul.f32 %v1235, %v1239
          %v1244 = vlaneseq
          %v1245 = vshrl.u32 %v1244, 7
          %v1246 = vsub.s32 1, %v1245
          %v1247 = vrot.slane %v1116, %v1246
          %v1248 = vadd.f32 %v1240, %v1247
          %v1249 = vadd.f32 %v1241, %v1247
          %v1250 = vadd.f32 %v1242, %v1247
          %v1251 = vadd.f32 %v1243, %v1247
          %v1252 = vpack.c.bf16 %v1249, %v1248
          %v1253 = vpack.c.bf16 %v1251, %v1250
          %v1254 = vlaneseq
          %v1255 = vshrl.u32 %v1254, 7
          %v1256 = vsub.s32 0, %v1255
          %v1257 = vrot.slane %v1122, %v1256
          %v1258 = vlaneseq
          %v1259 = vshrl.u32 %v1258, 7
          %v1260 = vsub.s32 0, %v1259
          %v1261 = vrot.slane %v1123, %v1260
          %v1270 = vunpack.c.l.b16 %v1127
          %v1271 = vunpack.c.h.b16 %v1127
          %v1272 = vunpack.c.l.b16 %v1128
          %v1273 = vunpack.c.h.b16 %v1128
          %v1274 = vunpack.c.l.b16 %v1129
          %v1275 = vunpack.c.h.b16 %v1129
          %v1276 = vunpack.c.l.b16 %v1130
          %v1277 = vunpack.c.h.b16 %v1130
          %v1278 = vunpack.c.l.b16 %v1131
          %v1279 = vunpack.c.h.b16 %v1131
          %v1280 = vunpack.c.l.b16 %v1132
          %v1281 = vunpack.c.h.b16 %v1132
          %v1282 = vunpack.c.l.b16 %v1133
          %v1283 = vunpack.c.h.b16 %v1133
          %v1284 = vunpack.c.l.b16 %v1134
          %v1285 = vunpack.c.h.b16 %v1134
          %v1286 = vpack.c.b16 %v1272, %v1270
          %v1287 = vpack.c.b16 %v1273, %v1271
          %v1288 = vpack.c.b16 %v1276, %v1274
          %v1289 = vpack.c.b16 %v1277, %v1275
          %v1290 = vpack.c.b16 %v1280, %v1278
          %v1291 = vpack.c.b16 %v1281, %v1279
          %v1292 = vpack.c.b16 %v1284, %v1282
          %v1293 = vpack.c.b16 %v1285, %v1283
          %v1303 = vsel %vm1170, %v1252, 0
          %v1306 = vsel %vm1170, %v1253, 0
          %1308 = vmatprep.subr.bf16.mxu0 %v1287
          %1309 = vmatpush1.bf16.msra.mxu0 %v1286
          %1310 = vmatprep.subr.bf16.mxu0 %v1289
          %1311 = vmatpush1.bf16.msra.mxu0 %v1288
          %1312 = vmatprep.subr.bf16.mxu0 %v1291
          %1313 = vmatpush1.bf16.msra.mxu0 %v1290
          %1314 = vmatprep.subr.bf16.mxu0 %v1293
          %1315 = vmatpush1.bf16.msra.mxu0 %v1292
          %1316 = vmatprep.subr.bf16.mxu0 0
          %1317 = vmatpush1.bf16.msra.mxu0 0
          %1318 = vmatprep.subr.bf16.mxu0 0
          %1319 = vmatpush1.bf16.msra.mxu0 0
          %1320 = vmatprep.subr.bf16.mxu0 0
          %1321 = vmatpush1.bf16.msra.mxu0 0
          %1322 = vmatprep.subr.bf16.mxu0 0
          %1323 = vmatpush1.bf16.msra.mxu0 0
          %1324 = vmatprep.subr.bf16.mxu0 0
          %1325 = vmatpush1.bf16.msra.mxu0 0
          %1326 = vmatprep.subr.bf16.mxu0 0
          %1327 = vmatpush1.bf16.msra.mxu0 0
          %1328 = vmatprep.subr.bf16.mxu0 0
          %1329 = vmatpush1.bf16.msra.mxu0 0
          %1330 = vmatprep.subr.bf16.mxu0 0
          %1331 = vmatpush1.bf16.msra.mxu0 0
          %1332 = vmatprep.subr.bf16.mxu0 0
          %1333 = vmatpush1.bf16.msra.mxu0 0
          %1334 = vmatprep.subr.bf16.mxu0 0
          %1335 = vmatpush1.bf16.msra.mxu0 0
          %1336 = vmatprep.subr.bf16.mxu0 0
          %1337 = vmatpush1.bf16.msra.mxu0 0
          %1338 = vmatprep.subr.bf16.mxu0 0
          %1339 = vmatpush1.bf16.msra.mxu0 0
          %1340 = vmatprep.mubr.bf16.mxu0 0
          %1341 = vmatmul.mubr.bf16.gmra.mrb[0].mxu0 %v1303
          %v1342 = vpop.f32.mrb[0].mxu0
          %v1343 = vadd.f32 %v1257, %v1342
          %v1344 = vpop.f32.mrb[0].mxu0
          %v1345 = vadd.f32 %v1261, %v1344
          %v1346 = vpop.f32.mrb[0].mxu0
          %v1347 = vadd.f32 %v1257, %v1346
          %v1348 = vpop.f32.mrb[0].mxu0
          %v1349 = vadd.f32 %v1261, %v1348
          %1350 = vmatprep.mubr.bf16.mxu0 0
          %1351 = vmatmul.mubr.bf16.gmra.mrb[0].mxu0 %v1306
          %v1352 = vpop.f32.mrb[0].mxu0
          %v1353 = vadd.f32 %v1257, %v1352
          %v1354 = vpop.f32.mrb[0].mxu0
          %v1355 = vadd.f32 %v1261, %v1354
          %v1356 = vpop.f32.mrb[0].mxu0
          %v1357 = vadd.f32 %v1257, %v1356
          %v1358 = vpop.f32.mrb[0].mxu0
          %v1359 = vadd.f32 %v1261, %v1358
          %1360 = vdwg.mxu0
          %v1361 = vxor.u32 %v1343, 2147483648
          %v1362 = vxor.u32 %v1345, 2147483648
          %v1363 = vxor.u32 %v1347, 2147483648
          %v1364 = vxor.u32 %v1349, 2147483648
          %v1365 = vxor.u32 %v1353, 2147483648
          %v1366 = vxor.u32 %v1355, 2147483648
          %v1367 = vxor.u32 %v1357, 2147483648
          %v1368 = vxor.u32 %v1359, 2147483648
          %v1369 = vmul.f32 %v1361, 1.442695
          %v1370 = vpow.pop %v1369
          %v1371 = vmul.f32 %v1362, 1.442695
          %v1372 = vpow.pop %v1371
          %v1373 = vmul.f32 %v1363, 1.442695
          %v1374 = vpow.pop %v1373
          %v1375 = vmul.f32 %v1364, 1.442695
          %v1376 = vpow.pop %v1375
          %v1377 = vmul.f32 %v1365, 1.442695
          %v1378 = vpow.pop %v1377
          %v1379 = vmul.f32 %v1366, 1.442695
          %v1380 = vpow.pop %v1379
          %v1381 = vmul.f32 %v1367, 1.442695
          %v1382 = vpow.pop %v1381
          %v1383 = vmul.f32 %v1368, 1.442695
          %v1384 = vpow.pop %v1383
          %v1385 = vadd.f32 %v1370, 1.0
          %v1386 = vadd.f32 %v1372, 1.0
          %v1387 = vadd.f32 %v1374, 1.0
          %v1388 = vadd.f32 %v1376, 1.0
          %v1389 = vadd.f32 %v1378, 1.0
          %v1390 = vadd.f32 %v1380, 1.0
          %v1391 = vadd.f32 %v1382, 1.0
          %v1392 = vadd.f32 %v1384, 1.0
          %v1393 = vrcp.pop %v1385
          %v1394 = vmul.f32 1.0, %v1393
          %v1395 = vrcp.pop %v1386
          %v1396 = vmul.f32 1.0, %v1395
          %v1397 = vrcp.pop %v1387
          %v1398 = vmul.f32 1.0, %v1397
          %v1399 = vrcp.pop %v1388
          %v1400 = vmul.f32 1.0, %v1399
          %v1401 = vrcp.pop %v1389
          %v1402 = vmul.f32 1.0, %v1401
          %v1403 = vrcp.pop %v1390
          %v1404 = vmul.f32 1.0, %v1403
          %v1405 = vrcp.pop %v1391
          %v1406 = vmul.f32 1.0, %v1405
          %v1407 = vrcp.pop %v1392
          %v1408 = vmul.f32 1.0, %v1407
          %v1409 = vmul.f32 %v1343, %v1394
          %v1410 = vmul.f32 %v1345, %v1396
          %v1411 = vmul.f32 %v1347, %v1398
          %v1412 = vmul.f32 %v1349, %v1400
          %v1413 = vmul.f32 %v1353, %v1402
          %v1414 = vmul.f32 %v1355, %v1404
          %v1415 = vmul.f32 %v1357, %v1406
          %v1416 = vmul.f32 %v1359, %v1408
          %v1417 = vpack.c.bf16 %v1411, %v1409
          %v1418 = vpack.c.bf16 %v1412, %v1410
          %v1419 = vpack.c.bf16 %v1415, %v1413
          %v1420 = vpack.c.bf16 %v1416, %v1414
          %v1421 = vlaneseq
          %v1422 = vshrl.u32 %v1421, 7
          %v1423 = vsub.s32 2, %v1422
          %v1424 = vrot.slane %v1116, %v1423
          %v1457 = vunpack.c.l.b16 %v1138
          %v1458 = vunpack.c.l.b16 %v1139
          %v1459 = vunpack.c.l.b16 %v1140
          %v1460 = vunpack.c.l.b16 %v1141
          %v1461 = vunpack.c.l.b16 %v1142
          %v1462 = vunpack.c.l.b16 %v1143
          %v1463 = vunpack.c.l.b16 %v1144
          %v1464 = vunpack.c.l.b16 %v1145
          %v1465 = vunpack.c.l.b16 %v1146
          %v1466 = vunpack.c.l.b16 %v1147
          %v1467 = vunpack.c.l.b16 %v1148
          %v1468 = vunpack.c.l.b16 %v1149
          %v1469 = vunpack.c.l.b16 %v1150
          %v1470 = vunpack.c.l.b16 %v1151
          %v1471 = vunpack.c.l.b16 %v1152
          %v1472 = vunpack.c.l.b16 %v1153
          %v1473 = vunpack.c.l.b16 %v1154
          %v1474 = vunpack.c.l.b16 %v1155
          %v1475 = vunpack.c.l.b16 %v1156
          %v1476 = vunpack.c.l.b16 %v1157
          %v1477 = vunpack.c.l.b16 %v1158
          %v1478 = vunpack.c.l.b16 %v1159
          %v1479 = vunpack.c.l.b16 %v1160
          %v1480 = vunpack.c.l.b16 %v1161
          %v1481 = vunpack.c.l.b16 %v1162
          %v1482 = vunpack.c.l.b16 %v1163
          %v1483 = vunpack.c.l.b16 %v1164
          %v1484 = vunpack.c.l.b16 %v1165
          %v1485 = vunpack.c.l.b16 %v1166
          %v1486 = vunpack.c.l.b16 %v1167
          %v1487 = vunpack.c.l.b16 %v1168
          %v1488 = vunpack.c.l.b16 %v1169
          %v1489 = vpack.c.b16 %v1458, %v1457
          %v1490 = vpack.c.b16 %v1460, %v1459
          %v1491 = vpack.c.b16 %v1462, %v1461
          %v1492 = vpack.c.b16 %v1464, %v1463
          %v1493 = vpack.c.b16 %v1466, %v1465
          %v1494 = vpack.c.b16 %v1468, %v1467
          %v1495 = vpack.c.b16 %v1470, %v1469
          %v1496 = vpack.c.b16 %v1472, %v1471
          %v1497 = vpack.c.b16 %v1474, %v1473
          %v1498 = vpack.c.b16 %v1476, %v1475
          %v1499 = vpack.c.b16 %v1478, %v1477
          %v1500 = vpack.c.b16 %v1480, %v1479
          %v1501 = vpack.c.b16 %v1482, %v1481
          %v1502 = vpack.c.b16 %v1484, %v1483
          %v1503 = vpack.c.b16 %v1486, %v1485
          %v1504 = vpack.c.b16 %v1488, %v1487
          %1521 = vmatprep.subr.bf16.mxu0 0
          %1522 = vmatpush1.bf16.msra.mxu0 %v1489
          %1523 = vmatprep.subr.bf16.mxu0 0
          %1524 = vmatpush1.bf16.msra.mxu0 %v1490
          %1525 = vmatprep.subr.bf16.mxu0 0
          %1526 = vmatpush1.bf16.msra.mxu0 %v1491
          %1527 = vmatprep.subr.bf16.mxu0 0
          %1528 = vmatpush1.bf16.msra.mxu0 %v1492
          %1529 = vmatprep.subr.bf16.mxu0 0
          %1530 = vmatpush1.bf16.msra.mxu0 %v1493
          %1531 = vmatprep.subr.bf16.mxu0 0
          %1532 = vmatpush1.bf16.msra.mxu0 %v1494
          %1533 = vmatprep.subr.bf16.mxu0 0
          %1534 = vmatpush1.bf16.msra.mxu0 %v1495
          %1535 = vmatprep.subr.bf16.mxu0 0
          %1536 = vmatpush1.bf16.msra.mxu0 %v1496
          %1537 = vmatprep.subr.bf16.mxu0 0
          %1538 = vmatpush1.bf16.msra.mxu0 %v1497
          %1539 = vmatprep.subr.bf16.mxu0 0
          %1540 = vmatpush1.bf16.msra.mxu0 %v1498
          %1541 = vmatprep.subr.bf16.mxu0 0
          %1542 = vmatpush1.bf16.msra.mxu0 %v1499
          %1543 = vmatprep.subr.bf16.mxu0 0
          %1544 = vmatpush1.bf16.msra.mxu0 %v1500
          %1545 = vmatprep.subr.bf16.mxu0 0
          %1546 = vmatpush1.bf16.msra.mxu0 %v1501
          %1547 = vmatprep.subr.bf16.mxu0 0
          %1548 = vmatpush1.bf16.msra.mxu0 %v1502
          %1549 = vmatprep.subr.bf16.mxu0 0
          %1550 = vmatpush1.bf16.msra.mxu0 %v1503
          %1551 = vmatprep.subr.bf16.mxu0 0
          %1552 = vmatpush1.bf16.msra.mxu0 %v1504
          %1553 = vmatprep.mubr.bf16.mxu0 %v1418
          %1554 = vmatmul.mubr.bf16.gmra.mrb[0].mxu0 %v1417
          %v1555 = vpop.f32.mrb[0].mxu0
          %v1556 = vadd.f32 %v1424, %v1555
          %v1557 = vpop.f32.mrb[0].mxu0
          %v1558 = vpop.f32.mrb[0].mxu0
          %v1559 = vadd.f32 %v1424, %v1558
          %v1560 = vpop.f32.mrb[0].mxu0
          %1561 = vmatprep.mubr.bf16.mxu0 %v1420
          %1562 = vmatmul.mubr.bf16.gmra.mrb[0].mxu0 %v1419
          %v1563 = vpop.f32.mrb[0].mxu0
          %v1564 = vadd.f32 %v1424, %v1563
          %v1565 = vpop.f32.mrb[0].mxu0
          %v1566 = vpop.f32.mrb[0].mxu0
          %v1567 = vadd.f32 %v1424, %v1566
          %v1568 = vpop.f32.mrb[0].mxu0
          %1569 = vdwg.mxu0
          %v1570 = vmul.f32 %v1556, 0.5
          %v1571 = vmul.f32 %v1559, 0.5
          %v1572 = vmul.f32 %v1564, 0.5
          %v1573 = vmul.f32 %v1567, 0.5
          %v1574 = vadd.f32 %v1570, %v1110
          %v1575 = vadd.f32 %v1571, %v1111
          %v1576 = vadd.f32 %v1572, %v1112
          %v1577 = vadd.f32 %v1573, %v1113
          %v1578 = vsel %vm1170, %v1574, 0.0
          %1579 = vadd.xlane.f32.xlu0 %v1578
          %v1580 = vpop.xlane.xlu0 %1579
          %v1581 = vsel %vm1170, %v1575, 0.0
          %1582 = vadd.xlane.f32.xlu0 %v1581
          %v1583 = vpop.xlane.xlu0 %1582
          %v1584 = vsel %vm1170, %v1576, 0.0
          %1585 = vadd.xlane.f32.xlu0 %v1584
          %v1586 = vpop.xlane.xlu0 %1585
          %v1587 = vsel %vm1170, %v1577, 0.0
          %1588 = vadd.xlane.f32.xlu0 %v1587
          %v1589 = vpop.xlane.xlu0 %1588
          %v1590 = vmul.f32 %v1580, %v1183
          %v1591 = vmul.f32 %v1583, %v1183
          %v1592 = vmul.f32 %v1586, %v1183
          %v1593 = vmul.f32 %v1589, %v1183
          %v1594 = vmul.f32 %v1574, %v1574
          %v1595 = vmul.f32 %v1575, %v1575
          %v1596 = vmul.f32 %v1576, %v1576
          %v1597 = vmul.f32 %v1577, %v1577
          %v1598 = vsel %vm1170, %v1594, 0.0
          %1599 = vadd.xlane.f32.xlu0 %v1598
          %v1600 = vpop.xlane.xlu0 %1599
          %v1601 = vsel %vm1170, %v1595, 0.0
          %1602 = vadd.xlane.f32.xlu0 %v1601
          %v1603 = vpop.xlane.xlu0 %1602
          %v1604 = vsel %vm1170, %v1596, 0.0
          %1605 = vadd.xlane.f32.xlu0 %v1604
          %v1606 = vpop.xlane.xlu0 %1605
          %v1607 = vsel %vm1170, %v1597, 0.0
          %1608 = vadd.xlane.f32.xlu0 %v1607
          %v1609 = vpop.xlane.xlu0 %1608
          %v1610 = vmul.f32 %v1600, %v1183
          %v1611 = vmul.f32 %v1603, %v1183
          %v1612 = vmul.f32 %v1606, %v1183
          %v1613 = vmul.f32 %v1609, %v1183
          %v1614 = vmul.f32 %v1590, %v1590
          %v1615 = vmul.f32 %v1591, %v1591
          %v1616 = vmul.f32 %v1592, %v1592
          %v1617 = vmul.f32 %v1593, %v1593
          %v1618 = vsub.f32 %v1610, %v1614
          %v1619 = vsub.f32 %v1611, %v1615
          %v1620 = vsub.f32 %v1612, %v1616
          %v1621 = vsub.f32 %v1613, %v1617
          %v1622 = vmax.f32 %v1618, 0.0
          %v1623 = vmax.f32 %v1619, 0.0
          %v1624 = vmax.f32 %v1620, 0.0
          %v1625 = vmax.f32 %v1621, 0.0
          %v1626 = vsub.f32 %v1574, %v1590
          %v1627 = vsub.f32 %v1575, %v1591
          %v1628 = vsub.f32 %v1576, %v1592
          %v1629 = vsub.f32 %v1577, %v1593
          %v1630 = vadd.f32 %v1622, 1e-05
          %v1631 = vadd.f32 %v1623, 1e-05
          %v1632 = vadd.f32 %v1624, 1e-05
          %v1633 = vadd.f32 %v1625, 1e-05
          %v1634 = vrsqrt.pop %v1630
          %v1635 = vrsqrt.pop %v1631
          %v1636 = vrsqrt.pop %v1632
          %v1637 = vrsqrt.pop %v1633
          %v1638 = vmul.f32 %v1626, %v1634
          %v1639 = vmul.f32 %v1627, %v1635
          %v1640 = vmul.f32 %v1628, %v1636
          %v1641 = vmul.f32 %v1629, %v1637
          %v1642 = vlaneseq
          %v1643 = vshrl.u32 %v1642, 7
          %v1644 = vsub.s32 3, %v1643
          %v1645 = vrot.slane %v1116, %v1644
          %v1646 = vmul.f32 %v1638, %v1645
          %v1647 = vmul.f32 %v1639, %v1645
          %v1648 = vmul.f32 %v1640, %v1645
          %v1649 = vmul.f32 %v1641, %v1645
          %v1650 = vlaneseq
          %v1651 = vshrl.u32 %v1650, 7
          %v1652 = vsub.s32 4, %v1651
          %v1653 = vrot.slane %v1116, %v1652
          %v1654 = vadd.f32 %v1646, %v1653
          %v1655 = vadd.f32 %v1647, %v1653
          %v1656 = vadd.f32 %v1648, %v1653
          %v1657 = vadd.f32 %v1649, %v1653
          %v1658 = vpack.c.bf16 %v1655, %v1654
          %v1659 = vpack.c.bf16 %v1657, %v1656
          %s1660 = smul.u32 %s1105, 8
          %s1661 = smul.addr %s1660, 4
          %s1662 = scalar_lea.vmem %s6, %s1661
          %v1663 = vld [vmem:[%s1662] sm:$0xf]
          %v1664 = vld [vmem:[%s1662 + $0x4] sm:$0xf]
          %v1665 = vld [vmem:[%s1662 + $0x8] sm:$0xf]
          %v1666 = vld [vmem:[%s1662 + $0xc] sm:$0xf]
          %v1667 = vld [vmem:[%s1662 + $0x10] sm:$0xf]
          %v1668 = vld [vmem:[%s1662 + $0x14] sm:$0xf]
          %v1669 = vld [vmem:[%s1662 + $0x18] sm:$0xf]
          %v1670 = vld [vmem:[%s1662 + $0x1c] sm:$0xf]
          %v1671 = vlaneseq
          %v1672 = vshrl.u32 %v1671, 7
          %v1673 = vsub.s32 5, %v1672
          %v1674 = vrot.slane %v1116, %v1673
          %v1683 = vunpack.c.l.b16 %v1663
          %v1684 = vunpack.c.l.b16 %v1664
          %v1685 = vunpack.c.l.b16 %v1665
          %v1686 = vunpack.c.l.b16 %v1666
          %v1687 = vunpack.c.l.b16 %v1667
          %v1688 = vunpack.c.l.b16 %v1668
          %v1689 = vunpack.c.l.b16 %v1669
          %v1690 = vunpack.c.l.b16 %v1670
          %v1691 = vpack.c.b16 %v1684, %v1683
          %v1692 = vpack.c.b16 %v1686, %v1685
          %v1693 = vpack.c.b16 %v1688, %v1687
          %v1694 = vpack.c.b16 %v1690, %v1689
          %v1700 = vsel %vm1170, %v1658, 0
          %v1703 = vsel %vm1170, %v1659, 0
          %1705 = vmatprep.subr.bf16.mxu0 0
          %1706 = vmatpush1.bf16.msra.mxu0 %v1691
          %1707 = vmatprep.subr.bf16.mxu0 0
          %1708 = vmatpush1.bf16.msra.mxu0 %v1692
          %1709 = vmatprep.subr.bf16.mxu0 0
          %1710 = vmatpush1.bf16.msra.mxu0 %v1693
          %1711 = vmatprep.subr.bf16.mxu0 0
          %1712 = vmatpush1.bf16.msra.mxu0 %v1694
          %1713 = vmatprep.subr.bf16.mxu0 0
          %1714 = vmatpush1.bf16.msra.mxu0 0
          %1715 = vmatprep.subr.bf16.mxu0 0
          %1716 = vmatpush1.bf16.msra.mxu0 0
          %1717 = vmatprep.subr.bf16.mxu0 0
          %1718 = vmatpush1.bf16.msra.mxu0 0
          %1719 = vmatprep.subr.bf16.mxu0 0
          %1720 = vmatpush1.bf16.msra.mxu0 0
          %1721 = vmatprep.subr.bf16.mxu0 0
          %1722 = vmatpush1.bf16.msra.mxu0 0
          %1723 = vmatprep.subr.bf16.mxu0 0
          %1724 = vmatpush1.bf16.msra.mxu0 0
          %1725 = vmatprep.subr.bf16.mxu0 0
          %1726 = vmatpush1.bf16.msra.mxu0 0
          %1727 = vmatprep.subr.bf16.mxu0 0
          %1728 = vmatpush1.bf16.msra.mxu0 0
          %1729 = vmatprep.subr.bf16.mxu0 0
          %1730 = vmatpush1.bf16.msra.mxu0 0
          %1731 = vmatprep.subr.bf16.mxu0 0
          %1732 = vmatpush1.bf16.msra.mxu0 0
          %1733 = vmatprep.subr.bf16.mxu0 0
          %1734 = vmatpush1.bf16.msra.mxu0 0
          %1735 = vmatprep.subr.bf16.mxu0 0
          %1736 = vmatpush1.bf16.msra.mxu0 0
          %1737 = vmatprep.mubr.bf16.mxu0 0
          %1738 = vmatmul.mubr.bf16.gmra.mrb[0].mxu0 %v1700
          %v1739 = vpop.f32.mrb[0].mxu0
          %v1740 = vadd.f32 %v1674, %v1739
          %v1741 = vpop.f32.mrb[0].mxu0
          %v1742 = vpop.f32.mrb[0].mxu0
          %v1743 = vadd.f32 %v1674, %v1742
          %v1744 = vpop.f32.mrb[0].mxu0
          %1745 = vmatprep.mubr.bf16.mxu0 0
          %1746 = vmatmul.mubr.bf16.gmra.mrb[0].mxu0 %v1703
          %v1747 = vpop.f32.mrb[0].mxu0
          %v1748 = vadd.f32 %v1674, %v1747
          %v1749 = vpop.f32.mrb[0].mxu0
          %v1750 = vpop.f32.mrb[0].mxu0
          %v1751 = vadd.f32 %v1674, %v1750
          %v1752 = vpop.f32.mrb[0].mxu0
          %1753 = vdwg.mxu0
          %s1754 = smul.addr %s1660, 4
          %s1755 = scalar_lea.vmem %s7, %s1754
          %v1756 = vld [vmem:[%s1755] sm:$0xf]
          %v1757 = vld [vmem:[%s1755 + $0x4] sm:$0xf]
          %v1758 = vld [vmem:[%s1755 + $0x8] sm:$0xf]
          %v1759 = vld [vmem:[%s1755 + $0xc] sm:$0xf]
          %v1760 = vld [vmem:[%s1755 + $0x10] sm:$0xf]
          %v1761 = vld [vmem:[%s1755 + $0x14] sm:$0xf]
          %v1762 = vld [vmem:[%s1755 + $0x18] sm:$0xf]
          %v1763 = vld [vmem:[%s1755 + $0x1c] sm:$0xf]
          %v1764 = vlaneseq
          %v1765 = vshrl.u32 %v1764, 7
          %v1766 = vsub.s32 6, %v1765
          %v1767 = vrot.slane %v1116, %v1766
          %v1776 = vunpack.c.l.b16 %v1756
          %v1777 = vunpack.c.l.b16 %v1757
          %v1778 = vunpack.c.l.b16 %v1758
          %v1779 = vunpack.c.l.b16 %v1759
          %v1780 = vunpack.c.l.b16 %v1760
          %v1781 = vunpack.c.l.b16 %v1761
          %v1782 = vunpack.c.l.b16 %v1762
          %v1783 = vunpack.c.l.b16 %v1763
          %v1784 = vpack.c.b16 %v1777, %v1776
          %v1785 = vpack.c.b16 %v1779, %v1778
          %v1786 = vpack.c.b16 %v1781, %v1780
          %v1787 = vpack.c.b16 %v1783, %v1782
          %1792 = vmatprep.subr.bf16.mxu0 0
          %1793 = vmatpush1.bf16.msra.mxu0 %v1784
          %1794 = vmatprep.subr.bf16.mxu0 0
          %1795 = vmatpush1.bf16.msra.mxu0 %v1785
          %1796 = vmatprep.subr.bf16.mxu0 0
          %1797 = vmatpush1.bf16.msra.mxu0 %v1786
          %1798 = vmatprep.subr.bf16.mxu0 0
          %1799 = vmatpush1.bf16.msra.mxu0 %v1787
          %1800 = vmatprep.subr.bf16.mxu0 0
          %1801 = vmatpush1.bf16.msra.mxu0 0
          %1802 = vmatprep.subr.bf16.mxu0 0
          %1803 = vmatpush1.bf16.msra.mxu0 0
          %1804 = vmatprep.subr.bf16.mxu0 0
          %1805 = vmatpush1.bf16.msra.mxu0 0
          %1806 = vmatprep.subr.bf16.mxu0 0
          %1807 = vmatpush1.bf16.msra.mxu0 0
          %1808 = vmatprep.subr.bf16.mxu0 0
          %1809 = vmatpush1.bf16.msra.mxu0 0
          %1810 = vmatprep.subr.bf16.mxu0 0
          %1811 = vmatpush1.bf16.msra.mxu0 0
          %1812 = vmatprep.subr.bf16.mxu0 0
          %1813 = vmatpush1.bf16.msra.mxu0 0
          %1814 = vmatprep.subr.bf16.mxu0 0
          %1815 = vmatpush1.bf16.msra.mxu0 0
          %1816 = vmatprep.subr.bf16.mxu0 0
          %1817 = vmatpush1.bf16.msra.mxu0 0
          %1818 = vmatprep.subr.bf16.mxu0 0
          %1819 = vmatpush1.bf16.msra.mxu0 0
          %1820 = vmatprep.subr.bf16.mxu0 0
          %1821 = vmatpush1.bf16.msra.mxu0 0
          %1822 = vmatprep.subr.bf16.mxu0 0
          %1823 = vmatpush1.bf16.msra.mxu0 0
          %1824 = vmatprep.mubr.bf16.mxu0 0
          %1825 = vmatmul.mubr.bf16.gmra.mrb[0].mxu0 %v1700
          %v1826 = vpop.f32.mrb[0].mxu0
          %v1827 = vadd.f32 %v1767, %v1826
          %v1828 = vpop.f32.mrb[0].mxu0
          %v1829 = vpop.f32.mrb[0].mxu0
          %v1830 = vadd.f32 %v1767, %v1829
          %v1831 = vpop.f32.mrb[0].mxu0
          %1832 = vmatprep.mubr.bf16.mxu0 0
          %1833 = vmatmul.mubr.bf16.gmra.mrb[0].mxu0 %v1703
          %v1834 = vpop.f32.mrb[0].mxu0
          %v1835 = vadd.f32 %v1767, %v1834
          %v1836 = vpop.f32.mrb[0].mxu0
          %v1837 = vpop.f32.mrb[0].mxu0
          %v1838 = vadd.f32 %v1767, %v1837
          %v1839 = vpop.f32.mrb[0].mxu0
          %1840 = vdwg.mxu0
          %1845 = vrot.lane.b32.xlu0 %v1740, 112
          %v1846 = vpop.permute.xlu0 %1845
          %1847 = vrot.lane.b32.xlu0 %v1743, 112
          %v1848 = vpop.permute.xlu0 %1847
          %1849 = vrot.lane.b32.xlu0 %v1748, 112
          %v1850 = vpop.permute.xlu0 %1849
          %1851 = vrot.lane.b32.xlu0 %v1751, 112
          %v1852 = vpop.permute.xlu0 %1851
          %1857 = vrot.lane.b32.xlu0 %v1740, 96
          %v1858 = vpop.permute.xlu0 %1857
          %1859 = vrot.lane.b32.xlu0 %v1743, 96
          %v1860 = vpop.permute.xlu0 %1859
          %1861 = vrot.lane.b32.xlu0 %v1748, 96
          %v1862 = vpop.permute.xlu0 %1861
          %1863 = vrot.lane.b32.xlu0 %v1751, 96
          %v1864 = vpop.permute.xlu0 %1863
          %1869 = vrot.lane.b32.xlu0 %v1740, 80
          %v1870 = vpop.permute.xlu0 %1869
          %1871 = vrot.lane.b32.xlu0 %v1743, 80
          %v1872 = vpop.permute.xlu0 %1871
          %1873 = vrot.lane.b32.xlu0 %v1748, 80
          %v1874 = vpop.permute.xlu0 %1873
          %1875 = vrot.lane.b32.xlu0 %v1751, 80
          %v1876 = vpop.permute.xlu0 %1875
          %1885 = vrot.lane.b32.xlu0 %v1827, 112
          %v1886 = vpop.permute.xlu0 %1885
          %1887 = vrot.lane.b32.xlu0 %v1830, 112
          %v1888 = vpop.permute.xlu0 %1887
          %1889 = vrot.lane.b32.xlu0 %v1835, 112
          %v1890 = vpop.permute.xlu0 %1889
          %1891 = vrot.lane.b32.xlu0 %v1838, 112
          %v1892 = vpop.permute.xlu0 %1891
          %1897 = vrot.lane.b32.xlu0 %v1827, 96
          %v1898 = vpop.permute.xlu0 %1897
          %1899 = vrot.lane.b32.xlu0 %v1830, 96
          %v1900 = vpop.permute.xlu0 %1899
          %1901 = vrot.lane.b32.xlu0 %v1835, 96
          %v1902 = vpop.permute.xlu0 %1901
          %1903 = vrot.lane.b32.xlu0 %v1838, 96
          %v1904 = vpop.permute.xlu0 %1903
          %1909 = vrot.lane.b32.xlu0 %v1827, 80
          %v1910 = vpop.permute.xlu0 %1909
          %1911 = vrot.lane.b32.xlu0 %v1830, 80
          %v1912 = vpop.permute.xlu0 %1911
          %1913 = vrot.lane.b32.xlu0 %v1835, 80
          %v1914 = vpop.permute.xlu0 %1913
          %1915 = vrot.lane.b32.xlu0 %v1838, 80
          %v1916 = vpop.permute.xlu0 %1915
          %v1921 = vpack.c.bf16 %v1743, %v1740
          %v1922 = vpack.c.bf16 %v1751, %v1748
          %v1923 = vpack.c.bf16 %v1848, %v1846
          %v1924 = vpack.c.bf16 %v1852, %v1850
          %v1925 = vpack.c.bf16 %v1860, %v1858
          %v1926 = vpack.c.bf16 %v1864, %v1862
          %v1927 = vpack.c.bf16 %v1872, %v1870
          %v1928 = vpack.c.bf16 %v1876, %v1874
          %v1929 = vpack.c.bf16 %v1830, %v1827
          %v1930 = vpack.c.bf16 %v1838, %v1835
          %v1931 = vpack.c.bf16 %v1888, %v1886
          %v1932 = vpack.c.bf16 %v1892, %v1890
          %v1933 = vpack.c.bf16 %v1900, %v1898
          %v1934 = vpack.c.bf16 %v1904, %v1902
          %v1935 = vpack.c.bf16 %v1912, %v1910
          %v1936 = vpack.c.bf16 %v1916, %v1914
          %v1938 = vsel %vm550, %v1921, 0
          %v1941 = vsel %vm550, %v1922, 0
          %v1944 = vsel %vm550, %v1923, 0
          %v1947 = vsel %vm550, %v1924, 0
          %v1950 = vsel %vm550, %v1925, 0
          %v1953 = vsel %vm550, %v1926, 0
          %v1956 = vsel %vm550, %v1927, 0
          %v1959 = vsel %vm550, %v1928, 0
          %v1962 = vsel %vm550, %v1929, 0
          %v1965 = vsel %vm550, %v1930, 0
          %v1968 = vsel %vm550, %v1931, 0
          %v1971 = vsel %vm550, %v1932, 0
          %v1974 = vsel %vm550, %v1933, 0
          %v1977 = vsel %vm550, %v1934, 0
          %v1980 = vsel %vm550, %v1935, 0
          %v1983 = vsel %vm550, %v1936, 0
          %1985 = vmatprep.subr.bf16.mxu0 0
          %1986 = vmatpush1.bf16.xpose.msra.mxu0 %v1962
          %1987 = vmatprep.subr.bf16.mxu0 0
          %1988 = vmatpush1.bf16.xpose.msra.mxu0 %v1965
          %1989 = vmatprep.subr.bf16.mxu0 0
          %1990 = vmatpush1.bf16.xpose.msra.mxu0 %v1968
          %1991 = vmatprep.subr.bf16.mxu0 0
          %1992 = vmatpush1.bf16.xpose.msra.mxu0 %v1971
          %1993 = vmatprep.subr.bf16.mxu0 0
          %1994 = vmatpush1.bf16.xpose.msra.mxu0 %v1974
          %1995 = vmatprep.subr.bf16.mxu0 0
          %1996 = vmatpush1.bf16.xpose.msra.mxu0 %v1977
          %1997 = vmatprep.subr.bf16.mxu0 0
          %1998 = vmatpush1.bf16.xpose.msra.mxu0 %v1980
          %1999 = vmatprep.subr.bf16.mxu0 0
          %2000 = vmatpush1.bf16.xpose.msra.mxu0 %v1983
          %2001 = vmatprep.subr.bf16.mxu0 0
          %2002 = vmatpush1.bf16.xpose.msra.mxu0 0
          %2003 = vmatprep.subr.bf16.mxu0 0
          %2004 = vmatpush1.bf16.xpose.msra.mxu0 0
          %2005 = vmatprep.subr.bf16.mxu0 0
          %2006 = vmatpush1.bf16.xpose.msra.mxu0 0
          %2007 = vmatprep.subr.bf16.mxu0 0
          %2008 = vmatpush1.bf16.xpose.msra.mxu0 0
          %2009 = vmatprep.subr.bf16.mxu0 0
          %2010 = vmatpush1.bf16.xpose.msra.mxu0 0
          %2011 = vmatprep.subr.bf16.mxu0 0
          %2012 = vmatpush1.bf16.xpose.msra.mxu0 0
          %2013 = vmatprep.subr.bf16.mxu0 0
          %2014 = vmatpush1.bf16.xpose.msra.mxu0 0
          %2015 = vmatprep.subr.bf16.mxu0 0
          %2016 = vmatpush1.bf16.xpose.msra.mxu0 0
          %2017 = vmatprep.mubr.bf16.mxu0 0
          %2018 = vmatmul.mubr.bf16.gmra.mrb[0].mxu0 %v1938
          %v2019 = vpop.f32.mrb[0].mxu0
          %v2020 = vadd.f32 0.0, %v2019
          %v2021 = vpop.f32.mrb[0].mxu0
          %v2022 = vpop.f32.mrb[0].mxu0
          %v2023 = vadd.f32 0.0, %v2022
          %v2024 = vpop.f32.mrb[0].mxu0
          %2025 = vmatprep.mubr.bf16.mxu0 0
          %2026 = vmatmul.mubr.bf16.gmra.mrb[0].mxu0 %v1941
          %v2027 = vpop.f32.mrb[0].mxu0
          %v2028 = vadd.f32 0.0, %v2027
          %v2029 = vpop.f32.mrb[0].mxu0
          %v2030 = vpop.f32.mrb[0].mxu0
          %v2031 = vadd.f32 0.0, %v2030
          %v2032 = vpop.f32.mrb[0].mxu0
          %2033 = vmatprep.mubr.bf16.mxu0 0
          %2034 = vmatmul.mubr.bf16.gmra.mrb[0].mxu0 %v1944
          %v2035 = vpop.f32.mrb[0].mxu0
          %v2036 = vadd.f32 0.0, %v2035
          %v2037 = vpop.f32.mrb[0].mxu0
          %v2038 = vpop.f32.mrb[0].mxu0
          %v2039 = vadd.f32 0.0, %v2038
          %v2040 = vpop.f32.mrb[0].mxu0
          %2041 = vmatprep.mubr.bf16.mxu0 0
          %2042 = vmatmul.mubr.bf16.gmra.mrb[0].mxu0 %v1947
          %v2043 = vpop.f32.mrb[0].mxu0
          %v2044 = vadd.f32 0.0, %v2043
          %v2045 = vpop.f32.mrb[0].mxu0
          %v2046 = vpop.f32.mrb[0].mxu0
          %v2047 = vadd.f32 0.0, %v2046
          %v2048 = vpop.f32.mrb[0].mxu0
          %2049 = vmatprep.mubr.bf16.mxu0 0
          %2050 = vmatmul.mubr.bf16.gmra.mrb[0].mxu0 %v1950
          %v2051 = vpop.f32.mrb[0].mxu0
          %v2052 = vadd.f32 0.0, %v2051
          %v2053 = vpop.f32.mrb[0].mxu0
          %v2054 = vpop.f32.mrb[0].mxu0
          %v2055 = vadd.f32 0.0, %v2054
          %v2056 = vpop.f32.mrb[0].mxu0
          %2057 = vmatprep.mubr.bf16.mxu0 0
          %2058 = vmatmul.mubr.bf16.gmra.mrb[0].mxu0 %v1953
          %v2059 = vpop.f32.mrb[0].mxu0
          %v2060 = vadd.f32 0.0, %v2059
          %v2061 = vpop.f32.mrb[0].mxu0
          %v2062 = vpop.f32.mrb[0].mxu0
          %v2063 = vadd.f32 0.0, %v2062
          %v2064 = vpop.f32.mrb[0].mxu0
          %2065 = vmatprep.mubr.bf16.mxu0 0
          %2066 = vmatmul.mubr.bf16.gmra.mrb[0].mxu0 %v1956
          %v2067 = vpop.f32.mrb[0].mxu0
          %v2068 = vadd.f32 0.0, %v2067
          %v2069 = vpop.f32.mrb[0].mxu0
          %v2070 = vpop.f32.mrb[0].mxu0
          %v2071 = vadd.f32 0.0, %v2070
          %v2072 = vpop.f32.mrb[0].mxu0
          %2073 = vmatprep.mubr.bf16.mxu0 0
          %2074 = vmatmul.mubr.bf16.gmra.mrb[0].mxu0 %v1959
          %v2075 = vpop.f32.mrb[0].mxu0
          %v2076 = vadd.f32 0.0, %v2075
          %v2077 = vpop.f32.mrb[0].mxu0
          %v2078 = vpop.f32.mrb[0].mxu0
          %v2079 = vadd.f32 0.0, %v2078
          %v2080 = vpop.f32.mrb[0].mxu0
          %2081 = vdwg.mxu0
          %vm2082 = vcmp.ne.f32.partialorder %v920, 0.0
          %vm2083 = vcmp.ne.f32.partialorder %v921, 0.0
          %vm2084 = vcmp.ne.f32.partialorder %v922, 0.0
          %vm2085 = vcmp.ne.f32.partialorder %v923, 0.0
          %vm2086 = vcmp.ne.f32.partialorder %v924, 0.0
          %vm2087 = vcmp.ne.f32.partialorder %v925, 0.0
          %vm2088 = vcmp.ne.f32.partialorder %v926, 0.0
          %vm2089 = vcmp.ne.f32.partialorder %v927, 0.0
          %vm2090 = vcmp.ne.f32.partialorder %v928, 0.0
          %vm2091 = vcmp.ne.f32.partialorder %v929, 0.0
          %vm2092 = vcmp.ne.f32.partialorder %v930, 0.0
          %vm2093 = vcmp.ne.f32.partialorder %v931, 0.0
          %vm2094 = vcmp.ne.f32.partialorder %v932, 0.0
          %vm2095 = vcmp.ne.f32.partialorder %v933, 0.0
          %vm2096 = vcmp.ne.f32.partialorder %v934, 0.0
          %vm2097 = vcmp.ne.f32.partialorder %v935, 0.0
          %v2098 = vsel %vm2082, %v2020, -1e+09
          %v2099 = vsel %vm2083, %v2023, -1e+09
          %v2100 = vsel %vm2084, %v2028, -1e+09
          %v2101 = vsel %vm2085, %v2031, -1e+09
          %v2102 = vsel %vm2086, %v2036, -1e+09
          %v2103 = vsel %vm2087, %v2039, -1e+09
          %v2104 = vsel %vm2088, %v2044, -1e+09
          %v2105 = vsel %vm2089, %v2047, -1e+09
          %v2106 = vsel %vm2090, %v2052, -1e+09
          %v2107 = vsel %vm2091, %v2055, -1e+09
          %v2108 = vsel %vm2092, %v2060, -1e+09
          %v2109 = vsel %vm2093, %v2063, -1e+09
          %v2110 = vsel %vm2094, %v2068, -1e+09
          %v2111 = vsel %vm2095, %v2071, -1e+09
          %v2112 = vsel %vm2096, %v2076, -1e+09
          %v2113 = vsel %vm2097, %v2079, -1e+09
          %2114 = vmax.xlane.f32.xlu0 %v2098
          %v2115 = vpop.xlane.xlu0 %2114
          %2116 = vmax.xlane.f32.xlu0 %v2099
          %v2117 = vpop.xlane.xlu0 %2116
          %2118 = vmax.xlane.f32.xlu0 %v2100
          %v2119 = vpop.xlane.xlu0 %2118
          %2120 = vmax.xlane.f32.xlu0 %v2101
          %v2121 = vpop.xlane.xlu0 %2120
          %2122 = vmax.xlane.f32.xlu0 %v2102
          %v2123 = vpop.xlane.xlu0 %2122
          %2124 = vmax.xlane.f32.xlu0 %v2103
          %v2125 = vpop.xlane.xlu0 %2124
          %2126 = vmax.xlane.f32.xlu0 %v2104
          %v2127 = vpop.xlane.xlu0 %2126
          %2128 = vmax.xlane.f32.xlu0 %v2105
          %v2129 = vpop.xlane.xlu0 %2128
          %2130 = vmax.xlane.f32.xlu0 %v2106
          %v2131 = vpop.xlane.xlu0 %2130
          %2132 = vmax.xlane.f32.xlu0 %v2107
          %v2133 = vpop.xlane.xlu0 %2132
          %2134 = vmax.xlane.f32.xlu0 %v2108
          %v2135 = vpop.xlane.xlu0 %2134
          %2136 = vmax.xlane.f32.xlu0 %v2109
          %v2137 = vpop.xlane.xlu0 %2136
          %2138 = vmax.xlane.f32.xlu0 %v2110
          %v2139 = vpop.xlane.xlu0 %2138
          %2140 = vmax.xlane.f32.xlu0 %v2111
          %v2141 = vpop.xlane.xlu0 %2140
          %2142 = vmax.xlane.f32.xlu0 %v2112
          %v2143 = vpop.xlane.xlu0 %2142
          %2144 = vmax.xlane.f32.xlu0 %v2113
          %v2145 = vpop.xlane.xlu0 %2144
          %v2146 = vsub.f32 %v2098, %v2115
          %v2147 = vsub.f32 %v2099, %v2117
          %v2148 = vsub.f32 %v2100, %v2119
          %v2149 = vsub.f32 %v2101, %v2121
          %v2150 = vsub.f32 %v2102, %v2123
          %v2151 = vsub.f32 %v2103, %v2125
          %v2152 = vsub.f32 %v2104, %v2127
          %v2153 = vsub.f32 %v2105, %v2129
          %v2154 = vsub.f32 %v2106, %v2131
          %v2155 = vsub.f32 %v2107, %v2133
          %v2156 = vsub.f32 %v2108, %v2135
          %v2157 = vsub.f32 %v2109, %v2137
          %v2158 = vsub.f32 %v2110, %v2139
          %v2159 = vsub.f32 %v2111, %v2141
          %v2160 = vsub.f32 %v2112, %v2143
          %v2161 = vsub.f32 %v2113, %v2145
          %v2162 = vmul.f32 %v2146, 1.442695
          %v2163 = vpow.pop %v2162
          %v2164 = vmul.f32 %v2147, 1.442695
          %v2165 = vpow.pop %v2164
          %v2166 = vmul.f32 %v2148, 1.442695
          %v2167 = vpow.pop %v2166
          %v2168 = vmul.f32 %v2149, 1.442695
          %v2169 = vpow.pop %v2168
          %v2170 = vmul.f32 %v2150, 1.442695
          %v2171 = vpow.pop %v2170
          %v2172 = vmul.f32 %v2151, 1.442695
          %v2173 = vpow.pop %v2172
          %v2174 = vmul.f32 %v2152, 1.442695
          %v2175 = vpow.pop %v2174
          %v2176 = vmul.f32 %v2153, 1.442695
          %v2177 = vpow.pop %v2176
          %v2178 = vmul.f32 %v2154, 1.442695
          %v2179 = vpow.pop %v2178
          %v2180 = vmul.f32 %v2155, 1.442695
          %v2181 = vpow.pop %v2180
          %v2182 = vmul.f32 %v2156, 1.442695
          %v2183 = vpow.pop %v2182
          %v2184 = vmul.f32 %v2157, 1.442695
          %v2185 = vpow.pop %v2184
          %v2186 = vmul.f32 %v2158, 1.442695
          %v2187 = vpow.pop %v2186
          %v2188 = vmul.f32 %v2159, 1.442695
          %v2189 = vpow.pop %v2188
          %v2190 = vmul.f32 %v2160, 1.442695
          %v2191 = vpow.pop %v2190
          %v2192 = vmul.f32 %v2161, 1.442695
          %v2193 = vpow.pop %v2192
          %2194 = vadd.xlane.f32.xlu0 %v2163
          %v2195 = vpop.xlane.xlu0 %2194
          %2196 = vadd.xlane.f32.xlu0 %v2165
          %v2197 = vpop.xlane.xlu0 %2196
          %2198 = vadd.xlane.f32.xlu0 %v2167
          %v2199 = vpop.xlane.xlu0 %2198
          %2200 = vadd.xlane.f32.xlu0 %v2169
          %v2201 = vpop.xlane.xlu0 %2200
          %2202 = vadd.xlane.f32.xlu0 %v2171
          %v2203 = vpop.xlane.xlu0 %2202
          %2204 = vadd.xlane.f32.xlu0 %v2173
          %v2205 = vpop.xlane.xlu0 %2204
          %2206 = vadd.xlane.f32.xlu0 %v2175
          %v2207 = vpop.xlane.xlu0 %2206
          %2208 = vadd.xlane.f32.xlu0 %v2177
          %v2209 = vpop.xlane.xlu0 %2208
          %2210 = vadd.xlane.f32.xlu0 %v2179
          %v2211 = vpop.xlane.xlu0 %2210
          %2212 = vadd.xlane.f32.xlu0 %v2181
          %v2213 = vpop.xlane.xlu0 %2212
          %2214 = vadd.xlane.f32.xlu0 %v2183
          %v2215 = vpop.xlane.xlu0 %2214
          %2216 = vadd.xlane.f32.xlu0 %v2185
          %v2217 = vpop.xlane.xlu0 %2216
          %2218 = vadd.xlane.f32.xlu0 %v2187
          %v2219 = vpop.xlane.xlu0 %2218
          %2220 = vadd.xlane.f32.xlu0 %v2189
          %v2221 = vpop.xlane.xlu0 %2220
          %2222 = vadd.xlane.f32.xlu0 %v2191
          %v2223 = vpop.xlane.xlu0 %2222
          %2224 = vadd.xlane.f32.xlu0 %v2193
          %v2225 = vpop.xlane.xlu0 %2224
          %v2226 = vrcp.pop %v2195
          %v2227 = vrcp.pop %v2197
          %v2228 = vrcp.pop %v2199
          %v2229 = vrcp.pop %v2201
          %v2230 = vrcp.pop %v2203
          %v2231 = vrcp.pop %v2205
          %v2232 = vrcp.pop %v2207
          %v2233 = vrcp.pop %v2209
          %v2234 = vrcp.pop %v2211
          %v2235 = vrcp.pop %v2213
          %v2236 = vrcp.pop %v2215
          %v2237 = vrcp.pop %v2217
          %v2238 = vrcp.pop %v2219
          %v2239 = vrcp.pop %v2221
          %v2240 = vrcp.pop %v2223
          %v2241 = vrcp.pop %v2225
          %v2242 = vmul.f32 %v2163, %v2226
          %v2243 = vmul.f32 %v2165, %v2227
          %v2244 = vmul.f32 %v2167, %v2228
          %v2245 = vmul.f32 %v2169, %v2229
          %v2246 = vmul.f32 %v2171, %v2230
          %v2247 = vmul.f32 %v2173, %v2231
          %v2248 = vmul.f32 %v2175, %v2232
          %v2249 = vmul.f32 %v2177, %v2233
          %v2250 = vmul.f32 %v2179, %v2234
          %v2251 = vmul.f32 %v2181, %v2235
          %v2252 = vmul.f32 %v2183, %v2236
          %v2253 = vmul.f32 %v2185, %v2237
          %v2254 = vmul.f32 %v2187, %v2238
          %v2255 = vmul.f32 %v2189, %v2239
          %v2256 = vmul.f32 %v2191, %v2240
          %v2257 = vmul.f32 %v2193, %v2241
          %s2258 = smul.addr %s1135, 4
          %s2259 = scalar_lea.vmem %s8, %s2258
          %v2260 = vld [vmem:[%s2259] sm:$0xf]
          %v2261 = vld [vmem:[%s2259 + $0x4] sm:$0xf]
          %v2262 = vld [vmem:[%s2259 + $0x8] sm:$0xf]
          %v2263 = vld [vmem:[%s2259 + $0xc] sm:$0xf]
          %v2264 = vld [vmem:[%s2259 + $0x10] sm:$0xf]
          %v2265 = vld [vmem:[%s2259 + $0x14] sm:$0xf]
          %v2266 = vld [vmem:[%s2259 + $0x18] sm:$0xf]
          %v2267 = vld [vmem:[%s2259 + $0x1c] sm:$0xf]
          %v2268 = vld [vmem:[%s2259 + $0x20] sm:$0xf]
          %v2269 = vld [vmem:[%s2259 + $0x24] sm:$0xf]
          %v2270 = vld [vmem:[%s2259 + $0x28] sm:$0xf]
          %v2271 = vld [vmem:[%s2259 + $0x2c] sm:$0xf]
          %v2272 = vld [vmem:[%s2259 + $0x30] sm:$0xf]
          %v2273 = vld [vmem:[%s2259 + $0x34] sm:$0xf]
          %v2274 = vld [vmem:[%s2259 + $0x38] sm:$0xf]
          %v2275 = vld [vmem:[%s2259 + $0x3c] sm:$0xf]
          %v2276 = vld [vmem:[%s2259 + $0x40] sm:$0xf]
          %v2277 = vld [vmem:[%s2259 + $0x44] sm:$0xf]
          %v2278 = vld [vmem:[%s2259 + $0x48] sm:$0xf]
          %v2279 = vld [vmem:[%s2259 + $0x4c] sm:$0xf]
          %v2280 = vld [vmem:[%s2259 + $0x50] sm:$0xf]
          %v2281 = vld [vmem:[%s2259 + $0x54] sm:$0xf]
          %v2282 = vld [vmem:[%s2259 + $0x58] sm:$0xf]
          %v2283 = vld [vmem:[%s2259 + $0x5c] sm:$0xf]
          %v2284 = vld [vmem:[%s2259 + $0x60] sm:$0xf]
          %v2285 = vld [vmem:[%s2259 + $0x64] sm:$0xf]
          %v2286 = vld [vmem:[%s2259 + $0x68] sm:$0xf]
          %v2287 = vld [vmem:[%s2259 + $0x6c] sm:$0xf]
          %v2288 = vld [vmem:[%s2259 + $0x70] sm:$0xf]
          %v2289 = vld [vmem:[%s2259 + $0x74] sm:$0xf]
          %v2290 = vld [vmem:[%s2259 + $0x78] sm:$0xf]
          %v2291 = vld [vmem:[%s2259 + $0x7c] sm:$0xf]
          %v2300 = vunpack.c.l.b16 %v2260
          %v2301 = vunpack.c.l.b16 %v2261
          %v2302 = vunpack.c.l.b16 %v2262
          %v2303 = vunpack.c.l.b16 %v2263
          %v2304 = vunpack.c.l.b16 %v2264
          %v2305 = vunpack.c.l.b16 %v2265
          %v2306 = vunpack.c.l.b16 %v2266
          %v2307 = vunpack.c.l.b16 %v2267
          %v2308 = vpack.c.b16 %v2301, %v2300
          %v2309 = vpack.c.b16 %v2303, %v2302
          %v2310 = vpack.c.b16 %v2305, %v2304
          %v2311 = vpack.c.b16 %v2307, %v2306
          %2316 = vmatprep.subr.bf16.mxu0 0
          %2317 = vmatpush1.bf16.msra.mxu0 %v2308
          %2318 = vmatprep.subr.bf16.mxu0 0
          %2319 = vmatpush1.bf16.msra.mxu0 %v2309
          %2320 = vmatprep.subr.bf16.mxu0 0
          %2321 = vmatpush1.bf16.msra.mxu0 %v2310
          %2322 = vmatprep.subr.bf16.mxu0 0
          %2323 = vmatpush1.bf16.msra.mxu0 %v2311
          %2324 = vmatprep.subr.bf16.mxu0 0
          %2325 = vmatpush1.bf16.msra.mxu0 0
          %2326 = vmatprep.subr.bf16.mxu0 0
          %2327 = vmatpush1.bf16.msra.mxu0 0
          %2328 = vmatprep.subr.bf16.mxu0 0
          %2329 = vmatpush1.bf16.msra.mxu0 0
          %2330 = vmatprep.subr.bf16.mxu0 0
          %2331 = vmatpush1.bf16.msra.mxu0 0
          %2332 = vmatprep.subr.bf16.mxu0 0
          %2333 = vmatpush1.bf16.msra.mxu0 0
          %2334 = vmatprep.subr.bf16.mxu0 0
          %2335 = vmatpush1.bf16.msra.mxu0 0
          %2336 = vmatprep.subr.bf16.mxu0 0
          %2337 = vmatpush1.bf16.msra.mxu0 0
          %2338 = vmatprep.subr.bf16.mxu0 0
          %2339 = vmatpush1.bf16.msra.mxu0 0
          %2340 = vmatprep.subr.bf16.mxu0 0
          %2341 = vmatpush1.bf16.msra.mxu0 0
          %2342 = vmatprep.subr.bf16.mxu0 0
          %2343 = vmatpush1.bf16.msra.mxu0 0
          %2344 = vmatprep.subr.bf16.mxu0 0
          %2345 = vmatpush1.bf16.msra.mxu0 0
          %2346 = vmatprep.subr.bf16.mxu0 0
          %2347 = vmatpush1.bf16.msra.mxu0 0
          %2348 = vmatprep.mubr.bf16.mxu0 0
          %2349 = vmatmul.mubr.bf16.gmra.mrb[0].mxu0 %v1700
          %v2350 = vpop.f32.mrb[0].mxu0
          %v2351 = vadd.f32 0.0, %v2350
          %v2352 = vpop.f32.mrb[0].mxu0
          %v2353 = vpop.f32.mrb[0].mxu0
          %v2354 = vadd.f32 0.0, %v2353
          %v2355 = vpop.f32.mrb[0].mxu0
          %2356 = vmatprep.mubr.bf16.mxu0 0
          %2357 = vmatmul.mubr.bf16.gmra.mrb[0].mxu0 %v1703
          %v2358 = vpop.f32.mrb[0].mxu0
          %v2359 = vadd.f32 0.0, %v2358
          %v2360 = vpop.f32.mrb[0].mxu0
          %v2361 = vpop.f32.mrb[0].mxu0
          %v2362 = vadd.f32 0.0, %v2361
          %v2363 = vpop.f32.mrb[0].mxu0
          %2364 = vdwg.mxu0
          %v2373 = vunpack.c.l.b16 %v2268
          %v2374 = vunpack.c.l.b16 %v2269
          %v2375 = vunpack.c.l.b16 %v2270
          %v2376 = vunpack.c.l.b16 %v2271
          %v2377 = vunpack.c.l.b16 %v2272
          %v2378 = vunpack.c.l.b16 %v2273
          %v2379 = vunpack.c.l.b16 %v2274
          %v2380 = vunpack.c.l.b16 %v2275
          %v2381 = vpack.c.b16 %v2374, %v2373
          %v2382 = vpack.c.b16 %v2376, %v2375
          %v2383 = vpack.c.b16 %v2378, %v2377
          %v2384 = vpack.c.b16 %v2380, %v2379
          %2389 = vmatprep.subr.bf16.mxu0 0
          %2390 = vmatpush1.bf16.msra.mxu0 %v2381
          %2391 = vmatprep.subr.bf16.mxu0 0
          %2392 = vmatpush1.bf16.msra.mxu0 %v2382
          %2393 = vmatprep.subr.bf16.mxu0 0
          %2394 = vmatpush1.bf16.msra.mxu0 %v2383
          %2395 = vmatprep.subr.bf16.mxu0 0
          %2396 = vmatpush1.bf16.msra.mxu0 %v2384
          %2397 = vmatprep.subr.bf16.mxu0 0
          %2398 = vmatpush1.bf16.msra.mxu0 0
          %2399 = vmatprep.subr.bf16.mxu0 0
          %2400 = vmatpush1.bf16.msra.mxu0 0
          %2401 = vmatprep.subr.bf16.mxu0 0
          %2402 = vmatpush1.bf16.msra.mxu0 0
          %2403 = vmatprep.subr.bf16.mxu0 0
          %2404 = vmatpush1.bf16.msra.mxu0 0
          %2405 = vmatprep.subr.bf16.mxu0 0
          %2406 = vmatpush1.bf16.msra.mxu0 0
          %2407 = vmatprep.subr.bf16.mxu0 0
          %2408 = vmatpush1.bf16.msra.mxu0 0
          %2409 = vmatprep.subr.bf16.mxu0 0
          %2410 = vmatpush1.bf16.msra.mxu0 0
          %2411 = vmatprep.subr.bf16.mxu0 0
          %2412 = vmatpush1.bf16.msra.mxu0 0
          %2413 = vmatprep.subr.bf16.mxu0 0
          %2414 = vmatpush1.bf16.msra.mxu0 0
          %2415 = vmatprep.subr.bf16.mxu0 0
          %2416 = vmatpush1.bf16.msra.mxu0 0
          %2417 = vmatprep.subr.bf16.mxu0 0
          %2418 = vmatpush1.bf16.msra.mxu0 0
          %2419 = vmatprep.subr.bf16.mxu0 0
          %2420 = vmatpush1.bf16.msra.mxu0 0
          %2421 = vmatprep.mubr.bf16.mxu0 0
          %2422 = vmatmul.mubr.bf16.gmra.mrb[0].mxu0 %v1700
          %v2423 = vpop.f32.mrb[0].mxu0
          %v2424 = vadd.f32 0.0, %v2423
          %v2425 = vpop.f32.mrb[0].mxu0
          %v2426 = vpop.f32.mrb[0].mxu0
          %v2427 = vadd.f32 0.0, %v2426
          %v2428 = vpop.f32.mrb[0].mxu0
          %2429 = vmatprep.mubr.bf16.mxu0 0
          %2430 = vmatmul.mubr.bf16.gmra.mrb[0].mxu0 %v1703
          %v2431 = vpop.f32.mrb[0].mxu0
          %v2432 = vadd.f32 0.0, %v2431
          %v2433 = vpop.f32.mrb[0].mxu0
          %v2434 = vpop.f32.mrb[0].mxu0
          %v2435 = vadd.f32 0.0, %v2434
          %v2436 = vpop.f32.mrb[0].mxu0
          %2437 = vdwg.mxu0
          %v2446 = vunpack.c.l.b16 %v2276
          %v2447 = vunpack.c.l.b16 %v2277
          %v2448 = vunpack.c.l.b16 %v2278
          %v2449 = vunpack.c.l.b16 %v2279
          %v2450 = vunpack.c.l.b16 %v2280
          %v2451 = vunpack.c.l.b16 %v2281
          %v2452 = vunpack.c.l.b16 %v2282
          %v2453 = vunpack.c.l.b16 %v2283
          %v2454 = vpack.c.b16 %v2447, %v2446
          %v2455 = vpack.c.b16 %v2449, %v2448
          %v2456 = vpack.c.b16 %v2451, %v2450
          %v2457 = vpack.c.b16 %v2453, %v2452
          %2462 = vmatprep.subr.bf16.mxu0 0
          %2463 = vmatpush1.bf16.msra.mxu0 %v2454
          %2464 = vmatprep.subr.bf16.mxu0 0
          %2465 = vmatpush1.bf16.msra.mxu0 %v2455
          %2466 = vmatprep.subr.bf16.mxu0 0
          %2467 = vmatpush1.bf16.msra.mxu0 %v2456
          %2468 = vmatprep.subr.bf16.mxu0 0
          %2469 = vmatpush1.bf16.msra.mxu0 %v2457
          %2470 = vmatprep.subr.bf16.mxu0 0
          %2471 = vmatpush1.bf16.msra.mxu0 0
          %2472 = vmatprep.subr.bf16.mxu0 0
          %2473 = vmatpush1.bf16.msra.mxu0 0
          %2474 = vmatprep.subr.bf16.mxu0 0
          %2475 = vmatpush1.bf16.msra.mxu0 0
          %2476 = vmatprep.subr.bf16.mxu0 0
          %2477 = vmatpush1.bf16.msra.mxu0 0
          %2478 = vmatprep.subr.bf16.mxu0 0
          %2479 = vmatpush1.bf16.msra.mxu0 0
          %2480 = vmatprep.subr.bf16.mxu0 0
          %2481 = vmatpush1.bf16.msra.mxu0 0
          %2482 = vmatprep.subr.bf16.mxu0 0
          %2483 = vmatpush1.bf16.msra.mxu0 0
          %2484 = vmatprep.subr.bf16.mxu0 0
          %2485 = vmatpush1.bf16.msra.mxu0 0
          %2486 = vmatprep.subr.bf16.mxu0 0
          %2487 = vmatpush1.bf16.msra.mxu0 0
          %2488 = vmatprep.subr.bf16.mxu0 0
          %2489 = vmatpush1.bf16.msra.mxu0 0
          %2490 = vmatprep.subr.bf16.mxu0 0
          %2491 = vmatpush1.bf16.msra.mxu0 0
          %2492 = vmatprep.subr.bf16.mxu0 0
          %2493 = vmatpush1.bf16.msra.mxu0 0
          %2494 = vmatprep.mubr.bf16.mxu0 0
          %2495 = vmatmul.mubr.bf16.gmra.mrb[0].mxu0 %v1700
          %v2496 = vpop.f32.mrb[0].mxu0
          %v2497 = vadd.f32 0.0, %v2496
          %v2498 = vpop.f32.mrb[0].mxu0
          %v2499 = vpop.f32.mrb[0].mxu0
          %v2500 = vadd.f32 0.0, %v2499
          %v2501 = vpop.f32.mrb[0].mxu0
          %2502 = vmatprep.mubr.bf16.mxu0 0
          %2503 = vmatmul.mubr.bf16.gmra.mrb[0].mxu0 %v1703
          %v2504 = vpop.f32.mrb[0].mxu0
          %v2505 = vadd.f32 0.0, %v2504
          %v2506 = vpop.f32.mrb[0].mxu0
          %v2507 = vpop.f32.mrb[0].mxu0
          %v2508 = vadd.f32 0.0, %v2507
          %v2509 = vpop.f32.mrb[0].mxu0
          %2510 = vdwg.mxu0
          %v2519 = vunpack.c.l.b16 %v2284
          %v2520 = vunpack.c.l.b16 %v2285
          %v2521 = vunpack.c.l.b16 %v2286
          %v2522 = vunpack.c.l.b16 %v2287
          %v2523 = vunpack.c.l.b16 %v2288
          %v2524 = vunpack.c.l.b16 %v2289
          %v2525 = vunpack.c.l.b16 %v2290
          %v2526 = vunpack.c.l.b16 %v2291
          %v2527 = vpack.c.b16 %v2520, %v2519
          %v2528 = vpack.c.b16 %v2522, %v2521
          %v2529 = vpack.c.b16 %v2524, %v2523
          %v2530 = vpack.c.b16 %v2526, %v2525
          %2535 = vmatprep.subr.bf16.mxu0 0
          %2536 = vmatpush1.bf16.msra.mxu0 %v2527
          %2537 = vmatprep.subr.bf16.mxu0 0
          %2538 = vmatpush1.bf16.msra.mxu0 %v2528
          %2539 = vmatprep.subr.bf16.mxu0 0
          %2540 = vmatpush1.bf16.msra.mxu0 %v2529
          %2541 = vmatprep.subr.bf16.mxu0 0
          %2542 = vmatpush1.bf16.msra.mxu0 %v2530
          %2543 = vmatprep.subr.bf16.mxu0 0
          %2544 = vmatpush1.bf16.msra.mxu0 0
          %2545 = vmatprep.subr.bf16.mxu0 0
          %2546 = vmatpush1.bf16.msra.mxu0 0
          %2547 = vmatprep.subr.bf16.mxu0 0
          %2548 = vmatpush1.bf16.msra.mxu0 0
          %2549 = vmatprep.subr.bf16.mxu0 0
          %2550 = vmatpush1.bf16.msra.mxu0 0
          %2551 = vmatprep.subr.bf16.mxu0 0
          %2552 = vmatpush1.bf16.msra.mxu0 0
          %2553 = vmatprep.subr.bf16.mxu0 0
          %2554 = vmatpush1.bf16.msra.mxu0 0
          %2555 = vmatprep.subr.bf16.mxu0 0
          %2556 = vmatpush1.bf16.msra.mxu0 0
          %2557 = vmatprep.subr.bf16.mxu0 0
          %2558 = vmatpush1.bf16.msra.mxu0 0
          %2559 = vmatprep.subr.bf16.mxu0 0
          %2560 = vmatpush1.bf16.msra.mxu0 0
          %2561 = vmatprep.subr.bf16.mxu0 0
          %2562 = vmatpush1.bf16.msra.mxu0 0
          %2563 = vmatprep.subr.bf16.mxu0 0
          %2564 = vmatpush1.bf16.msra.mxu0 0
          %2565 = vmatprep.subr.bf16.mxu0 0
          %2566 = vmatpush1.bf16.msra.mxu0 0
          %2567 = vmatprep.mubr.bf16.mxu0 0
          %2568 = vmatmul.mubr.bf16.gmra.mrb[0].mxu0 %v1700
          %v2569 = vpop.f32.mrb[0].mxu0
          %v2570 = vadd.f32 0.0, %v2569
          %v2571 = vpop.f32.mrb[0].mxu0
          %v2572 = vpop.f32.mrb[0].mxu0
          %v2573 = vadd.f32 0.0, %v2572
          %v2574 = vpop.f32.mrb[0].mxu0
          %2575 = vmatprep.mubr.bf16.mxu0 0
          %2576 = vmatmul.mubr.bf16.gmra.mrb[0].mxu0 %v1703
          %v2577 = vpop.f32.mrb[0].mxu0
          %v2578 = vadd.f32 0.0, %v2577
          %v2579 = vpop.f32.mrb[0].mxu0
          %v2580 = vpop.f32.mrb[0].mxu0
          %v2581 = vadd.f32 0.0, %v2580
          %v2582 = vpop.f32.mrb[0].mxu0
          %2583 = vdwg.mxu0
          %v2584 = vpack.c.bf16 %v2243, %v2242
          %v2585 = vpack.c.bf16 %v2245, %v2244
          %v2586 = vpack.c.bf16 %v2247, %v2246
          %v2587 = vpack.c.bf16 %v2249, %v2248
          %v2588 = vpack.c.bf16 %v2251, %v2250
          %v2589 = vpack.c.bf16 %v2253, %v2252
          %v2590 = vpack.c.bf16 %v2255, %v2254
          %v2591 = vpack.c.bf16 %v2257, %v2256
          %v2592 = vpack.c.bf16 %v2354, %v2351
          %v2593 = vpack.c.bf16 %v2362, %v2359
          %v2594 = vpack.c.bf16 %v2427, %v2424
          %v2595 = vpack.c.bf16 %v2435, %v2432
          %v2596 = vpack.c.bf16 %v2500, %v2497
          %v2597 = vpack.c.bf16 %v2508, %v2505
          %v2598 = vpack.c.bf16 %v2573, %v2570
          %v2599 = vpack.c.bf16 %v2581, %v2578
          %2600 = vmatprep.subr.bf16.mxu0 0
          %2601 = vmatpush1.bf16.msra.mxu0 %v2592
          %2602 = vmatprep.subr.bf16.mxu0 0
          %2603 = vmatpush1.bf16.msra.mxu0 %v2593
          %2604 = vmatprep.subr.bf16.mxu0 0
          %2605 = vmatpush1.bf16.msra.mxu0 %v2594
          %2606 = vmatprep.subr.bf16.mxu0 0
          %2607 = vmatpush1.bf16.msra.mxu0 %v2595
          %2608 = vmatprep.subr.bf16.mxu0 0
          %2609 = vmatpush1.bf16.msra.mxu0 %v2596
          %2610 = vmatprep.subr.bf16.mxu0 0
          %2611 = vmatpush1.bf16.msra.mxu0 %v2597
          %2612 = vmatprep.subr.bf16.mxu0 0
          %2613 = vmatpush1.bf16.msra.mxu0 %v2598
          %2614 = vmatprep.subr.bf16.mxu0 0
          %2615 = vmatpush1.bf16.msra.mxu0 %v2599
          %2616 = vmatprep.subr.bf16.mxu0 0
          %2617 = vmatpush1.bf16.msra.mxu0 0
          %2618 = vmatprep.subr.bf16.mxu0 0
          %2619 = vmatpush1.bf16.msra.mxu0 0
          %2620 = vmatprep.subr.bf16.mxu0 0
          %2621 = vmatpush1.bf16.msra.mxu0 0
          %2622 = vmatprep.subr.bf16.mxu0 0
          %2623 = vmatpush1.bf16.msra.mxu0 0
          %2624 = vmatprep.subr.bf16.mxu0 0
          %2625 = vmatpush1.bf16.msra.mxu0 0
          %2626 = vmatprep.subr.bf16.mxu0 0
          %2627 = vmatpush1.bf16.msra.mxu0 0
          %2628 = vmatprep.subr.bf16.mxu0 0
          %2629 = vmatpush1.bf16.msra.mxu0 0
          %2630 = vmatprep.subr.bf16.mxu0 0
          %2631 = vmatpush1.bf16.msra.mxu0 0
          %2632 = vmatprep.mubr.bf16.mxu0 0
          %2633 = vmatmul.mubr.bf16.gmra.mrb[0].mxu0 %v2584
          %v2634 = vpop.f32.mrb[0].mxu0
          %v2635 = vadd.f32 0.0, %v2634
          %v2636 = vpop.f32.mrb[0].mxu0
          %v2637 = vpop.f32.mrb[0].mxu0
          %v2638 = vadd.f32 0.0, %v2637
          %v2639 = vpop.f32.mrb[0].mxu0
          %2640 = vmatprep.mubr.bf16.mxu0 0
          %2641 = vmatmul.mubr.bf16.gmra.mrb[0].mxu0 %v2585
          %v2642 = vpop.f32.mrb[0].mxu0
          %v2643 = vadd.f32 0.0, %v2642
          %v2644 = vpop.f32.mrb[0].mxu0
          %v2645 = vpop.f32.mrb[0].mxu0
          %v2646 = vadd.f32 0.0, %v2645
          %v2647 = vpop.f32.mrb[0].mxu0
          %2648 = vmatprep.mubr.bf16.mxu0 0
          %2649 = vmatmul.mubr.bf16.gmra.mrb[0].mxu0 %v2586
          %v2650 = vpop.f32.mrb[0].mxu0
          %v2651 = vadd.f32 0.0, %v2650
          %v2652 = vpop.f32.mrb[0].mxu0
          %v2653 = vpop.f32.mrb[0].mxu0
          %v2654 = vadd.f32 0.0, %v2653
          %v2655 = vpop.f32.mrb[0].mxu0
          %2656 = vmatprep.mubr.bf16.mxu0 0
          %2657 = vmatmul.mubr.bf16.gmra.mrb[0].mxu0 %v2587
          %v2658 = vpop.f32.mrb[0].mxu0
          %v2659 = vadd.f32 0.0, %v2658
          %v2660 = vpop.f32.mrb[0].mxu0
          %v2661 = vpop.f32.mrb[0].mxu0
          %v2662 = vadd.f32 0.0, %v2661
          %v2663 = vpop.f32.mrb[0].mxu0
          %2664 = vmatprep.mubr.bf16.mxu0 0
          %2665 = vmatmul.mubr.bf16.gmra.mrb[0].mxu0 %v2588
          %v2666 = vpop.f32.mrb[0].mxu0
          %v2667 = vadd.f32 0.0, %v2666
          %v2668 = vpop.f32.mrb[0].mxu0
          %v2669 = vpop.f32.mrb[0].mxu0
          %v2670 = vadd.f32 0.0, %v2669
          %v2671 = vpop.f32.mrb[0].mxu0
          %2672 = vmatprep.mubr.bf16.mxu0 0
          %2673 = vmatmul.mubr.bf16.gmra.mrb[0].mxu0 %v2589
          %v2674 = vpop.f32.mrb[0].mxu0
          %v2675 = vadd.f32 0.0, %v2674
          %v2676 = vpop.f32.mrb[0].mxu0
          %v2677 = vpop.f32.mrb[0].mxu0
          %v2678 = vadd.f32 0.0, %v2677
          %v2679 = vpop.f32.mrb[0].mxu0
          %2680 = vmatprep.mubr.bf16.mxu0 0
          %2681 = vmatmul.mubr.bf16.gmra.mrb[0].mxu0 %v2590
          %v2682 = vpop.f32.mrb[0].mxu0
          %v2683 = vadd.f32 0.0, %v2682
          %v2684 = vpop.f32.mrb[0].mxu0
          %v2685 = vpop.f32.mrb[0].mxu0
          %v2686 = vadd.f32 0.0, %v2685
          %v2687 = vpop.f32.mrb[0].mxu0
          %2688 = vmatprep.mubr.bf16.mxu0 0
          %2689 = vmatmul.mubr.bf16.gmra.mrb[0].mxu0 %v2591
          %v2690 = vpop.f32.mrb[0].mxu0
          %v2691 = vadd.f32 0.0, %v2690
          %v2692 = vpop.f32.mrb[0].mxu0
          %v2693 = vpop.f32.mrb[0].mxu0
          %v2694 = vadd.f32 0.0, %v2693
          %v2695 = vpop.f32.mrb[0].mxu0
          %2696 = vdwg.mxu0
          %v2697 = vadd.f32 %v2635, %v2651
          %v2698 = vadd.f32 %v2638, %v2654
          %v2699 = vadd.f32 %v2643, %v2659
          %v2700 = vadd.f32 %v2646, %v2662
          %v2701 = vadd.f32 %v2697, %v2667
          %v2702 = vadd.f32 %v2698, %v2670
          %v2703 = vadd.f32 %v2699, %v2675
          %v2704 = vadd.f32 %v2700, %v2678
          %v2705 = vadd.f32 %v2701, %v2683
          %v2706 = vadd.f32 %v2702, %v2686
          %v2707 = vadd.f32 %v2703, %v2691
          %v2708 = vadd.f32 %v2704, %v2694
          %v2709 = vlaneseq
          %v2710 = vshrl.u32 %v2709, 7
          %v2711 = vsub.s32 7, %v2710
          %v2712 = vrot.slane %v1116, %v2711
          %v2713 = vadd.f32 %v2705, %v2712
          %v2714 = vadd.f32 %v2706, %v2712
          %v2715 = vadd.f32 %v2707, %v2712
          %v2716 = vadd.f32 %v2708, %v2712
          %v2717 = vadd.f32 %v2713, %v1574
          %v2718 = vadd.f32 %v2714, %v1575
          %v2719 = vadd.f32 %v2715, %v1576
          %v2720 = vadd.f32 %v2716, %v1577
          %v2721 = vmul.f32 %v2717, %v676
          %v2722 = vmul.f32 %v2718, %v677
          %v2723 = vmul.f32 %v2719, %v678
          %v2724 = vmul.f32 %v2720, %v679
          %v2725 = vsel %vm1170, %v2721, 0.0
          %2726 = vadd.xlane.f32.xlu0 %v2725
          %v2727 = vpop.xlane.xlu0 %2726
          %v2728 = vsel %vm1170, %v2722, 0.0
          %2729 = vadd.xlane.f32.xlu0 %v2728
          %v2730 = vpop.xlane.xlu0 %2729
          %v2731 = vsel %vm1170, %v2723, 0.0
          %2732 = vadd.xlane.f32.xlu0 %v2731
          %v2733 = vpop.xlane.xlu0 %2732
          %v2734 = vsel %vm1170, %v2724, 0.0
          %2735 = vadd.xlane.f32.xlu0 %v2734
          %v2736 = vpop.xlane.xlu0 %2735
          %v2737 = vmul.f32 %v2727, %v1183
          %v2738 = vmul.f32 %v2730, %v1183
          %v2739 = vmul.f32 %v2733, %v1183
          %v2740 = vmul.f32 %v2736, %v1183
          %v2741 = vmul.f32 %v2721, %v2721
          %v2742 = vmul.f32 %v2722, %v2722
          %v2743 = vmul.f32 %v2723, %v2723
          %v2744 = vmul.f32 %v2724, %v2724
          %v2745 = vsel %vm1170, %v2741, 0.0
          %2746 = vadd.xlane.f32.xlu0 %v2745
          %v2747 = vpop.xlane.xlu0 %2746
          %v2748 = vsel %vm1170, %v2742, 0.0
          %2749 = vadd.xlane.f32.xlu0 %v2748
          %v2750 = vpop.xlane.xlu0 %2749
          %v2751 = vsel %vm1170, %v2743, 0.0
          %2752 = vadd.xlane.f32.xlu0 %v2751
          %v2753 = vpop.xlane.xlu0 %2752
          %v2754 = vsel %vm1170, %v2744, 0.0
          %2755 = vadd.xlane.f32.xlu0 %v2754
          %v2756 = vpop.xlane.xlu0 %2755
          %v2757 = vmul.f32 %v2747, %v1183
          %v2758 = vmul.f32 %v2750, %v1183
          %v2759 = vmul.f32 %v2753, %v1183
          %v2760 = vmul.f32 %v2756, %v1183
          %v2761 = vmul.f32 %v2737, %v2737
          %v2762 = vmul.f32 %v2738, %v2738
          %v2763 = vmul.f32 %v2739, %v2739
          %v2764 = vmul.f32 %v2740, %v2740
          %v2765 = vsub.f32 %v2757, %v2761
          %v2766 = vsub.f32 %v2758, %v2762
          %v2767 = vsub.f32 %v2759, %v2763
          %v2768 = vsub.f32 %v2760, %v2764
          %v2769 = vmax.f32 %v2765, 0.0
          %v2770 = vmax.f32 %v2766, 0.0
          %v2771 = vmax.f32 %v2767, 0.0
          %v2772 = vmax.f32 %v2768, 0.0
          %v2773 = vsub.f32 %v2721, %v2737
          %v2774 = vsub.f32 %v2722, %v2738
          %v2775 = vsub.f32 %v2723, %v2739
          %v2776 = vsub.f32 %v2724, %v2740
          %v2777 = vadd.f32 %v2769, 1e-05
          %v2778 = vadd.f32 %v2770, 1e-05
          %v2779 = vadd.f32 %v2771, 1e-05
          %v2780 = vadd.f32 %v2772, 1e-05
          %v2781 = vrsqrt.pop %v2777
          %v2782 = vrsqrt.pop %v2778
          %v2783 = vrsqrt.pop %v2779
          %v2784 = vrsqrt.pop %v2780
          %v2785 = vmul.f32 %v2773, %v2781
          %v2786 = vmul.f32 %v2774, %v2782
          %v2787 = vmul.f32 %v2775, %v2783
          %v2788 = vmul.f32 %v2776, %v2784
          %v2789 = vlaneseq
          %v2790 = vshrl.u32 %v2789, 7
          %v2791 = vsub.s32 0, %v2790
          %v2792 = vrot.slane %v1117, %v2791
          %v2793 = vmul.f32 %v2785, %v2792
          %v2794 = vmul.f32 %v2786, %v2792
          %v2795 = vmul.f32 %v2787, %v2792
          %v2796 = vmul.f32 %v2788, %v2792
          %v2797 = vlaneseq
          %v2798 = vshrl.u32 %v2797, 7
          %v2799 = vsub.s32 1, %v2798
          %v2800 = vrot.slane %v1117, %v2799
          %v2801 = vadd.f32 %v2793, %v2800
          %v2802 = vadd.f32 %v2794, %v2800
          %v2803 = vadd.f32 %v2795, %v2800
          %v2804 = vadd.f32 %v2796, %v2800
          %v2805 = vpack.c.bf16 %v2802, %v2801
          %v2806 = vpack.c.bf16 %v2804, %v2803
          %s2807 = smul.addr %s1660, 4
          %s2808 = scalar_lea.vmem %s9, %s2807
          %v2809 = vld [vmem:[%s2808] sm:$0xf]
          %v2810 = vld [vmem:[%s2808 + $0x4] sm:$0xf]
          %v2811 = vld [vmem:[%s2808 + $0x8] sm:$0xf]
          %v2812 = vld [vmem:[%s2808 + $0xc] sm:$0xf]
          %v2813 = vld [vmem:[%s2808 + $0x10] sm:$0xf]
          %v2814 = vld [vmem:[%s2808 + $0x14] sm:$0xf]
          %v2815 = vld [vmem:[%s2808 + $0x18] sm:$0xf]
          %v2816 = vld [vmem:[%s2808 + $0x1c] sm:$0xf]
          %v2817 = vlaneseq
          %v2818 = vshrl.u32 %v2817, 7
          %v2819 = vsub.s32 2, %v2818
          %v2820 = vrot.slane %v1117, %v2819
          %v2829 = vunpack.c.l.b16 %v2809
          %v2830 = vunpack.c.l.b16 %v2810
          %v2831 = vunpack.c.l.b16 %v2811
          %v2832 = vunpack.c.l.b16 %v2812
          %v2833 = vunpack.c.l.b16 %v2813
          %v2834 = vunpack.c.l.b16 %v2814
          %v2835 = vunpack.c.l.b16 %v2815
          %v2836 = vunpack.c.l.b16 %v2816
          %v2837 = vpack.c.b16 %v2830, %v2829
          %v2838 = vpack.c.b16 %v2832, %v2831
          %v2839 = vpack.c.b16 %v2834, %v2833
          %v2840 = vpack.c.b16 %v2836, %v2835
          %v2846 = vsel %vm1170, %v2805, 0
          %v2849 = vsel %vm1170, %v2806, 0
          %2851 = vmatprep.subr.bf16.mxu0 0
          %2852 = vmatpush1.bf16.msra.mxu0 %v2837
          %2853 = vmatprep.subr.bf16.mxu0 0
          %2854 = vmatpush1.bf16.msra.mxu0 %v2838
          %2855 = vmatprep.subr.bf16.mxu0 0
          %2856 = vmatpush1.bf16.msra.mxu0 %v2839
          %2857 = vmatprep.subr.bf16.mxu0 0
          %2858 = vmatpush1.bf16.msra.mxu0 %v2840
          %2859 = vmatprep.subr.bf16.mxu0 0
          %2860 = vmatpush1.bf16.msra.mxu0 0
          %2861 = vmatprep.subr.bf16.mxu0 0
          %2862 = vmatpush1.bf16.msra.mxu0 0
          %2863 = vmatprep.subr.bf16.mxu0 0
          %2864 = vmatpush1.bf16.msra.mxu0 0
          %2865 = vmatprep.subr.bf16.mxu0 0
          %2866 = vmatpush1.bf16.msra.mxu0 0
          %2867 = vmatprep.subr.bf16.mxu0 0
          %2868 = vmatpush1.bf16.msra.mxu0 0
          %2869 = vmatprep.subr.bf16.mxu0 0
          %2870 = vmatpush1.bf16.msra.mxu0 0
          %2871 = vmatprep.subr.bf16.mxu0 0
          %2872 = vmatpush1.bf16.msra.mxu0 0
          %2873 = vmatprep.subr.bf16.mxu0 0
          %2874 = vmatpush1.bf16.msra.mxu0 0
          %2875 = vmatprep.subr.bf16.mxu0 0
          %2876 = vmatpush1.bf16.msra.mxu0 0
          %2877 = vmatprep.subr.bf16.mxu0 0
          %2878 = vmatpush1.bf16.msra.mxu0 0
          %2879 = vmatprep.subr.bf16.mxu0 0
          %2880 = vmatpush1.bf16.msra.mxu0 0
          %2881 = vmatprep.subr.bf16.mxu0 0
          %2882 = vmatpush1.bf16.msra.mxu0 0
          %2883 = vmatprep.mubr.bf16.mxu0 0
          %2884 = vmatmul.mubr.bf16.gmra.mrb[0].mxu0 %v2846
          %v2885 = vpop.f32.mrb[0].mxu0
          %v2886 = vadd.f32 %v2820, %v2885
          %v2887 = vpop.f32.mrb[0].mxu0
          %v2888 = vpop.f32.mrb[0].mxu0
          %v2889 = vadd.f32 %v2820, %v2888
          %v2890 = vpop.f32.mrb[0].mxu0
          %2891 = vmatprep.mubr.bf16.mxu0 0
          %2892 = vmatmul.mubr.bf16.gmra.mrb[0].mxu0 %v2849
          %v2893 = vpop.f32.mrb[0].mxu0
          %v2894 = vadd.f32 %v2820, %v2893
          %v2895 = vpop.f32.mrb[0].mxu0
          %v2896 = vpop.f32.mrb[0].mxu0
          %v2897 = vadd.f32 %v2820, %v2896
          %v2898 = vpop.f32.mrb[0].mxu0
          %2899 = vdwg.mxu0
          %s2900 = smul.addr %s1660, 4
          %s2901 = scalar_lea.vmem %s10, %s2900
          %v2902 = vld [vmem:[%s2901] sm:$0xf]
          %v2903 = vld [vmem:[%s2901 + $0x4] sm:$0xf]
          %v2904 = vld [vmem:[%s2901 + $0x8] sm:$0xf]
          %v2905 = vld [vmem:[%s2901 + $0xc] sm:$0xf]
          %v2906 = vld [vmem:[%s2901 + $0x10] sm:$0xf]
          %v2907 = vld [vmem:[%s2901 + $0x14] sm:$0xf]
          %v2908 = vld [vmem:[%s2901 + $0x18] sm:$0xf]
          %v2909 = vld [vmem:[%s2901 + $0x1c] sm:$0xf]
          %v2910 = vlaneseq
          %v2911 = vshrl.u32 %v2910, 7
          %v2912 = vsub.s32 3, %v2911
          %v2913 = vrot.slane %v1117, %v2912
          %v2922 = vunpack.c.l.b16 %v2902
          %v2923 = vunpack.c.l.b16 %v2903
          %v2924 = vunpack.c.l.b16 %v2904
          %v2925 = vunpack.c.l.b16 %v2905
          %v2926 = vunpack.c.l.b16 %v2906
          %v2927 = vunpack.c.l.b16 %v2907
          %v2928 = vunpack.c.l.b16 %v2908
          %v2929 = vunpack.c.l.b16 %v2909
          %v2930 = vpack.c.b16 %v2923, %v2922
          %v2931 = vpack.c.b16 %v2925, %v2924
          %v2932 = vpack.c.b16 %v2927, %v2926
          %v2933 = vpack.c.b16 %v2929, %v2928
          %2938 = vmatprep.subr.bf16.mxu0 0
          %2939 = vmatpush1.bf16.msra.mxu0 %v2930
          %2940 = vmatprep.subr.bf16.mxu0 0
          %2941 = vmatpush1.bf16.msra.mxu0 %v2931
          %2942 = vmatprep.subr.bf16.mxu0 0
          %2943 = vmatpush1.bf16.msra.mxu0 %v2932
          %2944 = vmatprep.subr.bf16.mxu0 0
          %2945 = vmatpush1.bf16.msra.mxu0 %v2933
          %2946 = vmatprep.subr.bf16.mxu0 0
          %2947 = vmatpush1.bf16.msra.mxu0 0
          %2948 = vmatprep.subr.bf16.mxu0 0
          %2949 = vmatpush1.bf16.msra.mxu0 0
          %2950 = vmatprep.subr.bf16.mxu0 0
          %2951 = vmatpush1.bf16.msra.mxu0 0
          %2952 = vmatprep.subr.bf16.mxu0 0
          %2953 = vmatpush1.bf16.msra.mxu0 0
          %2954 = vmatprep.subr.bf16.mxu0 0
          %2955 = vmatpush1.bf16.msra.mxu0 0
          %2956 = vmatprep.subr.bf16.mxu0 0
          %2957 = vmatpush1.bf16.msra.mxu0 0
          %2958 = vmatprep.subr.bf16.mxu0 0
          %2959 = vmatpush1.bf16.msra.mxu0 0
          %2960 = vmatprep.subr.bf16.mxu0 0
          %2961 = vmatpush1.bf16.msra.mxu0 0
          %2962 = vmatprep.subr.bf16.mxu0 0
          %2963 = vmatpush1.bf16.msra.mxu0 0
          %2964 = vmatprep.subr.bf16.mxu0 0
          %2965 = vmatpush1.bf16.msra.mxu0 0
          %2966 = vmatprep.subr.bf16.mxu0 0
          %2967 = vmatpush1.bf16.msra.mxu0 0
          %2968 = vmatprep.subr.bf16.mxu0 0
          %2969 = vmatpush1.bf16.msra.mxu0 0
          %2970 = vmatprep.mubr.bf16.mxu0 0
          %2971 = vmatmul.mubr.bf16.gmra.mrb[0].mxu0 %v2846
          %v2972 = vpop.f32.mrb[0].mxu0
          %v2973 = vadd.f32 %v2913, %v2972
          %v2974 = vpop.f32.mrb[0].mxu0
          %v2975 = vpop.f32.mrb[0].mxu0
          %v2976 = vadd.f32 %v2913, %v2975
          %v2977 = vpop.f32.mrb[0].mxu0
          %2978 = vmatprep.mubr.bf16.mxu0 0
          %2979 = vmatmul.mubr.bf16.gmra.mrb[0].mxu0 %v2849
          %v2980 = vpop.f32.mrb[0].mxu0
          %v2981 = vadd.f32 %v2913, %v2980
          %v2982 = vpop.f32.mrb[0].mxu0
          %v2983 = vpop.f32.mrb[0].mxu0
          %v2984 = vadd.f32 %v2913, %v2983
          %v2985 = vpop.f32.mrb[0].mxu0
          %2986 = vdwg.mxu0
          %v2987 = vxor.u32 %v2973, 2147483648
          %v2988 = vxor.u32 %v2976, 2147483648
          %v2989 = vxor.u32 %v2981, 2147483648
          %v2990 = vxor.u32 %v2984, 2147483648
          %v2991 = vmul.f32 %v2987, 1.442695
          %v2992 = vpow.pop %v2991
          %v2993 = vmul.f32 %v2988, 1.442695
          %v2994 = vpow.pop %v2993
          %v2995 = vmul.f32 %v2989, 1.442695
          %v2996 = vpow.pop %v2995
          %v2997 = vmul.f32 %v2990, 1.442695
          %v2998 = vpow.pop %v2997
          %v2999 = vadd.f32 %v2992, 1.0
          %v3000 = vadd.f32 %v2994, 1.0
          %v3001 = vadd.f32 %v2996, 1.0
          %v3002 = vadd.f32 %v2998, 1.0
          %v3003 = vrcp.pop %v2999
          %v3004 = vmul.f32 1.0, %v3003
          %v3005 = vrcp.pop %v3000
          %v3006 = vmul.f32 1.0, %v3005
          %v3007 = vrcp.pop %v3001
          %v3008 = vmul.f32 1.0, %v3007
          %v3009 = vrcp.pop %v3002
          %v3010 = vmul.f32 1.0, %v3009
          %v3011 = vmul.f32 %v2886, %v3004
          %v3012 = vmul.f32 %v2889, %v3006
          %v3013 = vmul.f32 %v2894, %v3008
          %v3014 = vmul.f32 %v2897, %v3010
          %s3015 = scalar_lea.vmem %s12, %s1660
          %v3016 = vld [vmem:[%s3015] sm:$0xff]
          %v3017 = vlaneseq
          %v3018 = vshrl.u32 %v3017, 7
          %v3019 = vsub.s32 0, %v3018
          %v3020 = vrot.slane %v3016, %v3019
          %v3021 = vmul.f32 %v960, %v3020
          %v3022 = vmul.f32 %v961, %v3020
          %v3023 = vmul.f32 %v962, %v3020
          %v3024 = vmul.f32 %v963, %v3020
          %v3025 = vrot.slane %v3011, 5
          %v3026 = vrot.slane %v3012, 5
          %v3027 = vrot.slane %v3013, 5
          %v3028 = vrot.slane %v3014, 5
          %vm3029 = vcmp.lt.s32.totalorder %v607, 3
          %v3030 = vsel %vm3029, %v3027, %v3028
          %v3031 = vsel %vm3029, %v3026, %v3027
          %v3032 = vsel %vm3029, %v3025, %v3026
          %v3033 = vsel %vm3029, %v3028, %v3025
          %v3034 = vmul.f32 %v3033, %v3021
          %v3035 = vmul.f32 %v3032, %v3022
          %v3036 = vmul.f32 %v3031, %v3023
          %v3037 = vmul.f32 %v3030, %v3024
          %v3038 = vadd.f32 %v3034, 0.0
          %v3039 = vadd.f32 %v3035, 0.0
          %v3040 = vadd.f32 %v3036, 0.0
          %v3041 = vadd.f32 %v3037, 0.0
          %v3042 = vlaneseq
          %v3043 = vshrl.u32 %v3042, 7
          %v3044 = vsub.s32 1, %v3043
          %v3045 = vrot.slane %v3016, %v3044
          %v3046 = vmul.f32 %v984, %v3045
          %v3047 = vmul.f32 %v985, %v3045
          %v3048 = vmul.f32 %v986, %v3045
          %v3049 = vmul.f32 %v987, %v3045
          %v3050 = vrot.slane %v3011, 6
          %v3051 = vrot.slane %v3012, 6
          %v3052 = vrot.slane %v3013, 6
          %v3053 = vrot.slane %v3014, 6
          %vm3054 = vcmp.lt.s32.totalorder %v607, 2
          %v3055 = vsel %vm3054, %v3052, %v3053
          %v3056 = vsel %vm3054, %v3051, %v3052
          %v3057 = vsel %vm3054, %v3050, %v3051
          %v3058 = vsel %vm3054, %v3053, %v3050
          %v3059 = vmul.f32 %v3058, %v3046
          %v3060 = vmul.f32 %v3057, %v3047
          %v3061 = vmul.f32 %v3056, %v3048
          %v3062 = vmul.f32 %v3055, %v3049
          %v3063 = vadd.f32 %v3038, %v3059
          %v3064 = vadd.f32 %v3039, %v3060
          %v3065 = vadd.f32 %v3040, %v3061
          %v3066 = vadd.f32 %v3041, %v3062
          %v3067 = vlaneseq
          %v3068 = vshrl.u32 %v3067, 7
          %v3069 = vsub.s32 2, %v3068
          %v3070 = vrot.slane %v3016, %v3069
          %v3071 = vmul.f32 %v1008, %v3070
          %v3072 = vmul.f32 %v1009, %v3070
          %v3073 = vmul.f32 %v1010, %v3070
          %v3074 = vmul.f32 %v1011, %v3070
          %v3075 = vrot.slane %v3011, 7
          %v3076 = vrot.slane %v3012, 7
          %v3077 = vrot.slane %v3013, 7
          %v3078 = vrot.slane %v3014, 7
          %vm3079 = vcmp.lt.s32.totalorder %v607, 1
          %v3080 = vsel %vm3079, %v3077, %v3078
          %v3081 = vsel %vm3079, %v3076, %v3077
          %v3082 = vsel %vm3079, %v3075, %v3076
          %v3083 = vsel %vm3079, %v3078, %v3075
          %v3084 = vmul.f32 %v3083, %v3071
          %v3085 = vmul.f32 %v3082, %v3072
          %v3086 = vmul.f32 %v3081, %v3073
          %v3087 = vmul.f32 %v3080, %v3074
          %v3088 = vadd.f32 %v3063, %v3084
          %v3089 = vadd.f32 %v3064, %v3085
          %v3090 = vadd.f32 %v3065, %v3086
          %v3091 = vadd.f32 %v3066, %v3087
          %v3092 = vlaneseq
          %v3093 = vshrl.u32 %v3092, 7
          %v3094 = vsub.s32 3, %v3093
          %v3095 = vrot.slane %v3016, %v3094
          %v3096 = vmul.f32 %v1028, %v3095
          %v3097 = vmul.f32 %v1029, %v3095
          %v3098 = vmul.f32 %v1030, %v3095
          %v3099 = vmul.f32 %v1031, %v3095
          %v3100 = vmul.f32 %v3011, %v3096
          %v3101 = vmul.f32 %v3012, %v3097
          %v3102 = vmul.f32 %v3013, %v3098
          %v3103 = vmul.f32 %v3014, %v3099
          %v3104 = vadd.f32 %v3088, %v3100
          %v3105 = vadd.f32 %v3089, %v3101
          %v3106 = vadd.f32 %v3090, %v3102
          %v3107 = vadd.f32 %v3091, %v3103
          %v3108 = vlaneseq
          %v3109 = vshrl.u32 %v3108, 7
          %v3110 = vsub.s32 4, %v3109
          %v3111 = vrot.slane %v3016, %v3110
          %v3112 = vmul.f32 %v1052, %v3111
          %v3113 = vmul.f32 %v1053, %v3111
          %v3114 = vmul.f32 %v1054, %v3111
          %v3115 = vmul.f32 %v1055, %v3111
          %v3116 = vrot.slane %v3011, 1
          %v3117 = vrot.slane %v3012, 1
          %v3118 = vrot.slane %v3013, 1
          %v3119 = vrot.slane %v3014, 1
          %vm3120 = vcmp.lt.s32.totalorder %v607, 7
          %v3121 = vsel %vm3120, %v3118, %v3119
          %v3122 = vsel %vm3120, %v3117, %v3118
          %v3123 = vsel %vm3120, %v3116, %v3117
          %v3124 = vsel %vm3120, %v3119, %v3116
          %v3125 = vmul.f32 %v3123, %v3112
          %v3126 = vmul.f32 %v3122, %v3113
          %v3127 = vmul.f32 %v3121, %v3114
          %v3128 = vmul.f32 %v3124, %v3115
          %v3129 = vadd.f32 %v3104, %v3125
          %v3130 = vadd.f32 %v3105, %v3126
          %v3131 = vadd.f32 %v3106, %v3127
          %v3132 = vadd.f32 %v3107, %v3128
          %v3133 = vlaneseq
          %v3134 = vshrl.u32 %v3133, 7
          %v3135 = vsub.s32 5, %v3134
          %v3136 = vrot.slane %v3016, %v3135
          %v3137 = vmul.f32 %v1076, %v3136
          %v3138 = vmul.f32 %v1077, %v3136
          %v3139 = vmul.f32 %v1078, %v3136
          %v3140 = vmul.f32 %v1079, %v3136
          %v3141 = vrot.slane %v3011, 2
          %v3142 = vrot.slane %v3012, 2
          %v3143 = vrot.slane %v3013, 2
          %v3144 = vrot.slane %v3014, 2
          %vm3145 = vcmp.lt.s32.totalorder %v607, 6
          %v3146 = vsel %vm3145, %v3143, %v3144
          %v3147 = vsel %vm3145, %v3142, %v3143
          %v3148 = vsel %vm3145, %v3141, %v3142
          %v3149 = vsel %vm3145, %v3144, %v3141
          %v3150 = vmul.f32 %v3148, %v3137
          %v3151 = vmul.f32 %v3147, %v3138
          %v3152 = vmul.f32 %v3146, %v3139
          %v3153 = vmul.f32 %v3149, %v3140
          %v3154 = vadd.f32 %v3129, %v3150
          %v3155 = vadd.f32 %v3130, %v3151
          %v3156 = vadd.f32 %v3131, %v3152
          %v3157 = vadd.f32 %v3132, %v3153
          %v3158 = vlaneseq
          %v3159 = vshrl.u32 %v3158, 7
          %v3160 = vsub.s32 6, %v3159
          %v3161 = vrot.slane %v3016, %v3160
          %v3162 = vmul.f32 %v1100, %v3161
          %v3163 = vmul.f32 %v1101, %v3161
          %v3164 = vmul.f32 %v1102, %v3161
          %v3165 = vmul.f32 %v1103, %v3161
          %v3166 = vrot.slane %v3011, 3
          %v3167 = vrot.slane %v3012, 3
          %v3168 = vrot.slane %v3013, 3
          %v3169 = vrot.slane %v3014, 3
          %vm3170 = vcmp.lt.s32.totalorder %v607, 5
          %v3171 = vsel %vm3170, %v3168, %v3169
          %v3172 = vsel %vm3170, %v3167, %v3168
          %v3173 = vsel %vm3170, %v3166, %v3167
          %v3174 = vsel %vm3170, %v3169, %v3166
          %v3175 = vmul.f32 %v3173, %v3162
          %v3176 = vmul.f32 %v3172, %v3163
          %v3177 = vmul.f32 %v3171, %v3164
          %v3178 = vmul.f32 %v3174, %v3165
          %v3179 = vadd.f32 %v3154, %v3175
          %v3180 = vadd.f32 %v3155, %v3176
          %v3181 = vadd.f32 %v3156, %v3177
          %v3182 = vadd.f32 %v3157, %v3178
          %v3183 = vlaneseq
          %v3184 = vshrl.u32 %v3183, 7
          %v3185 = vsub.s32 4, %v3184
          %v3186 = vrot.slane %v1117, %v3185
          %v3187 = vadd.f32 %v3179, %v3186
          %v3188 = vadd.f32 %v3180, %v3186
          %v3189 = vadd.f32 %v3181, %v3186
          %v3190 = vadd.f32 %v3182, %v3186
          %v3191 = vsel %vm1170, %v3187, 0.0
          %3192 = vadd.xlane.f32.xlu0 %v3191
          %v3193 = vpop.xlane.xlu0 %3192
          %v3194 = vsel %vm1170, %v3188, 0.0
          %3195 = vadd.xlane.f32.xlu0 %v3194
          %v3196 = vpop.xlane.xlu0 %3195
          %v3197 = vsel %vm1170, %v3189, 0.0
          %3198 = vadd.xlane.f32.xlu0 %v3197
          %v3199 = vpop.xlane.xlu0 %3198
          %v3200 = vsel %vm1170, %v3190, 0.0
          %3201 = vadd.xlane.f32.xlu0 %v3200
          %v3202 = vpop.xlane.xlu0 %3201
          %v3203 = vmul.f32 %v3193, %v1183
          %v3204 = vmul.f32 %v3196, %v1183
          %v3205 = vmul.f32 %v3199, %v1183
          %v3206 = vmul.f32 %v3202, %v1183
          %v3207 = vmul.f32 %v3187, %v3187
          %v3208 = vmul.f32 %v3188, %v3188
          %v3209 = vmul.f32 %v3189, %v3189
          %v3210 = vmul.f32 %v3190, %v3190
          %v3211 = vsel %vm1170, %v3207, 0.0
          %3212 = vadd.xlane.f32.xlu0 %v3211
          %v3213 = vpop.xlane.xlu0 %3212
          %v3214 = vsel %vm1170, %v3208, 0.0
          %3215 = vadd.xlane.f32.xlu0 %v3214
          %v3216 = vpop.xlane.xlu0 %3215
          %v3217 = vsel %vm1170, %v3209, 0.0
          %3218 = vadd.xlane.f32.xlu0 %v3217
          %v3219 = vpop.xlane.xlu0 %3218
          %v3220 = vsel %vm1170, %v3210, 0.0
          %3221 = vadd.xlane.f32.xlu0 %v3220
          %v3222 = vpop.xlane.xlu0 %3221
          %v3223 = vmul.f32 %v3213, %v1183
          %v3224 = vmul.f32 %v3216, %v1183
          %v3225 = vmul.f32 %v3219, %v1183
          %v3226 = vmul.f32 %v3222, %v1183
          %v3227 = vmul.f32 %v3203, %v3203
          %v3228 = vmul.f32 %v3204, %v3204
          %v3229 = vmul.f32 %v3205, %v3205
          %v3230 = vmul.f32 %v3206, %v3206
          %v3231 = vsub.f32 %v3223, %v3227
          %v3232 = vsub.f32 %v3224, %v3228
          %v3233 = vsub.f32 %v3225, %v3229
          %v3234 = vsub.f32 %v3226, %v3230
          %v3235 = vmax.f32 %v3231, 0.0
          %v3236 = vmax.f32 %v3232, 0.0
          %v3237 = vmax.f32 %v3233, 0.0
          %v3238 = vmax.f32 %v3234, 0.0
          %v3239 = vsub.f32 %v3187, %v3203
          %v3240 = vsub.f32 %v3188, %v3204
          %v3241 = vsub.f32 %v3189, %v3205
          %v3242 = vsub.f32 %v3190, %v3206
          %v3243 = vadd.f32 %v3235, 1e-05
          %v3244 = vadd.f32 %v3236, 1e-05
          %v3245 = vadd.f32 %v3237, 1e-05
          %v3246 = vadd.f32 %v3238, 1e-05
          %v3247 = vrsqrt.pop %v3243
          %v3248 = vrsqrt.pop %v3244
          %v3249 = vrsqrt.pop %v3245
          %v3250 = vrsqrt.pop %v3246
          %v3251 = vmul.f32 %v3239, %v3247
          %v3252 = vmul.f32 %v3240, %v3248
          %v3253 = vmul.f32 %v3241, %v3249
          %v3254 = vmul.f32 %v3242, %v3250
          %v3255 = vlaneseq
          %v3256 = vshrl.u32 %v3255, 7
          %v3257 = vsub.s32 5, %v3256
          %v3258 = vrot.slane %v1117, %v3257
          %v3259 = vmul.f32 %v3251, %v3258
          %v3260 = vmul.f32 %v3252, %v3258
          %v3261 = vmul.f32 %v3253, %v3258
          %v3262 = vmul.f32 %v3254, %v3258
          %v3263 = vlaneseq
          %v3264 = vshrl.u32 %v3263, 7
          %v3265 = vsub.s32 6, %v3264
          %v3266 = vrot.slane %v1117, %v3265
          %v3267 = vadd.f32 %v3259, %v3266
          %v3268 = vadd.f32 %v3260, %v3266
          %v3269 = vadd.f32 %v3261, %v3266
          %v3270 = vadd.f32 %v3262, %v3266
          %v3271 = vxor.u32 %v3267, 2147483648
          %v3272 = vxor.u32 %v3268, 2147483648
          %v3273 = vxor.u32 %v3269, 2147483648
          %v3274 = vxor.u32 %v3270, 2147483648
          %v3275 = vmul.f32 %v3271, 1.442695
          %v3276 = vpow.pop %v3275
          %v3277 = vmul.f32 %v3272, 1.442695
          %v3278 = vpow.pop %v3277
          %v3279 = vmul.f32 %v3273, 1.442695
          %v3280 = vpow.pop %v3279
          %v3281 = vmul.f32 %v3274, 1.442695
          %v3282 = vpow.pop %v3281
          %v3283 = vadd.f32 %v3276, 1.0
          %v3284 = vadd.f32 %v3278, 1.0
          %v3285 = vadd.f32 %v3280, 1.0
          %v3286 = vadd.f32 %v3282, 1.0
          %v3287 = vrcp.pop %v3283
          %v3288 = vmul.f32 1.0, %v3287
          %v3289 = vrcp.pop %v3284
          %v3290 = vmul.f32 1.0, %v3289
          %v3291 = vrcp.pop %v3285
          %v3292 = vmul.f32 1.0, %v3291
          %v3293 = vrcp.pop %v3286
          %v3294 = vmul.f32 1.0, %v3293
          %v3295 = vmul.f32 %v3267, %v3288
          %v3296 = vmul.f32 %v3268, %v3290
          %v3297 = vmul.f32 %v3269, %v3292
          %v3298 = vmul.f32 %v3270, %v3294
          %v3299 = vpack.c.bf16 %v3296, %v3295
          %v3300 = vpack.c.bf16 %v3298, %v3297
          %s3301 = smul.addr %s1660, 4
          %s3302 = scalar_lea.vmem %s11, %s3301
          %v3303 = vld [vmem:[%s3302] sm:$0xf]
          %v3304 = vld [vmem:[%s3302 + $0x4] sm:$0xf]
          %v3305 = vld [vmem:[%s3302 + $0x8] sm:$0xf]
          %v3306 = vld [vmem:[%s3302 + $0xc] sm:$0xf]
          %v3307 = vld [vmem:[%s3302 + $0x10] sm:$0xf]
          %v3308 = vld [vmem:[%s3302 + $0x14] sm:$0xf]
          %v3309 = vld [vmem:[%s3302 + $0x18] sm:$0xf]
          %v3310 = vld [vmem:[%s3302 + $0x1c] sm:$0xf]
          %v3311 = vlaneseq
          %v3312 = vshrl.u32 %v3311, 7
          %v3313 = vsub.s32 7, %v3312
          %v3314 = vrot.slane %v1117, %v3313
          %v3323 = vunpack.c.l.b16 %v3303
          %v3324 = vunpack.c.l.b16 %v3304
          %v3325 = vunpack.c.l.b16 %v3305
          %v3326 = vunpack.c.l.b16 %v3306
          %v3327 = vunpack.c.l.b16 %v3307
          %v3328 = vunpack.c.l.b16 %v3308
          %v3329 = vunpack.c.l.b16 %v3309
          %v3330 = vunpack.c.l.b16 %v3310
          %v3331 = vpack.c.b16 %v3324, %v3323
          %v3332 = vpack.c.b16 %v3326, %v3325
          %v3333 = vpack.c.b16 %v3328, %v3327
          %v3334 = vpack.c.b16 %v3330, %v3329
          %v3340 = vsel %vm1170, %v3299, 0
          %v3343 = vsel %vm1170, %v3300, 0
          %3345 = vmatprep.subr.bf16.mxu0 0
          %3346 = vmatpush1.bf16.msra.mxu0 %v3331
          %3347 = vmatprep.subr.bf16.mxu0 0
          %3348 = vmatpush1.bf16.msra.mxu0 %v3332
          %3349 = vmatprep.subr.bf16.mxu0 0
          %3350 = vmatpush1.bf16.msra.mxu0 %v3333
          %3351 = vmatprep.subr.bf16.mxu0 0
          %3352 = vmatpush1.bf16.msra.mxu0 %v3334
          %3353 = vmatprep.subr.bf16.mxu0 0
          %3354 = vmatpush1.bf16.msra.mxu0 0
          %3355 = vmatprep.subr.bf16.mxu0 0
          %3356 = vmatpush1.bf16.msra.mxu0 0
          %3357 = vmatprep.subr.bf16.mxu0 0
          %3358 = vmatpush1.bf16.msra.mxu0 0
          %3359 = vmatprep.subr.bf16.mxu0 0
          %3360 = vmatpush1.bf16.msra.mxu0 0
          %3361 = vmatprep.subr.bf16.mxu0 0
          %3362 = vmatpush1.bf16.msra.mxu0 0
          %3363 = vmatprep.subr.bf16.mxu0 0
          %3364 = vmatpush1.bf16.msra.mxu0 0
          %3365 = vmatprep.subr.bf16.mxu0 0
          %3366 = vmatpush1.bf16.msra.mxu0 0
          %3367 = vmatprep.subr.bf16.mxu0 0
          %3368 = vmatpush1.bf16.msra.mxu0 0
          %3369 = vmatprep.subr.bf16.mxu0 0
          %3370 = vmatpush1.bf16.msra.mxu0 0
          %3371 = vmatprep.subr.bf16.mxu0 0
          %3372 = vmatpush1.bf16.msra.mxu0 0
          %3373 = vmatprep.subr.bf16.mxu0 0
          %3374 = vmatpush1.bf16.msra.mxu0 0
          %3375 = vmatprep.subr.bf16.mxu0 0
          %3376 = vmatpush1.bf16.msra.mxu0 0
          %3377 = vmatprep.mubr.bf16.mxu0 0
          %3378 = vmatmul.mubr.bf16.gmra.mrb[0].mxu0 %v3340
          %v3379 = vpop.f32.mrb[0].mxu0
          %v3380 = vadd.f32 %v3314, %v3379
          %v3381 = vpop.f32.mrb[0].mxu0
          %v3382 = vpop.f32.mrb[0].mxu0
          %v3383 = vadd.f32 %v3314, %v3382
          %v3384 = vpop.f32.mrb[0].mxu0
          %3385 = vmatprep.mubr.bf16.mxu0 0
          %3386 = vmatmul.mubr.bf16.gmra.mrb[0].mxu0 %v3343
          %v3387 = vpop.f32.mrb[0].mxu0
          %v3388 = vadd.f32 %v3314, %v3387
          %v3389 = vpop.f32.mrb[0].mxu0
          %v3390 = vpop.f32.mrb[0].mxu0
          %v3391 = vadd.f32 %v3314, %v3390
          %v3392 = vpop.f32.mrb[0].mxu0
          %3393 = vdwg.mxu0
          %v3394 = vadd.f32 %v3380, %v2721
          %v3395 = vadd.f32 %v3383, %v2722
          %v3396 = vadd.f32 %v3388, %v2723
          %v3397 = vadd.f32 %v3391, %v2724
          %s3398 = smul.addr %s1124, 4
          %s3399 = scalar_lea.vmem %s13, %s3398
          %v3400 = vld [vmem:[%s3399] sm:$0xff]
          %v3401 = vld [vmem:[%s3399 + $0x8] sm:$0xff]
          %v3402 = vld [vmem:[%s3399 + $0x10] sm:$0xff]
          %v3403 = vld [vmem:[%s3399 + $0x18] sm:$0xff]
          %v3404 = vld [vmem:[%s3399 + $0x20] sm:$0xff]
          %v3405 = vld [vmem:[%s3399 + $0x28] sm:$0xff]
          %v3406 = vld [vmem:[%s3399 + $0x30] sm:$0xff]
          %v3407 = vld [vmem:[%s3399 + $0x38] sm:$0xff]
          %s3408 = smul.addr %s1135, 4
          %s3409 = scalar_lea.vmem %s14, %s3408
          %v3410 = vld [vmem:[%s3409] sm:$0xf]
          %v3411 = vld [vmem:[%s3409 + $0x4] sm:$0xf]
          %v3412 = vld [vmem:[%s3409 + $0x8] sm:$0xf]
          %v3413 = vld [vmem:[%s3409 + $0xc] sm:$0xf]
          %v3414 = vld [vmem:[%s3409 + $0x10] sm:$0xf]
          %v3415 = vld [vmem:[%s3409 + $0x14] sm:$0xf]
          %v3416 = vld [vmem:[%s3409 + $0x18] sm:$0xf]
          %v3417 = vld [vmem:[%s3409 + $0x1c] sm:$0xf]
          %v3418 = vld [vmem:[%s3409 + $0x20] sm:$0xf]
          %v3419 = vld [vmem:[%s3409 + $0x24] sm:$0xf]
          %v3420 = vld [vmem:[%s3409 + $0x28] sm:$0xf]
          %v3421 = vld [vmem:[%s3409 + $0x2c] sm:$0xf]
          %v3422 = vld [vmem:[%s3409 + $0x30] sm:$0xf]
          %v3423 = vld [vmem:[%s3409 + $0x34] sm:$0xf]
          %v3424 = vld [vmem:[%s3409 + $0x38] sm:$0xf]
          %v3425 = vld [vmem:[%s3409 + $0x3c] sm:$0xf]
          %v3426 = vld [vmem:[%s3409 + $0x40] sm:$0xf]
          %v3427 = vld [vmem:[%s3409 + $0x44] sm:$0xf]
          %v3428 = vld [vmem:[%s3409 + $0x48] sm:$0xf]
          %v3429 = vld [vmem:[%s3409 + $0x4c] sm:$0xf]
          %v3430 = vld [vmem:[%s3409 + $0x50] sm:$0xf]
          %v3431 = vld [vmem:[%s3409 + $0x54] sm:$0xf]
          %v3432 = vld [vmem:[%s3409 + $0x58] sm:$0xf]
          %v3433 = vld [vmem:[%s3409 + $0x5c] sm:$0xf]
          %v3434 = vld [vmem:[%s3409 + $0x60] sm:$0xf]
          %v3435 = vld [vmem:[%s3409 + $0x64] sm:$0xf]
          %v3436 = vld [vmem:[%s3409 + $0x68] sm:$0xf]
          %v3437 = vld [vmem:[%s3409 + $0x6c] sm:$0xf]
          %v3438 = vld [vmem:[%s3409 + $0x70] sm:$0xf]
          %v3439 = vld [vmem:[%s3409 + $0x74] sm:$0xf]
          %v3440 = vld [vmem:[%s3409 + $0x78] sm:$0xf]
          %v3441 = vld [vmem:[%s3409 + $0x7c] sm:$0xf]
          %v3442 = vsel %vm1170, %v3394, 0.0
          %3443 = vadd.xlane.f32.xlu0 %v3442
          %v3444 = vpop.xlane.xlu0 %3443
          %v3445 = vsel %vm1170, %v3395, 0.0
          %3446 = vadd.xlane.f32.xlu0 %v3445
          %v3447 = vpop.xlane.xlu0 %3446
          %v3448 = vsel %vm1170, %v3396, 0.0
          %3449 = vadd.xlane.f32.xlu0 %v3448
          %v3450 = vpop.xlane.xlu0 %3449
          %v3451 = vsel %vm1170, %v3397, 0.0
          %3452 = vadd.xlane.f32.xlu0 %v3451
          %v3453 = vpop.xlane.xlu0 %3452
          %v3454 = vmul.f32 %v3444, %v1183
          %v3455 = vmul.f32 %v3447, %v1183
          %v3456 = vmul.f32 %v3450, %v1183
          %v3457 = vmul.f32 %v3453, %v1183
          %v3458 = vmul.f32 %v3394, %v3394
          %v3459 = vmul.f32 %v3395, %v3395
          %v3460 = vmul.f32 %v3396, %v3396
          %v3461 = vmul.f32 %v3397, %v3397
          %v3462 = vsel %vm1170, %v3458, 0.0
          %3463 = vadd.xlane.f32.xlu0 %v3462
          %v3464 = vpop.xlane.xlu0 %3463
          %v3465 = vsel %vm1170, %v3459, 0.0
          %3466 = vadd.xlane.f32.xlu0 %v3465
          %v3467 = vpop.xlane.xlu0 %3466
          %v3468 = vsel %vm1170, %v3460, 0.0
          %3469 = vadd.xlane.f32.xlu0 %v3468
          %v3470 = vpop.xlane.xlu0 %3469
          %v3471 = vsel %vm1170, %v3461, 0.0
          %3472 = vadd.xlane.f32.xlu0 %v3471
          %v3473 = vpop.xlane.xlu0 %3472
          %v3474 = vmul.f32 %v3464, %v1183
          %v3475 = vmul.f32 %v3467, %v1183
          %v3476 = vmul.f32 %v3470, %v1183
          %v3477 = vmul.f32 %v3473, %v1183
          %v3478 = vmul.f32 %v3454, %v3454
          %v3479 = vmul.f32 %v3455, %v3455
          %v3480 = vmul.f32 %v3456, %v3456
          %v3481 = vmul.f32 %v3457, %v3457
          %v3482 = vsub.f32 %v3474, %v3478
          %v3483 = vsub.f32 %v3475, %v3479
          %v3484 = vsub.f32 %v3476, %v3480
          %v3485 = vsub.f32 %v3477, %v3481
          %v3486 = vmax.f32 %v3482, 0.0
          %v3487 = vmax.f32 %v3483, 0.0
          %v3488 = vmax.f32 %v3484, 0.0
          %v3489 = vmax.f32 %v3485, 0.0
          %v3490 = vsub.f32 %v3394, %v3454
          %v3491 = vsub.f32 %v3395, %v3455
          %v3492 = vsub.f32 %v3396, %v3456
          %v3493 = vsub.f32 %v3397, %v3457
          %v3494 = vadd.f32 %v3486, 1e-05
          %v3495 = vadd.f32 %v3487, 1e-05
          %v3496 = vadd.f32 %v3488, 1e-05
          %v3497 = vadd.f32 %v3489, 1e-05
          %v3498 = vrsqrt.pop %v3494
          %v3499 = vrsqrt.pop %v3495
          %v3500 = vrsqrt.pop %v3496
          %v3501 = vrsqrt.pop %v3497
          %v3502 = vmul.f32 %v3490, %v3498
          %v3503 = vmul.f32 %v3491, %v3499
          %v3504 = vmul.f32 %v3492, %v3500
          %v3505 = vmul.f32 %v3493, %v3501
          %v3506 = vlaneseq
          %v3507 = vshrl.u32 %v3506, 7
          %v3508 = vsub.s32 0, %v3507
          %v3509 = vrot.slane %v1118, %v3508
          %v3510 = vmul.f32 %v3502, %v3509
          %v3511 = vmul.f32 %v3503, %v3509
          %v3512 = vmul.f32 %v3504, %v3509
          %v3513 = vmul.f32 %v3505, %v3509
          %v3514 = vlaneseq
          %v3515 = vshrl.u32 %v3514, 7
          %v3516 = vsub.s32 1, %v3515
          %v3517 = vrot.slane %v1118, %v3516
          %v3518 = vadd.f32 %v3510, %v3517
          %v3519 = vadd.f32 %v3511, %v3517
          %v3520 = vadd.f32 %v3512, %v3517
          %v3521 = vadd.f32 %v3513, %v3517
          %v3522 = vpack.c.bf16 %v3519, %v3518
          %v3523 = vpack.c.bf16 %v3521, %v3520
          %v3524 = vlaneseq
          %v3525 = vshrl.u32 %v3524, 7
          %v3526 = vsub.s32 1, %v3525
          %v3527 = vrot.slane %v1122, %v3526
          %v3528 = vlaneseq
          %v3529 = vshrl.u32 %v3528, 7
          %v3530 = vsub.s32 1, %v3529
          %v3531 = vrot.slane %v1123, %v3530
          %v3540 = vunpack.c.l.b16 %v3400
          %v3541 = vunpack.c.h.b16 %v3400
          %v3542 = vunpack.c.l.b16 %v3401
          %v3543 = vunpack.c.h.b16 %v3401
          %v3544 = vunpack.c.l.b16 %v3402
          %v3545 = vunpack.c.h.b16 %v3402
          %v3546 = vunpack.c.l.b16 %v3403
          %v3547 = vunpack.c.h.b16 %v3403
          %v3548 = vunpack.c.l.b16 %v3404
          %v3549 = vunpack.c.h.b16 %v3404
          %v3550 = vunpack.c.l.b16 %v3405
          %v3551 = vunpack.c.h.b16 %v3405
          %v3552 = vunpack.c.l.b16 %v3406
          %v3553 = vunpack.c.h.b16 %v3406
          %v3554 = vunpack.c.l.b16 %v3407
          %v3555 = vunpack.c.h.b16 %v3407
          %v3556 = vpack.c.b16 %v3542, %v3540
          %v3557 = vpack.c.b16 %v3543, %v3541
          %v3558 = vpack.c.b16 %v3546, %v3544
          %v3559 = vpack.c.b16 %v3547, %v3545
          %v3560 = vpack.c.b16 %v3550, %v3548
          %v3561 = vpack.c.b16 %v3551, %v3549
          %v3562 = vpack.c.b16 %v3554, %v3552
          %v3563 = vpack.c.b16 %v3555, %v3553
          %v3573 = vsel %vm1170, %v3522, 0
          %v3576 = vsel %vm1170, %v3523, 0
          %3578 = vmatprep.subr.bf16.mxu0 %v3557
          %3579 = vmatpush1.bf16.msra.mxu0 %v3556
          %3580 = vmatprep.subr.bf16.mxu0 %v3559
          %3581 = vmatpush1.bf16.msra.mxu0 %v3558
          %3582 = vmatprep.subr.bf16.mxu0 %v3561
          %3583 = vmatpush1.bf16.msra.mxu0 %v3560
          %3584 = vmatprep.subr.bf16.mxu0 %v3563
          %3585 = vmatpush1.bf16.msra.mxu0 %v3562
          %3586 = vmatprep.subr.bf16.mxu0 0
          %3587 = vmatpush1.bf16.msra.mxu0 0
          %3588 = vmatprep.subr.bf16.mxu0 0
          %3589 = vmatpush1.bf16.msra.mxu0 0
          %3590 = vmatprep.subr.bf16.mxu0 0
          %3591 = vmatpush1.bf16.msra.mxu0 0
          %3592 = vmatprep.subr.bf16.mxu0 0
          %3593 = vmatpush1.bf16.msra.mxu0 0
          %3594 = vmatprep.subr.bf16.mxu0 0
          %3595 = vmatpush1.bf16.msra.mxu0 0
          %3596 = vmatprep.subr.bf16.mxu0 0
          %3597 = vmatpush1.bf16.msra.mxu0 0
          %3598 = vmatprep.subr.bf16.mxu0 0
          %3599 = vmatpush1.bf16.msra.mxu0 0
          %3600 = vmatprep.subr.bf16.mxu0 0
          %3601 = vmatpush1.bf16.msra.mxu0 0
          %3602 = vmatprep.subr.bf16.mxu0 0
          %3603 = vmatpush1.bf16.msra.mxu0 0
          %3604 = vmatprep.subr.bf16.mxu0 0
          %3605 = vmatpush1.bf16.msra.mxu0 0
          %3606 = vmatprep.subr.bf16.mxu0 0
          %3607 = vmatpush1.bf16.msra.mxu0 0
          %3608 = vmatprep.subr.bf16.mxu0 0
          %3609 = vmatpush1.bf16.msra.mxu0 0
          %3610 = vmatprep.mubr.bf16.mxu0 0
          %3611 = vmatmul.mubr.bf16.gmra.mrb[0].mxu0 %v3573
          %v3612 = vpop.f32.mrb[0].mxu0
          %v3613 = vadd.f32 %v3527, %v3612
          %v3614 = vpop.f32.mrb[0].mxu0
          %v3615 = vadd.f32 %v3531, %v3614
          %v3616 = vpop.f32.mrb[0].mxu0
          %v3617 = vadd.f32 %v3527, %v3616
          %v3618 = vpop.f32.mrb[0].mxu0
          %v3619 = vadd.f32 %v3531, %v3618
          %3620 = vmatprep.mubr.bf16.mxu0 0
          %3621 = vmatmul.mubr.bf16.gmra.mrb[0].mxu0 %v3576
          %v3622 = vpop.f32.mrb[0].mxu0
          %v3623 = vadd.f32 %v3527, %v3622
          %v3624 = vpop.f32.mrb[0].mxu0
          %v3625 = vadd.f32 %v3531, %v3624
          %v3626 = vpop.f32.mrb[0].mxu0
          %v3627 = vadd.f32 %v3527, %v3626
          %v3628 = vpop.f32.mrb[0].mxu0
          %v3629 = vadd.f32 %v3531, %v3628
          %3630 = vdwg.mxu0
          %v3631 = vxor.u32 %v3613, 2147483648
          %v3632 = vxor.u32 %v3615, 2147483648
          %v3633 = vxor.u32 %v3617, 2147483648
          %v3634 = vxor.u32 %v3619, 2147483648
          %v3635 = vxor.u32 %v3623, 2147483648
          %v3636 = vxor.u32 %v3625, 2147483648
          %v3637 = vxor.u32 %v3627, 2147483648
          %v3638 = vxor.u32 %v3629, 2147483648
          %v3639 = vmul.f32 %v3631, 1.442695
          %v3640 = vpow.pop %v3639
          %v3641 = vmul.f32 %v3632, 1.442695
          %v3642 = vpow.pop %v3641
          %v3643 = vmul.f32 %v3633, 1.442695
          %v3644 = vpow.pop %v3643
          %v3645 = vmul.f32 %v3634, 1.442695
          %v3646 = vpow.pop %v3645
          %v3647 = vmul.f32 %v3635, 1.442695
          %v3648 = vpow.pop %v3647
          %v3649 = vmul.f32 %v3636, 1.442695
          %v3650 = vpow.pop %v3649
          %v3651 = vmul.f32 %v3637, 1.442695
          %v3652 = vpow.pop %v3651
          %v3653 = vmul.f32 %v3638, 1.442695
          %v3654 = vpow.pop %v3653
          %v3655 = vadd.f32 %v3640, 1.0
          %v3656 = vadd.f32 %v3642, 1.0
          %v3657 = vadd.f32 %v3644, 1.0
          %v3658 = vadd.f32 %v3646, 1.0
          %v3659 = vadd.f32 %v3648, 1.0
          %v3660 = vadd.f32 %v3650, 1.0
          %v3661 = vadd.f32 %v3652, 1.0
          %v3662 = vadd.f32 %v3654, 1.0
          %v3663 = vrcp.pop %v3655
          %v3664 = vmul.f32 1.0, %v3663
          %v3665 = vrcp.pop %v3656
          %v3666 = vmul.f32 1.0, %v3665
          %v3667 = vrcp.pop %v3657
          %v3668 = vmul.f32 1.0, %v3667
          %v3669 = vrcp.pop %v3658
          %v3670 = vmul.f32 1.0, %v3669
          %v3671 = vrcp.pop %v3659
          %v3672 = vmul.f32 1.0, %v3671
          %v3673 = vrcp.pop %v3660
          %v3674 = vmul.f32 1.0, %v3673
          %v3675 = vrcp.pop %v3661
          %v3676 = vmul.f32 1.0, %v3675
          %v3677 = vrcp.pop %v3662
          %v3678 = vmul.f32 1.0, %v3677
          %v3679 = vmul.f32 %v3613, %v3664
          %v3680 = vmul.f32 %v3615, %v3666
          %v3681 = vmul.f32 %v3617, %v3668
          %v3682 = vmul.f32 %v3619, %v3670
          %v3683 = vmul.f32 %v3623, %v3672
          %v3684 = vmul.f32 %v3625, %v3674
          %v3685 = vmul.f32 %v3627, %v3676
          %v3686 = vmul.f32 %v3629, %v3678
          %v3687 = vpack.c.bf16 %v3681, %v3679
          %v3688 = vpack.c.bf16 %v3682, %v3680
          %v3689 = vpack.c.bf16 %v3685, %v3683
          %v3690 = vpack.c.bf16 %v3686, %v3684
          %v3691 = vlaneseq
          %v3692 = vshrl.u32 %v3691, 7
          %v3693 = vsub.s32 2, %v3692
          %v3694 = vrot.slane %v1118, %v3693
          %v3727 = vunpack.c.l.b16 %v3410
          %v3728 = vunpack.c.l.b16 %v3411
          %v3729 = vunpack.c.l.b16 %v3412
          %v3730 = vunpack.c.l.b16 %v3413
          %v3731 = vunpack.c.l.b16 %v3414
          %v3732 = vunpack.c.l.b16 %v3415
          %v3733 = vunpack.c.l.b16 %v3416
          %v3734 = vunpack.c.l.b16 %v3417
          %v3735 = vunpack.c.l.b16 %v3418
          %v3736 = vunpack.c.l.b16 %v3419
          %v3737 = vunpack.c.l.b16 %v3420
          %v3738 = vunpack.c.l.b16 %v3421
          %v3739 = vunpack.c.l.b16 %v3422
          %v3740 = vunpack.c.l.b16 %v3423
          %v3741 = vunpack.c.l.b16 %v3424
          %v3742 = vunpack.c.l.b16 %v3425
          %v3743 = vunpack.c.l.b16 %v3426
          %v3744 = vunpack.c.l.b16 %v3427
          %v3745 = vunpack.c.l.b16 %v3428
          %v3746 = vunpack.c.l.b16 %v3429
          %v3747 = vunpack.c.l.b16 %v3430
          %v3748 = vunpack.c.l.b16 %v3431
          %v3749 = vunpack.c.l.b16 %v3432
          %v3750 = vunpack.c.l.b16 %v3433
          %v3751 = vunpack.c.l.b16 %v3434
          %v3752 = vunpack.c.l.b16 %v3435
          %v3753 = vunpack.c.l.b16 %v3436
          %v3754 = vunpack.c.l.b16 %v3437
          %v3755 = vunpack.c.l.b16 %v3438
          %v3756 = vunpack.c.l.b16 %v3439
          %v3757 = vunpack.c.l.b16 %v3440
          %v3758 = vunpack.c.l.b16 %v3441
          %v3759 = vpack.c.b16 %v3728, %v3727
          %v3760 = vpack.c.b16 %v3730, %v3729
          %v3761 = vpack.c.b16 %v3732, %v3731
          %v3762 = vpack.c.b16 %v3734, %v3733
          %v3763 = vpack.c.b16 %v3736, %v3735
          %v3764 = vpack.c.b16 %v3738, %v3737
          %v3765 = vpack.c.b16 %v3740, %v3739
          %v3766 = vpack.c.b16 %v3742, %v3741
          %v3767 = vpack.c.b16 %v3744, %v3743
          %v3768 = vpack.c.b16 %v3746, %v3745
          %v3769 = vpack.c.b16 %v3748, %v3747
          %v3770 = vpack.c.b16 %v3750, %v3749
          %v3771 = vpack.c.b16 %v3752, %v3751
          %v3772 = vpack.c.b16 %v3754, %v3753
          %v3773 = vpack.c.b16 %v3756, %v3755
          %v3774 = vpack.c.b16 %v3758, %v3757
          %3791 = vmatprep.subr.bf16.mxu0 0
          %3792 = vmatpush1.bf16.msra.mxu0 %v3759
          %3793 = vmatprep.subr.bf16.mxu0 0
          %3794 = vmatpush1.bf16.msra.mxu0 %v3760
          %3795 = vmatprep.subr.bf16.mxu0 0
          %3796 = vmatpush1.bf16.msra.mxu0 %v3761
          %3797 = vmatprep.subr.bf16.mxu0 0
          %3798 = vmatpush1.bf16.msra.mxu0 %v3762
          %3799 = vmatprep.subr.bf16.mxu0 0
          %3800 = vmatpush1.bf16.msra.mxu0 %v3763
          %3801 = vmatprep.subr.bf16.mxu0 0
          %3802 = vmatpush1.bf16.msra.mxu0 %v3764
          %3803 = vmatprep.subr.bf16.mxu0 0
          %3804 = vmatpush1.bf16.msra.mxu0 %v3765
          %3805 = vmatprep.subr.bf16.mxu0 0
          %3806 = vmatpush1.bf16.msra.mxu0 %v3766
          %3807 = vmatprep.subr.bf16.mxu0 0
          %3808 = vmatpush1.bf16.msra.mxu0 %v3767
          %3809 = vmatprep.subr.bf16.mxu0 0
          %3810 = vmatpush1.bf16.msra.mxu0 %v3768
          %3811 = vmatprep.subr.bf16.mxu0 0
          %3812 = vmatpush1.bf16.msra.mxu0 %v3769
          %3813 = vmatprep.subr.bf16.mxu0 0
          %3814 = vmatpush1.bf16.msra.mxu0 %v3770
          %3815 = vmatprep.subr.bf16.mxu0 0
          %3816 = vmatpush1.bf16.msra.mxu0 %v3771
          %3817 = vmatprep.subr.bf16.mxu0 0
          %3818 = vmatpush1.bf16.msra.mxu0 %v3772
          %3819 = vmatprep.subr.bf16.mxu0 0
          %3820 = vmatpush1.bf16.msra.mxu0 %v3773
          %3821 = vmatprep.subr.bf16.mxu0 0
          %3822 = vmatpush1.bf16.msra.mxu0 %v3774
          %3823 = vmatprep.mubr.bf16.mxu0 %v3688
          %3824 = vmatmul.mubr.bf16.gmra.mrb[0].mxu0 %v3687
          %v3825 = vpop.f32.mrb[0].mxu0
          %v3826 = vadd.f32 %v3694, %v3825
          %v3827 = vpop.f32.mrb[0].mxu0
          %v3828 = vpop.f32.mrb[0].mxu0
          %v3829 = vadd.f32 %v3694, %v3828
          %v3830 = vpop.f32.mrb[0].mxu0
          %3831 = vmatprep.mubr.bf16.mxu0 %v3690
          %3832 = vmatmul.mubr.bf16.gmra.mrb[0].mxu0 %v3689
          %v3833 = vpop.f32.mrb[0].mxu0
          %v3834 = vadd.f32 %v3694, %v3833
          %v3835 = vpop.f32.mrb[0].mxu0
          %v3836 = vpop.f32.mrb[0].mxu0
          %v3837 = vadd.f32 %v3694, %v3836
          %v3838 = vpop.f32.mrb[0].mxu0
          %3839 = vdwg.mxu0
          %v3840 = vmul.f32 %v3826, 0.5
          %v3841 = vmul.f32 %v3829, 0.5
          %v3842 = vmul.f32 %v3834, 0.5
          %v3843 = vmul.f32 %v3837, 0.5
          %v3844 = vadd.f32 %v3840, %v3394
          %v3845 = vadd.f32 %v3841, %v3395
          %v3846 = vadd.f32 %v3842, %v3396
          %v3847 = vadd.f32 %v3843, %v3397
          %v3848 = vsel %vm1170, %v3844, 0.0
          %3849 = vadd.xlane.f32.xlu0 %v3848
          %v3850 = vpop.xlane.xlu0 %3849
          %v3851 = vsel %vm1170, %v3845, 0.0
          %3852 = vadd.xlane.f32.xlu0 %v3851
          %v3853 = vpop.xlane.xlu0 %3852
          %v3854 = vsel %vm1170, %v3846, 0.0
          %3855 = vadd.xlane.f32.xlu0 %v3854
          %v3856 = vpop.xlane.xlu0 %3855
          %v3857 = vsel %vm1170, %v3847, 0.0
          %3858 = vadd.xlane.f32.xlu0 %v3857
          %v3859 = vpop.xlane.xlu0 %3858
          %v3860 = vmul.f32 %v3850, %v1183
          %v3861 = vmul.f32 %v3853, %v1183
          %v3862 = vmul.f32 %v3856, %v1183
          %v3863 = vmul.f32 %v3859, %v1183
          %v3864 = vmul.f32 %v3844, %v3844
          %v3865 = vmul.f32 %v3845, %v3845
          %v3866 = vmul.f32 %v3846, %v3846
          %v3867 = vmul.f32 %v3847, %v3847
          %v3868 = vsel %vm1170, %v3864, 0.0
          %3869 = vadd.xlane.f32.xlu0 %v3868
          %v3870 = vpop.xlane.xlu0 %3869
          %v3871 = vsel %vm1170, %v3865, 0.0
          %3872 = vadd.xlane.f32.xlu0 %v3871
          %v3873 = vpop.xlane.xlu0 %3872
          %v3874 = vsel %vm1170, %v3866, 0.0
          %3875 = vadd.xlane.f32.xlu0 %v3874
          %v3876 = vpop.xlane.xlu0 %3875
          %v3877 = vsel %vm1170, %v3867, 0.0
          %3878 = vadd.xlane.f32.xlu0 %v3877
          %v3879 = vpop.xlane.xlu0 %3878
          %v3880 = vmul.f32 %v3870, %v1183
          %v3881 = vmul.f32 %v3873, %v1183
          %v3882 = vmul.f32 %v3876, %v1183
          %v3883 = vmul.f32 %v3879, %v1183
          %v3884 = vmul.f32 %v3860, %v3860
          %v3885 = vmul.f32 %v3861, %v3861
          %v3886 = vmul.f32 %v3862, %v3862
          %v3887 = vmul.f32 %v3863, %v3863
          %v3888 = vsub.f32 %v3880, %v3884
          %v3889 = vsub.f32 %v3881, %v3885
          %v3890 = vsub.f32 %v3882, %v3886
          %v3891 = vsub.f32 %v3883, %v3887
          %v3892 = vmax.f32 %v3888, 0.0
          %v3893 = vmax.f32 %v3889, 0.0
          %v3894 = vmax.f32 %v3890, 0.0
          %v3895 = vmax.f32 %v3891, 0.0
          %v3896 = vsub.f32 %v3844, %v3860
          %v3897 = vsub.f32 %v3845, %v3861
          %v3898 = vsub.f32 %v3846, %v3862
          %v3899 = vsub.f32 %v3847, %v3863
          %v3900 = vadd.f32 %v3892, 1e-05
          %v3901 = vadd.f32 %v3893, 1e-05
          %v3902 = vadd.f32 %v3894, 1e-05
          %v3903 = vadd.f32 %v3895, 1e-05
          %v3904 = vrsqrt.pop %v3900
          %v3905 = vrsqrt.pop %v3901
          %v3906 = vrsqrt.pop %v3902
          %v3907 = vrsqrt.pop %v3903
          %v3908 = vmul.f32 %v3896, %v3904
          %v3909 = vmul.f32 %v3897, %v3905
          %v3910 = vmul.f32 %v3898, %v3906
          %v3911 = vmul.f32 %v3899, %v3907
          %v3912 = vlaneseq
          %v3913 = vshrl.u32 %v3912, 7
          %v3914 = vsub.s32 3, %v3913
          %v3915 = vrot.slane %v1118, %v3914
          %v3916 = vmul.f32 %v3908, %v3915
          %v3917 = vmul.f32 %v3909, %v3915
          %v3918 = vmul.f32 %v3910, %v3915
          %v3919 = vmul.f32 %v3911, %v3915
          %v3920 = vlaneseq
          %v3921 = vshrl.u32 %v3920, 7
          %v3922 = vsub.s32 4, %v3921
          %v3923 = vrot.slane %v1118, %v3922
          %v3924 = vadd.f32 %v3916, %v3923
          %v3925 = vadd.f32 %v3917, %v3923
          %v3926 = vadd.f32 %v3918, %v3923
          %v3927 = vadd.f32 %v3919, %v3923
        $region89: #{tpu_custom_call.1} parent=83 // loop_footer
          %s1109 = sadd.s32 1, %s1105
        $region90: #{tpu_custom_call.1} parent=83 // loop_footer_branch
          %1104 = sbr.rel target = $region86
        $region91: #{tpu_custom_call.1} parent=83 // loop_exit
          _
        %vm3928 = vcmask 523264
        %3929 = vst.msk [vmem:[%s521] sm:$0xff] %vm3928, %v1110
        %3930 = vst.msk [vmem:[%s521 + $0x8] sm:$0xff] %vm3928, %v1111
        %3931 = vst.msk [vmem:[%s521 + $0x10] sm:$0xff] %vm3928, %v1112
        %3932 = vst.msk [vmem:[%s521 + $0x18] sm:$0xff] %vm3928, %v1113
        %s3933 = sand.u32 %s386, 1
        %s3934 = scalar_lea.sflag [#allocation5], %s3933
        %s3935 = sand.u32 %s386, 1
        %s3936 = smul.addr %s3935, 32
        %s3937 = scalar_lea.vmem [#allocation4], %s3936
        // Predicated region
        $region92: #{tpu_custom_call.1} parent=83 // pred_check
          %p3938 = pneg %p396
        $region93: #{tpu_custom_call.1} parent=83 // pred_check_branch
          %3940 = sbr.rel (%p3938) target = $region95
        $region94: #{tpu_custom_call.1} parent=83 // pred_region
          %s3942 = ssub.s32 512, 512
          %3943 = vsyncadd %s3934, %s3942
          %s3944 = smul.addr %s37, 4
          %s3945 = smul.addr %s3944, 128
          %s3946 = scalar_lea.hbm %s17, %s3945
          %s3947 = sshll.u32 %s3937, 4
          %s3948 = int_to_ptr.vmem [resolvable:$true] %s3947
          %3953 = dma.vmem_to_hbm [thread:$0]  %s3948, 512, %s3946, %s3934, 128, 128, 8
        $region95: #{tpu_custom_call.1} parent=83 // pred_fallthru
          _
      $region84: #{tpu_custom_call.1} parent=5 // pred_fallthru
        _
      %p3954 = scmp.le.s32.totalorder 2, %s32
      // Predicated region
      $region96: #{tpu_custom_call.1} parent=5 // pred_check
        %p3955 = pneg %p3954
      $region97: #{tpu_custom_call.1} parent=5 // pred_check_branch
        %3957 = sbr.rel (%p3955) target = $region99
      $region98: #{tpu_custom_call.1} parent=5 // pred_region
        %s3958 = ssub.s32 %s32, 2
        // Predicated region
        $region100: #{tpu_custom_call.1} parent=98 // pred_check
          %p3959 = pneg %p402
        $region101: #{tpu_custom_call.1} parent=98 // pred_check_branch
          %3961 = sbr.rel (%p3959) target = $region103
        $region102: #{tpu_custom_call.1} parent=98 // pred_region
          %s3962 = sand.u32 %s387, 1
          %s3963 = scalar_lea.sflag [#allocation5], %s3962
          %s3964 = sand.u32 %s387, 1
          %s3965 = smul.addr %s3964, 32
          %s3966 = scalar_lea.vmem [#allocation4], %s3965
          %3967 = dma.done %s3963, 512
        $region103: #{tpu_custom_call.1} parent=98 // pred_fallthru
          _
      $region99: #{tpu_custom_call.1} parent=5 // pred_fallthru
        _
    $region6: #{tpu_custom_call.1} parent=1 // loop_footer
      %s36 = sadd.s32 1, %s32
    $region7: #{tpu_custom_call.1} parent=1 // loop_footer_branch
      %31 = sbr.rel target = $region3
    $region8: #{tpu_custom_call.1} parent=1 // loop_exit
      _
    %3968 = vsyncpa [#allocation5], 1
    %s3969 = scalar_lea.sflag [#allocation5], 1
    %3970 = vsyncpa %s3969, 1

</llo_original>
